<compile_context>
chip_gen: v7x
topology: tpu7x:2x2x1
jax: 0.10.0
libtpu: 0.0.40
codegen_flags: <defaults>
</compile_context>

<pallas_src>
import jax
import jax.numpy as jnp
from jax.experimental import pallas as pl
from jax.experimental.pallas import tpu as pltpu

EPS = 1e-5


def _relu_conv1x1_bn_kernel(x_ref, w_ref, g_ref, b_ref, o_ref):
    # x_ref : (Cin, M)      f32  flattened activations (channel-major, N == 1)
    # w_ref : (Co_blk, Cin) bf16 1x1-conv weight block
    # g_ref : (Co_blk, 1)   f32  BN gamma block
    # b_ref : (Co_blk, 1)   f32  BN beta block
    # o_ref : (Co_blk, M)   f32  output block
    m = x_ref.shape[1]
    inv_m = 1.0 / m

    # ReLU on the VPU, then narrow to bf16 so the MXU runs cheap bf16 passes.
    x = jnp.maximum(x_ref[...], 0.0).astype(jnp.bfloat16)

    # 1x1 conv == matmul: (Co_blk, Cin) @ (Cin, M), f32 accumulation on MXU.
    y = jnp.dot(w_ref[...], x, preferred_element_type=jnp.float32)

    # Per-output-channel batch statistics over M. Use MXU matmuls against a
    # ones vector for the reductions (avoids masked XLU lane-reduce on M=196).
    # Two-pass (centered) variance in f32 for numerical safety.
    ones = jnp.ones((m, 1), dtype=jnp.float32)
    mean = jnp.dot(y, ones, preferred_element_type=jnp.float32) * inv_m      # (Co_blk, 1)
    t = y - mean                                                             # centered, reused
    var = jnp.dot(t * t, ones, preferred_element_type=jnp.float32) * inv_m   # biased var

    scale = g_ref[...] * jax.lax.rsqrt(var + EPS)        # fold gamma into inv_std
    o_ref[...] = (t * scale + b_ref[...]).astype(o_ref.dtype)


def relu_conv1x1_bn(x_nchw, w_oi, gamma, beta):
    """x_nchw: (1, Cin, H, W) f32; w_oi: (Cout, Cin) f32; gamma/beta: (Cout,)."""
    N, Cin, H, W = x_nchw.shape
    assert N == 1, "free NCHW->(Cin, M) reshape requires N == 1 (module spec)"
    Cout = w_oi.shape[0]
    M = H * W

    # Free reshapes (no transpose / extra HBM round trip).
    x_mat = x_nchw.reshape(Cin, M)
    w_bf = w_oi.astype(jnp.bfloat16)                 # halve the weight DMA
    g = gamma.reshape(Cout, 1).astype(jnp.float32)
    b = beta.reshape(Cout, 1).astype(jnp.float32)

    # Split output channels across grid steps; BN stats are per-channel so the
    # split is embarrassingly parallel (v7x: one block per TensorCore).
    co_blk = 512 if Cout % 512 == 0 else Cout
    grid = (Cout // co_blk,)

    out_mat = pl.pallas_call(
        _relu_conv1x1_bn_kernel,
        out_shape=jax.ShapeDtypeStruct((Cout, M), jnp.float32),
        grid_spec=pltpu.PrefetchScalarGridSpec(
            num_scalar_prefetch=0,
            grid=grid,
            in_specs=[
                pl.BlockSpec((Cin, M), lambda i: (0, 0)),        # x: stays resident
                pl.BlockSpec((co_blk, Cin), lambda i: (i, 0)),   # weight block
                pl.BlockSpec((co_blk, 1), lambda i: (i, 0)),     # gamma block
                pl.BlockSpec((co_blk, 1), lambda i: (i, 0)),     # beta block
            ],
            out_specs=pl.BlockSpec((co_blk, M), lambda i: (i, 0)),
        ),
        compiler_params=pltpu.CompilerParams(
            dimension_semantics=("parallel",)),
    )(x_mat, w_bf, g, b)

    # (Cout, M) -> (1, Cout, H, W): also a free reshape.
    return out_mat.reshape(1, Cout, H, W)


if __name__ == "__main__":
    key = jax.random.PRNGKey(0)
    k_x, k_w = jax.random.split(key)

    # Shapes implied by the module: input (1, 256, 14, 14), conv 256 -> 1024.
    N, Cin, H, W = 1, 256, 14, 14
    Cout = 1024

    x = jax.random.normal(k_x, (N, Cin, H, W), dtype=jnp.float32)
    bound = (1.0 / Cin) ** 0.5
    w = jax.random.uniform(k_w, (Cout, Cin), dtype=jnp.float32,
                           minval=-bound, maxval=bound)
    # PyTorch BatchNorm2d default affine init
    gamma = jnp.ones((Cout,), dtype=jnp.float32)
    beta = jnp.zeros((Cout,), dtype=jnp.float32)

    out = relu_conv1x1_bn(x, w, gamma, beta)
    jax.block_until_ready(out)

    # Pure-JAX f32 reference (PyTorch .train() semantics: batch stats, biased var).
    xr = jnp.maximum(x, 0.0)
    y_ref = jnp.einsum("nchw,oc->nohw", xr, w)
    m_ref = jnp.mean(y_ref, axis=(0, 2, 3), keepdims=True)
    v_ref = jnp.mean((y_ref - m_ref) ** 2, axis=(0, 2, 3), keepdims=True)
    ref = (y_ref - m_ref) * jax.lax.rsqrt(v_ref + EPS) * gamma[None, :, None, None] \
          + beta[None, :, None, None]

    assert out.shape == (N, Cout, H, W)
    # Matmul operands are bf16 (f32 accumulate, BN in f32) -> relaxed tolerance
    # against the pure-f32 reference.
    err = jnp.max(jnp.abs(out - ref))
    assert err < 2e-2, f"max abs err {err}"

    print("KERNEL_OK")
</pallas_src>

<mosaic_0001>
module attributes {stable_mosaic.version = 11 : i64} {
  func.func @_relu_conv1x1_bn_kernel(%arg0: i32, %arg1: memref<256x196xf32, #tpu.memory_space<vmem>>, %arg2: memref<512x256xbf16, #tpu.memory_space<vmem>>, %arg3: memref<512x1xf32, #tpu.memory_space<vmem>>, %arg4: memref<512x1xf32, #tpu.memory_space<vmem>>, %arg5: memref<512x196xf32, #tpu.memory_space<vmem>>) attributes {dimension_semantics = [#tpu.dimension_semantics<parallel>], iteration_bounds = array<i64: 2>, scalar_prefetch = 0 : i64, scratch_operands = 0 : i64, tpu.core_type = #tpu.core_type<tc>, window_params = [{pipeline_mode = #tpu.pipeline_mode<synchronous>, transform_indices = @transform_0, window_bounds = array<i64: 256, 196>}, {transform_indices = @transform_1, window_bounds = array<i64: 512, 256>}, {transform_indices = @transform_2, window_bounds = array<i64: 512, 1>}, {transform_indices = @transform_3, window_bounds = array<i64: 512, 1>}, {transform_indices = @transform_4, window_bounds = array<i64: 512, 196>}]} {
    %c0 = arith.constant 0 : index
    %c0_0 = arith.constant 0 : index
    %0 = vector.load %arg1[%c0, %c0_0] : memref<256x196xf32, #tpu.memory_space<vmem>>, vector<256x196xf32>
    %cst = arith.constant 0.000000e+00 : f32
    %1 = vector.broadcast %cst : f32 to vector<256x196xf32>
    %2 = arith.maximumf %0, %1 : vector<256x196xf32>
    %3 = arith.truncf %2 : vector<256x196xf32> to vector<256x196xbf16>
    %c0_1 = arith.constant 0 : index
    %c0_2 = arith.constant 0 : index
    %4 = vector.load %arg2[%c0_1, %c0_2] : memref<512x256xbf16, #tpu.memory_space<vmem>>, vector<512x256xbf16>
    %cst_3 = arith.constant dense<0.000000e+00> : vector<512x196xf32>
    %5 = tpu.matmul %4, %3, %cst_3 {dimension_numbers = #tpu.dot_dimension_numbers<[1], [0], [0], [1], [0, 0, 1, 1], [], []>} : vector<512x256xbf16>, vector<256x196xbf16>, vector<512x196xf32> -> vector<512x196xf32>
    %cst_4 = arith.constant 1.000000e+00 : f32
    %6 = vector.broadcast %cst_4 : f32 to vector<196x1xf32>
    %cst_5 = arith.constant dense<0.000000e+00> : vector<512x1xf32>
    %7 = tpu.matmul %5, %6, %cst_5 {dimension_numbers = #tpu.dot_dimension_numbers<[1], [0], [0], [1], [0, 0, 1, 1], [], []>} : vector<512x196xf32>, vector<196x1xf32>, vector<512x1xf32> -> vector<512x1xf32>
    %cst_6 = arith.constant 0.00510204071 : f32
    %8 = vector.broadcast %cst_6 : f32 to vector<512x1xf32>
    %9 = arith.mulf %7, %8 : vector<512x1xf32>
    %10 = vector.broadcast %9 : vector<512x1xf32> to vector<512x196xf32>
    %11 = arith.subf %5, %10 : vector<512x196xf32>
    %12 = arith.mulf %11, %11 : vector<512x196xf32>
    %cst_7 = arith.constant dense<0.000000e+00> : vector<512x1xf32>
    %13 = tpu.matmul %12, %6, %cst_7 {dimension_numbers = #tpu.dot_dimension_numbers<[1], [0], [0], [1], [0, 0, 1, 1], [], []>} : vector<512x196xf32>, vector<196x1xf32>, vector<512x1xf32> -> vector<512x1xf32>
    %cst_8 = arith.constant 0.00510204071 : f32
    %14 = vector.broadcast %cst_8 : f32 to vector<512x1xf32>
    %15 = arith.mulf %13, %14 : vector<512x1xf32>
    %c0_9 = arith.constant 0 : index
    %c0_10 = arith.constant 0 : index
    %16 = vector.load %arg3[%c0_9, %c0_10] : memref<512x1xf32, #tpu.memory_space<vmem>>, vector<512x1xf32>
    %cst_11 = arith.constant 9.99999974E-6 : f32
    %17 = vector.broadcast %cst_11 : f32 to vector<512x1xf32>
    %18 = arith.addf %15, %17 : vector<512x1xf32>
    %19 = math.rsqrt %18 : vector<512x1xf32>
    %20 = arith.mulf %16, %19 : vector<512x1xf32>
    %21 = vector.broadcast %20 : vector<512x1xf32> to vector<512x196xf32>
    %22 = arith.mulf %11, %21 : vector<512x196xf32>
    %c0_12 = arith.constant 0 : index
    %c0_13 = arith.constant 0 : index
    %23 = vector.load %arg4[%c0_12, %c0_13] : memref<512x1xf32, #tpu.memory_space<vmem>>, vector<512x1xf32>
    %24 = vector.broadcast %23 : vector<512x1xf32> to vector<512x196xf32>
    %25 = arith.addf %22, %24 : vector<512x196xf32>
    %c0_14 = arith.constant 0 : index
    %c0_15 = arith.constant 0 : index
    %26 = vector.load %arg5[%c0_14, %c0_15] : memref<512x196xf32, #tpu.memory_space<vmem>>, vector<512x196xf32>
    tpu.vector_store %arg5[%c0_14, %c0_15], %25 {strides = array<i32>} : memref<512x196xf32, #tpu.memory_space<vmem>>, vector<512x196xf32>,
    return
  }
  func.func @transform_0(%arg0: i32) -> (i32, i32) {
    %c0_i32 = arith.constant 0 : i32
    %c0_i32_0 = arith.constant 0 : i32
    %c0_i32_1 = arith.constant 0 : i32
    return %c0_i32, %c0_i32_0 : i32, i32
  }
  func.func @transform_1(%arg0: i32) -> (i32, i32) {
    %c0_i32 = arith.constant 0 : i32
    %c0_i32_0 = arith.constant 0 : i32
    return %arg0, %c0_i32 : i32, i32
  }
  func.func @transform_2(%arg0: i32) -> (i32, i32) {
    %c0_i32 = arith.constant 0 : i32
    %c0_i32_0 = arith.constant 0 : i32
    return %arg0, %c0_i32 : i32, i32
  }
  func.func @transform_3(%arg0: i32) -> (i32, i32) {
    %c0_i32 = arith.constant 0 : i32
    %c0_i32_0 = arith.constant 0 : i32
    return %arg0, %c0_i32 : i32, i32
  }
  func.func @transform_4(%arg0: i32) -> (i32, i32) {
    %c0_i32 = arith.constant 0 : i32
    %c0_i32_0 = arith.constant 0 : i32
    return %arg0, %c0_i32 : i32, i32
  }
}

</mosaic_0001>

<llo_original>
// kernel: tpu_custom_call.1
$region0: #{tpu_custom_call.1}
  #allocation0 [shape = 'u32[]', space=smem, size = 0x4, offset = 0x4, fixed_abs, tag = 'smem constant byte address 0x4 - core index']
  #allocation1 [shape = 'u32[144,128]{1,0:T(1,128)}', space=vmem, size = 0x12000, scoped, tag = 'internal scratch']
  %s0 = inlined_call_operand.vmem [shape: f32[256,196], index: 0, kind: input, shape index: {}]
  %s1 = inlined_call_operand.vmem [shape: bf16[1024,256], index: 1, kind: input, shape index: {}]
  %s2 = inlined_call_operand.vmem [shape: f32[1024,1], index: 2, kind: input, shape index: {}]
  %s3 = inlined_call_operand.vmem [shape: f32[1024,1], index: 3, kind: input, shape index: {}]
  %s4 = inlined_call_operand.vmem [shape: f32[1024,196], index: 4, kind: output, shape index: {}]
  %s5 = sld [smem:[#allocation0]]
  $region49: #{tpu_custom_call.1} parent=0
    _
  %s7 = ssub.s32 1, %s5
  %s8 = scalar_select 0, %s7, %s5
  loop: start=0, step=1, limit=4
  $region2: #{tpu_custom_call.1} parent=0 // loop_pre_header
    _
  $region3: #{tpu_custom_call.1} parent=0 // loop_header
    %s10 = sphi 0, %s14
    %p11 = scmp.ge.s32.totalorder %s10, 4
    %s18 = sphi 0, %s18
    %s20 = sphi 0, %s18
    %s21 = sphi 0, %s20
    %s35 = sphi 0, %s21
    %s41 = sphi 0, %s43
    %s44 = sphi 0, %s41
    %s45 = sphi 0, %s44
    %s61 = sphi 0, %s45
    %s67 = sphi 0, %s69
    %s70 = sphi 0, %s67
    %s71 = sphi 0, %s70
    %s87 = sphi 0, %s71
    %s93 = sphi 0, %s95
    %s96 = sphi 0, %s93
    %s97 = sphi 0, %s96
    %s113 = sphi 0, %s97
    %s119 = sphi 0, %s121
    %s122 = sphi 0, %s119
    %s123 = sphi 0, %s122
    %s139 = sphi 0, %s123
  $region4: #{tpu_custom_call.1} parent=0 // loop_header_branch
    %13 = sbr.rel (%p11) target = $region8
  $region5: #{tpu_custom_call.1} parent=0 // loop_body
    %s15 = ssub.s32 %s10, 1
    %s16 = ssub.s32 %s10, 2
    %s17 = sadd.s32 %s10, 1
    %s19 = sadd.s32 %s18, 1
    %p22 = scmp.eq.s32.totalorder %s10, 1
    %p23 = scmp.ne.s32.totalorder %s18, %s20
    %p24 = scmp.eq.s32.totalorder %s10, 0
    %p25 = por %p23, %p24
    %p26 = scmp.ne.s32.totalorder %s18, %s20
    %p27 = scmp.eq.s32.totalorder %s15, 1
    %p28 = por %p26, %p27
    %p29 = scmp.ne.s32.totalorder %s20, %s21
    %p30 = scmp.eq.s32.totalorder %s15, 0
    %p31 = por %p29, %p30
    %p32 = scmp.ne.s32.totalorder %s20, %s21
    %p33 = scmp.eq.s32.totalorder %s16, 1
    %p34 = por %p32, %p33
    %p36 = scmp.ne.s32.totalorder %s21, %s35
    %p37 = scmp.eq.s32.totalorder %s16, 0
    %p38 = por %p36, %p37
    %s39 = ssub.s32 %s10, %s17
    %p40 = scmp.eq.s32.totalorder %s39, 0
    %s42 = sadd.s32 %s41, 1
    %s43 = scalar_select %p40, %s41, %s42
    %p46 = pneg %p40
    %p47 = scmp.eq.s32.totalorder %s10, 1
    %p48 = por %p46, %p47
    %p49 = scmp.ne.s32.totalorder %s41, %s44
    %p50 = scmp.eq.s32.totalorder %s10, 0
    %p51 = por %p49, %p50
    %p52 = scmp.ne.s32.totalorder %s41, %s44
    %p53 = scmp.eq.s32.totalorder %s15, 1
    %p54 = por %p52, %p53
    %p55 = scmp.ne.s32.totalorder %s44, %s45
    %p56 = scmp.eq.s32.totalorder %s15, 0
    %p57 = por %p55, %p56
    %p58 = scmp.ne.s32.totalorder %s44, %s45
    %p59 = scmp.eq.s32.totalorder %s16, 1
    %p60 = por %p58, %p59
    %p62 = scmp.ne.s32.totalorder %s45, %s61
    %p63 = scmp.eq.s32.totalorder %s16, 0
    %p64 = por %p62, %p63
    %s65 = ssub.s32 %s10, %s17
    %p66 = scmp.eq.s32.totalorder %s65, 0
    %s68 = sadd.s32 %s67, 1
    %s69 = scalar_select %p66, %s67, %s68
    %p72 = pneg %p66
    %p73 = scmp.eq.s32.totalorder %s10, 1
    %p74 = por %p72, %p73
    %p75 = scmp.ne.s32.totalorder %s67, %s70
    %p76 = scmp.eq.s32.totalorder %s10, 0
    %p77 = por %p75, %p76
    %p78 = scmp.ne.s32.totalorder %s67, %s70
    %p79 = scmp.eq.s32.totalorder %s15, 1
    %p80 = por %p78, %p79
    %p81 = scmp.ne.s32.totalorder %s70, %s71
    %p82 = scmp.eq.s32.totalorder %s15, 0
    %p83 = por %p81, %p82
    %p84 = scmp.ne.s32.totalorder %s70, %s71
    %p85 = scmp.eq.s32.totalorder %s16, 1
    %p86 = por %p84, %p85
    %p88 = scmp.ne.s32.totalorder %s71, %s87
    %p89 = scmp.eq.s32.totalorder %s16, 0
    %p90 = por %p88, %p89
    %s91 = ssub.s32 %s10, %s17
    %p92 = scmp.eq.s32.totalorder %s91, 0
    %s94 = sadd.s32 %s93, 1
    %s95 = scalar_select %p92, %s93, %s94
    %p98 = pneg %p92
    %p99 = scmp.eq.s32.totalorder %s10, 1
    %p100 = por %p98, %p99
    %p101 = scmp.ne.s32.totalorder %s93, %s96
    %p102 = scmp.eq.s32.totalorder %s10, 0
    %p103 = por %p101, %p102
    %p104 = scmp.ne.s32.totalorder %s93, %s96
    %p105 = scmp.eq.s32.totalorder %s15, 1
    %p106 = por %p104, %p105
    %p107 = scmp.ne.s32.totalorder %s96, %s97
    %p108 = scmp.eq.s32.totalorder %s15, 0
    %p109 = por %p107, %p108
    %p110 = scmp.ne.s32.totalorder %s96, %s97
    %p111 = scmp.eq.s32.totalorder %s16, 1
    %p112 = por %p110, %p111
    %p114 = scmp.ne.s32.totalorder %s97, %s113
    %p115 = scmp.eq.s32.totalorder %s16, 0
    %p116 = por %p114, %p115
    %s117 = ssub.s32 %s10, %s17
    %p118 = scmp.eq.s32.totalorder %s117, 0
    %s120 = sadd.s32 %s119, 1
    %s121 = scalar_select %p118, %s119, %s120
    %p124 = pneg %p118
    %p125 = scmp.eq.s32.totalorder %s10, 1
    %p126 = por %p124, %p125
    %p127 = scmp.ne.s32.totalorder %s119, %s122
    %p128 = scmp.eq.s32.totalorder %s10, 0
    %p129 = por %p127, %p128
    %p130 = scmp.ne.s32.totalorder %s119, %s122
    %p131 = scmp.eq.s32.totalorder %s15, 1
    %p132 = por %p130, %p131
    %p133 = scmp.ne.s32.totalorder %s122, %s123
    %p134 = scmp.eq.s32.totalorder %s15, 0
    %p135 = por %p133, %p134
    %p136 = scmp.ne.s32.totalorder %s122, %s123
    %p137 = scmp.eq.s32.totalorder %s16, 1
    %p138 = por %p136, %p137
    %p140 = scmp.ne.s32.totalorder %s123, %s139
    %p141 = scmp.eq.s32.totalorder %s16, 0
    %p142 = por %p140, %p141
    %p143 = scmp.le.s32.totalorder 1, %s10
    %p144 = scmp.lt.s32.totalorder %s10, 3
    %p145 = pnand %p143, %p144
    %p146 = pneg %p145
    // Predicated region
    $region9: #{tpu_custom_call.1} parent=5 // pred_check
      _
    $region10: #{tpu_custom_call.1} parent=5 // pred_check_branch
      %148 = sbr.rel (%p145) target = $region12
    $region11: #{tpu_custom_call.1} parent=5 // pred_region
      %s149 = ssub.s32 %s10, 1
      // Predicated region
      $region13: #{tpu_custom_call.1} parent=11 // pred_check
        %p150 = pneg %p31
      $region14: #{tpu_custom_call.1} parent=11 // pred_check_branch
        %152 = sbr.rel (%p150) target = $region16
      $region15: #{tpu_custom_call.1} parent=11 // pred_region
        _
      $region16: #{tpu_custom_call.1} parent=11 // pred_fallthru
        _
    $region12: #{tpu_custom_call.1} parent=5 // pred_fallthru
      _
    %p153 = scmp.lt.s32.totalorder %s10, 2
    // Predicated region
    $region17: #{tpu_custom_call.1} parent=5 // pred_check
      %p154 = pneg %p153
    $region18: #{tpu_custom_call.1} parent=5 // pred_check_branch
      %156 = sbr.rel (%p154) target = $region20
    $region19: #{tpu_custom_call.1} parent=5 // pred_region
      // Predicated region
      $region21: #{tpu_custom_call.1} parent=19 // pred_check
        %p157 = pneg %p51
      $region22: #{tpu_custom_call.1} parent=19 // pred_check_branch
        %159 = sbr.rel (%p157) target = $region24
      $region23: #{tpu_custom_call.1} parent=19 // pred_region
        %s160 = smul.u32 64, %s10
        %p161 = scmp.lt.s32.totalorder %s160, 127
        %s162 = scalar_select %p161, %s160, 127
        %s163 = smul.addr %s162, 2
        %s164 = smul.addr %s163, 4
        %s165 = scalar_lea.vmem %s1, %s164
        %s166 = smul.u32 64, %s10
      $region24: #{tpu_custom_call.1} parent=19 // pred_fallthru
        _
      // Predicated region
      $region25: #{tpu_custom_call.1} parent=19 // pred_check
        %p167 = pneg %p77
      $region26: #{tpu_custom_call.1} parent=19 // pred_check_branch
        %169 = sbr.rel (%p167) target = $region28
      $region27: #{tpu_custom_call.1} parent=19 // pred_region
        %s170 = smul.u32 64, %s10
        %p171 = scmp.lt.s32.totalorder %s170, 127
        %s172 = scalar_select %p171, %s170, 127
        %s173 = smul.addr %s172, 8
        %s174 = scalar_lea.vmem %s2, %s173
        %s175 = smul.u32 64, %s10
      $region28: #{tpu_custom_call.1} parent=19 // pred_fallthru
        _
      // Predicated region
      $region29: #{tpu_custom_call.1} parent=19 // pred_check
        %p176 = pneg %p103
      $region30: #{tpu_custom_call.1} parent=19 // pred_check_branch
        %178 = sbr.rel (%p176) target = $region32
      $region31: #{tpu_custom_call.1} parent=19 // pred_region
        %s179 = smul.u32 64, %s10
        %p180 = scmp.lt.s32.totalorder %s179, 127
        %s181 = scalar_select %p180, %s179, 127
        %s182 = smul.addr %s181, 8
        %s183 = scalar_lea.vmem %s3, %s182
        %s184 = smul.u32 64, %s10
      $region32: #{tpu_custom_call.1} parent=19 // pred_fallthru
        _
    $region20: #{tpu_custom_call.1} parent=5 // pred_fallthru
      _
    %p185 = scmp.le.s32.totalorder 1, %s10
    %p186 = scmp.lt.s32.totalorder %s10, 3
    %p187 = pnand %p185, %p186
    %p188 = pneg %p187
    // Predicated region
    $region33: #{tpu_custom_call.1} parent=5 // pred_check
      _
    $region34: #{tpu_custom_call.1} parent=5 // pred_check_branch
      %190 = sbr.rel (%p187) target = $region36
    $region35: #{tpu_custom_call.1} parent=5 // pred_region
      %s191 = ssub.s32 %s10, 1
      %p192 = pneg %p31
      %p193 = pneg %p28
      %s194 = smul.u32 64, %s15
      %p195 = scmp.lt.s32.totalorder %s194, 127
      %s196 = scalar_select %p195, %s194, 127
      %s197 = smul.addr %s196, 2
      %s198 = smul.addr %s197, 4
      %s199 = scalar_lea.vmem %s1, %s198
      %p200 = pneg %p57
      %p201 = pneg %p54
      %s202 = smul.u32 64, %s15
      %p203 = scmp.lt.s32.totalorder %s202, 127
      %s204 = scalar_select %p203, %s202, 127
      %s205 = smul.addr %s204, 8
      %s206 = scalar_lea.vmem %s2, %s205
      %p207 = pneg %p83
      %p208 = pneg %p80
      %s209 = smul.u32 64, %s15
      %p210 = scmp.lt.s32.totalorder %s209, 127
      %s211 = scalar_select %p210, %s209, 127
      %s212 = smul.addr %s211, 8
      %s213 = scalar_lea.vmem %s3, %s212
      %p214 = pneg %p109
      %p215 = pneg %p106
      %p216 = pneg %p135
      %p217 = pneg %p132
      %s218 = smul.u32 64, %s15
      %p219 = scmp.lt.s32.totalorder %s218, 127
      %s220 = scalar_select %p219, %s218, 127
      %s221 = smul.addr %s220, 2
      %s222 = smul.addr %s221, 8
      %s223 = scalar_lea.vmem %s4, %s222
      %s224 = smul.u32 64, %s15
      %p225 = scmp.lt.s32.totalorder %s224, 127
      %s226 = scalar_select %p225, %s224, 127
      %s227 = smul.addr %s226, 2
      %s228 = smul.addr %s227, 4
      %s229 = scalar_lea.vmem %s1, %s228
      %s230 = smul.u32 64, %s15
      %s231 = smul.u32 64, %s15
      %p232 = scmp.lt.s32.totalorder %s231, 127
      %s233 = scalar_select %p232, %s231, 127
      %s234 = smul.addr %s233, 8
      %s235 = scalar_lea.vmem %s2, %s234
      %s236 = smul.u32 64, %s15
      %s237 = smul.u32 64, %s15
      %p238 = scmp.lt.s32.totalorder %s237, 127
      %s239 = scalar_select %p238, %s237, 127
      %s240 = smul.addr %s239, 8
      %s241 = scalar_lea.vmem %s3, %s240
      %s242 = smul.u32 64, %s15
      %s243 = smul.u32 64, %s15
      %p244 = scmp.lt.s32.totalorder %s243, 127
      %s245 = scalar_select %p244, %s243, 127
      %s246 = smul.addr %s245, 2
      %s247 = smul.addr %s246, 8
      %s248 = scalar_lea.vmem %s4, %s247
      %s249 = smul.u32 64, %s15
      %v250 = vld [vmem:[%s0] sm:$0xff]
      %v251 = vld [vmem:[%s0 + $0x8] sm:$0xff]
      %v252 = vld [vmem:[%s0 + $0x10] sm:$0xff]
      %v253 = vld [vmem:[%s0 + $0x18] sm:$0xff]
      %v254 = vld [vmem:[%s0 + $0x20] sm:$0xff]
      %v255 = vld [vmem:[%s0 + $0x28] sm:$0xff]
      %v256 = vld [vmem:[%s0 + $0x30] sm:$0xff]
      %v257 = vld [vmem:[%s0 + $0x38] sm:$0xff]
      %v258 = vld [vmem:[%s0 + $0x40] sm:$0xff]
      %v259 = vld [vmem:[%s0 + $0x48] sm:$0xff]
      %v260 = vld [vmem:[%s0 + $0x50] sm:$0xff]
      %v261 = vld [vmem:[%s0 + $0x58] sm:$0xff]
      %v262 = vld [vmem:[%s0 + $0x60] sm:$0xff]
      %v263 = vld [vmem:[%s0 + $0x68] sm:$0xff]
      %v264 = vld [vmem:[%s0 + $0x70] sm:$0xff]
      %v265 = vld [vmem:[%s0 + $0x78] sm:$0xff]
      %v266 = vld [vmem:[%s0 + $0x80] sm:$0xff]
      %v267 = vld [vmem:[%s0 + $0x88] sm:$0xff]
      %v268 = vld [vmem:[%s0 + $0x90] sm:$0xff]
      %v269 = vld [vmem:[%s0 + $0x98] sm:$0xff]
      %v270 = vld [vmem:[%s0 + $0xa0] sm:$0xff]
      %v271 = vld [vmem:[%s0 + $0xa8] sm:$0xff]
      %v272 = vld [vmem:[%s0 + $0xb0] sm:$0xff]
      %v273 = vld [vmem:[%s0 + $0xb8] sm:$0xff]
      %v274 = vld [vmem:[%s0 + $0xc0] sm:$0xff]
      %v275 = vld [vmem:[%s0 + $0xc8] sm:$0xff]
      %v276 = vld [vmem:[%s0 + $0xd0] sm:$0xff]
      %v277 = vld [vmem:[%s0 + $0xd8] sm:$0xff]
      %v278 = vld [vmem:[%s0 + $0xe0] sm:$0xff]
      %v279 = vld [vmem:[%s0 + $0xe8] sm:$0xff]
      %v280 = vld [vmem:[%s0 + $0xf0] sm:$0xff]
      %v281 = vld [vmem:[%s0 + $0xf8] sm:$0xff]
      %v282 = vld [vmem:[%s0 + $0x100] sm:$0xff]
      %v283 = vld [vmem:[%s0 + $0x108] sm:$0xff]
      %v284 = vld [vmem:[%s0 + $0x110] sm:$0xff]
      %v285 = vld [vmem:[%s0 + $0x118] sm:$0xff]
      %v286 = vld [vmem:[%s0 + $0x120] sm:$0xff]
      %v287 = vld [vmem:[%s0 + $0x128] sm:$0xff]
      %v288 = vld [vmem:[%s0 + $0x130] sm:$0xff]
      %v289 = vld [vmem:[%s0 + $0x138] sm:$0xff]
      %v290 = vld [vmem:[%s0 + $0x140] sm:$0xff]
      %v291 = vld [vmem:[%s0 + $0x148] sm:$0xff]
      %v292 = vld [vmem:[%s0 + $0x150] sm:$0xff]
      %v293 = vld [vmem:[%s0 + $0x158] sm:$0xff]
      %v294 = vld [vmem:[%s0 + $0x160] sm:$0xff]
      %v295 = vld [vmem:[%s0 + $0x168] sm:$0xff]
      %v296 = vld [vmem:[%s0 + $0x170] sm:$0xff]
      %v297 = vld [vmem:[%s0 + $0x178] sm:$0xff]
      %v298 = vld [vmem:[%s0 + $0x180] sm:$0xff]
      %v299 = vld [vmem:[%s0 + $0x188] sm:$0xff]
      %v300 = vld [vmem:[%s0 + $0x190] sm:$0xff]
      %v301 = vld [vmem:[%s0 + $0x198] sm:$0xff]
      %v302 = vld [vmem:[%s0 + $0x1a0] sm:$0xff]
      %v303 = vld [vmem:[%s0 + $0x1a8] sm:$0xff]
      %v304 = vld [vmem:[%s0 + $0x1b0] sm:$0xff]
      %v305 = vld [vmem:[%s0 + $0x1b8] sm:$0xff]
      %v306 = vld [vmem:[%s0 + $0x1c0] sm:$0xff]
      %v307 = vld [vmem:[%s0 + $0x1c8] sm:$0xff]
      %v308 = vld [vmem:[%s0 + $0x1d0] sm:$0xff]
      %v309 = vld [vmem:[%s0 + $0x1d8] sm:$0xff]
      %v310 = vld [vmem:[%s0 + $0x1e0] sm:$0xff]
      %v311 = vld [vmem:[%s0 + $0x1e8] sm:$0xff]
      %v312 = vld [vmem:[%s0 + $0x1f0] sm:$0xff]
      %v313 = vld [vmem:[%s0 + $0x1f8] sm:$0xff]
      %v314 = vmax.f32 %v250, 0.0
      %v315 = vmax.f32 %v251, 0.0
      %v316 = vmax.f32 %v252, 0.0
      %v317 = vmax.f32 %v253, 0.0
      %v318 = vmax.f32 %v254, 0.0
      %v319 = vmax.f32 %v255, 0.0
      %v320 = vmax.f32 %v256, 0.0
      %v321 = vmax.f32 %v257, 0.0
      %v322 = vmax.f32 %v258, 0.0
      %v323 = vmax.f32 %v259, 0.0
      %v324 = vmax.f32 %v260, 0.0
      %v325 = vmax.f32 %v261, 0.0
      %v326 = vmax.f32 %v262, 0.0
      %v327 = vmax.f32 %v263, 0.0
      %v328 = vmax.f32 %v264, 0.0
      %v329 = vmax.f32 %v265, 0.0
      %v330 = vmax.f32 %v266, 0.0
      %v331 = vmax.f32 %v267, 0.0
      %v332 = vmax.f32 %v268, 0.0
      %v333 = vmax.f32 %v269, 0.0
      %v334 = vmax.f32 %v270, 0.0
      %v335 = vmax.f32 %v271, 0.0
      %v336 = vmax.f32 %v272, 0.0
      %v337 = vmax.f32 %v273, 0.0
      %v338 = vmax.f32 %v274, 0.0
      %v339 = vmax.f32 %v275, 0.0
      %v340 = vmax.f32 %v276, 0.0
      %v341 = vmax.f32 %v277, 0.0
      %v342 = vmax.f32 %v278, 0.0
      %v343 = vmax.f32 %v279, 0.0
      %v344 = vmax.f32 %v280, 0.0
      %v345 = vmax.f32 %v281, 0.0
      %v346 = vmax.f32 %v282, 0.0
      %v347 = vmax.f32 %v283, 0.0
      %v348 = vmax.f32 %v284, 0.0
      %v349 = vmax.f32 %v285, 0.0
      %v350 = vmax.f32 %v286, 0.0
      %v351 = vmax.f32 %v287, 0.0
      %v352 = vmax.f32 %v288, 0.0
      %v353 = vmax.f32 %v289, 0.0
      %v354 = vmax.f32 %v290, 0.0
      %v355 = vmax.f32 %v291, 0.0
      %v356 = vmax.f32 %v292, 0.0
      %v357 = vmax.f32 %v293, 0.0
      %v358 = vmax.f32 %v294, 0.0
      %v359 = vmax.f32 %v295, 0.0
      %v360 = vmax.f32 %v296, 0.0
      %v361 = vmax.f32 %v297, 0.0
      %v362 = vmax.f32 %v298, 0.0
      %v363 = vmax.f32 %v299, 0.0
      %v364 = vmax.f32 %v300, 0.0
      %v365 = vmax.f32 %v301, 0.0
      %v366 = vmax.f32 %v302, 0.0
      %v367 = vmax.f32 %v303, 0.0
      %v368 = vmax.f32 %v304, 0.0
      %v369 = vmax.f32 %v305, 0.0
      %v370 = vmax.f32 %v306, 0.0
      %v371 = vmax.f32 %v307, 0.0
      %v372 = vmax.f32 %v308, 0.0
      %v373 = vmax.f32 %v309, 0.0
      %v374 = vmax.f32 %v310, 0.0
      %v375 = vmax.f32 %v311, 0.0
      %v376 = vmax.f32 %v312, 0.0
      %v377 = vmax.f32 %v313, 0.0
      %v378 = vpack.c.bf16 %v316, %v314
      %v379 = vpack.c.bf16 %v317, %v315
      %v380 = vpack.c.bf16 %v320, %v318
      %v381 = vpack.c.bf16 %v321, %v319
      %v382 = vpack.c.bf16 %v324, %v322
      %v383 = vpack.c.bf16 %v325, %v323
      %v384 = vpack.c.bf16 %v328, %v326
      %v385 = vpack.c.bf16 %v329, %v327
      %v386 = vpack.c.bf16 %v332, %v330
      %v387 = vpack.c.bf16 %v333, %v331
      %v388 = vpack.c.bf16 %v336, %v334
      %v389 = vpack.c.bf16 %v337, %v335
      %v390 = vpack.c.bf16 %v340, %v338
      %v391 = vpack.c.bf16 %v341, %v339
      %v392 = vpack.c.bf16 %v344, %v342
      %v393 = vpack.c.bf16 %v345, %v343
      %v394 = vpack.c.bf16 %v348, %v346
      %v395 = vpack.c.bf16 %v349, %v347
      %v396 = vpack.c.bf16 %v352, %v350
      %v397 = vpack.c.bf16 %v353, %v351
      %v398 = vpack.c.bf16 %v356, %v354
      %v399 = vpack.c.bf16 %v357, %v355
      %v400 = vpack.c.bf16 %v360, %v358
      %v401 = vpack.c.bf16 %v361, %v359
      %v402 = vpack.c.bf16 %v364, %v362
      %v403 = vpack.c.bf16 %v365, %v363
      %v404 = vpack.c.bf16 %v368, %v366
      %v405 = vpack.c.bf16 %v369, %v367
      %v406 = vpack.c.bf16 %v372, %v370
      %v407 = vpack.c.bf16 %v373, %v371
      %v408 = vpack.c.bf16 %v376, %v374
      %v409 = vpack.c.bf16 %v377, %v375
      %v410 = vld [vmem:[%s229] sm:$0xff]
      %v411 = vld [vmem:[%s229 + $0x8] sm:$0xff]
      %v412 = vld [vmem:[%s229 + $0x10] sm:$0xff]
      %v413 = vld [vmem:[%s229 + $0x18] sm:$0xff]
      %v414 = vld [vmem:[%s229 + $0x20] sm:$0xff]
      %v415 = vld [vmem:[%s229 + $0x28] sm:$0xff]
      %v416 = vld [vmem:[%s229 + $0x30] sm:$0xff]
      %v417 = vld [vmem:[%s229 + $0x38] sm:$0xff]
      %v418 = vld [vmem:[%s229 + $0x40] sm:$0xff]
      %v419 = vld [vmem:[%s229 + $0x48] sm:$0xff]
      %v420 = vld [vmem:[%s229 + $0x50] sm:$0xff]
      %v421 = vld [vmem:[%s229 + $0x58] sm:$0xff]
      %v422 = vld [vmem:[%s229 + $0x60] sm:$0xff]
      %v423 = vld [vmem:[%s229 + $0x68] sm:$0xff]
      %v424 = vld [vmem:[%s229 + $0x70] sm:$0xff]
      %v425 = vld [vmem:[%s229 + $0x78] sm:$0xff]
      %v426 = vld [vmem:[%s229 + $0x80] sm:$0xff]
      %v427 = vld [vmem:[%s229 + $0x88] sm:$0xff]
      %v428 = vld [vmem:[%s229 + $0x90] sm:$0xff]
      %v429 = vld [vmem:[%s229 + $0x98] sm:$0xff]
      %v430 = vld [vmem:[%s229 + $0xa0] sm:$0xff]
      %v431 = vld [vmem:[%s229 + $0xa8] sm:$0xff]
      %v432 = vld [vmem:[%s229 + $0xb0] sm:$0xff]
      %v433 = vld [vmem:[%s229 + $0xb8] sm:$0xff]
      %v434 = vld [vmem:[%s229 + $0xc0] sm:$0xff]
      %v435 = vld [vmem:[%s229 + $0xc8] sm:$0xff]
      %v436 = vld [vmem:[%s229 + $0xd0] sm:$0xff]
      %v437 = vld [vmem:[%s229 + $0xd8] sm:$0xff]
      %v438 = vld [vmem:[%s229 + $0xe0] sm:$0xff]
      %v439 = vld [vmem:[%s229 + $0xe8] sm:$0xff]
      %v440 = vld [vmem:[%s229 + $0xf0] sm:$0xff]
      %v441 = vld [vmem:[%s229 + $0xf8] sm:$0xff]
      %v442 = vld [vmem:[%s229 + $0x100] sm:$0xff]
      %v443 = vld [vmem:[%s229 + $0x108] sm:$0xff]
      %v444 = vld [vmem:[%s229 + $0x110] sm:$0xff]
      %v445 = vld [vmem:[%s229 + $0x118] sm:$0xff]
      %v446 = vld [vmem:[%s229 + $0x120] sm:$0xff]
      %v447 = vld [vmem:[%s229 + $0x128] sm:$0xff]
      %v448 = vld [vmem:[%s229 + $0x130] sm:$0xff]
      %v449 = vld [vmem:[%s229 + $0x138] sm:$0xff]
      %v450 = vld [vmem:[%s229 + $0x140] sm:$0xff]
      %v451 = vld [vmem:[%s229 + $0x148] sm:$0xff]
      %v452 = vld [vmem:[%s229 + $0x150] sm:$0xff]
      %v453 = vld [vmem:[%s229 + $0x158] sm:$0xff]
      %v454 = vld [vmem:[%s229 + $0x160] sm:$0xff]
      %v455 = vld [vmem:[%s229 + $0x168] sm:$0xff]
      %v456 = vld [vmem:[%s229 + $0x170] sm:$0xff]
      %v457 = vld [vmem:[%s229 + $0x178] sm:$0xff]
      %v458 = vld [vmem:[%s229 + $0x180] sm:$0xff]
      %v459 = vld [vmem:[%s229 + $0x188] sm:$0xff]
      %v460 = vld [vmem:[%s229 + $0x190] sm:$0xff]
      %v461 = vld [vmem:[%s229 + $0x198] sm:$0xff]
      %v462 = vld [vmem:[%s229 + $0x1a0] sm:$0xff]
      %v463 = vld [vmem:[%s229 + $0x1a8] sm:$0xff]
      %v464 = vld [vmem:[%s229 + $0x1b0] sm:$0xff]
      %v465 = vld [vmem:[%s229 + $0x1b8] sm:$0xff]
      %v466 = vld [vmem:[%s229 + $0x1c0] sm:$0xff]
      %v467 = vld [vmem:[%s229 + $0x1c8] sm:$0xff]
      %v468 = vld [vmem:[%s229 + $0x1d0] sm:$0xff]
      %v469 = vld [vmem:[%s229 + $0x1d8] sm:$0xff]
      %v470 = vld [vmem:[%s229 + $0x1e0] sm:$0xff]
      %v471 = vld [vmem:[%s229 + $0x1e8] sm:$0xff]
      %v472 = vld [vmem:[%s229 + $0x1f0] sm:$0xff]
      %v473 = vld [vmem:[%s229 + $0x1f8] sm:$0xff]
      %v538 = vunpack.c.l.b16 %v410
      %v539 = vunpack.c.h.b16 %v410
      %v540 = vunpack.c.l.b16 %v411
      %v541 = vunpack.c.h.b16 %v411
      %v542 = vunpack.c.l.b16 %v412
      %v543 = vunpack.c.h.b16 %v412
      %v544 = vunpack.c.l.b16 %v413
      %v545 = vunpack.c.h.b16 %v413
      %v546 = vunpack.c.l.b16 %v414
      %v547 = vunpack.c.h.b16 %v414
      %v548 = vunpack.c.l.b16 %v415
      %v549 = vunpack.c.h.b16 %v415
      %v550 = vunpack.c.l.b16 %v416
      %v551 = vunpack.c.h.b16 %v416
      %v552 = vunpack.c.l.b16 %v417
      %v553 = vunpack.c.h.b16 %v417
      %v554 = vunpack.c.l.b16 %v418
      %v555 = vunpack.c.h.b16 %v418
      %v556 = vunpack.c.l.b16 %v419
      %v557 = vunpack.c.h.b16 %v419
      %v558 = vunpack.c.l.b16 %v420
      %v559 = vunpack.c.h.b16 %v420
      %v560 = vunpack.c.l.b16 %v421
      %v561 = vunpack.c.h.b16 %v421
      %v562 = vunpack.c.l.b16 %v422
      %v563 = vunpack.c.h.b16 %v422
      %v564 = vunpack.c.l.b16 %v423
      %v565 = vunpack.c.h.b16 %v423
      %v566 = vunpack.c.l.b16 %v424
      %v567 = vunpack.c.h.b16 %v424
      %v568 = vunpack.c.l.b16 %v425
      %v569 = vunpack.c.h.b16 %v425
      %v570 = vunpack.c.l.b16 %v426
      %v571 = vunpack.c.h.b16 %v426
      %v572 = vunpack.c.l.b16 %v427
      %v573 = vunpack.c.h.b16 %v427
      %v574 = vunpack.c.l.b16 %v428
      %v575 = vunpack.c.h.b16 %v428
      %v576 = vunpack.c.l.b16 %v429
      %v577 = vunpack.c.h.b16 %v429
      %v578 = vunpack.c.l.b16 %v430
      %v579 = vunpack.c.h.b16 %v430
      %v580 = vunpack.c.l.b16 %v431
      %v581 = vunpack.c.h.b16 %v431
      %v582 = vunpack.c.l.b16 %v432
      %v583 = vunpack.c.h.b16 %v432
      %v584 = vunpack.c.l.b16 %v433
      %v585 = vunpack.c.h.b16 %v433
      %v586 = vunpack.c.l.b16 %v434
      %v587 = vunpack.c.h.b16 %v434
      %v588 = vunpack.c.l.b16 %v435
      %v589 = vunpack.c.h.b16 %v435
      %v590 = vunpack.c.l.b16 %v436
      %v591 = vunpack.c.h.b16 %v436
      %v592 = vunpack.c.l.b16 %v437
      %v593 = vunpack.c.h.b16 %v437
      %v594 = vunpack.c.l.b16 %v438
      %v595 = vunpack.c.h.b16 %v438
      %v596 = vunpack.c.l.b16 %v439
      %v597 = vunpack.c.h.b16 %v439
      %v598 = vunpack.c.l.b16 %v440
      %v599 = vunpack.c.h.b16 %v440
      %v600 = vunpack.c.l.b16 %v441
      %v601 = vunpack.c.h.b16 %v441
      %v602 = vunpack.c.l.b16 %v442
      %v603 = vunpack.c.h.b16 %v442
      %v604 = vunpack.c.l.b16 %v443
      %v605 = vunpack.c.h.b16 %v443
      %v606 = vunpack.c.l.b16 %v444
      %v607 = vunpack.c.h.b16 %v444
      %v608 = vunpack.c.l.b16 %v445
      %v609 = vunpack.c.h.b16 %v445
      %v610 = vunpack.c.l.b16 %v446
      %v611 = vunpack.c.h.b16 %v446
      %v612 = vunpack.c.l.b16 %v447
      %v613 = vunpack.c.h.b16 %v447
      %v614 = vunpack.c.l.b16 %v448
      %v615 = vunpack.c.h.b16 %v448
      %v616 = vunpack.c.l.b16 %v449
      %v617 = vunpack.c.h.b16 %v449
      %v618 = vunpack.c.l.b16 %v450
      %v619 = vunpack.c.h.b16 %v450
      %v620 = vunpack.c.l.b16 %v451
      %v621 = vunpack.c.h.b16 %v451
      %v622 = vunpack.c.l.b16 %v452
      %v623 = vunpack.c.h.b16 %v452
      %v624 = vunpack.c.l.b16 %v453
      %v625 = vunpack.c.h.b16 %v453
      %v626 = vunpack.c.l.b16 %v454
      %v627 = vunpack.c.h.b16 %v454
      %v628 = vunpack.c.l.b16 %v455
      %v629 = vunpack.c.h.b16 %v455
      %v630 = vunpack.c.l.b16 %v456
      %v631 = vunpack.c.h.b16 %v456
      %v632 = vunpack.c.l.b16 %v457
      %v633 = vunpack.c.h.b16 %v457
      %v634 = vunpack.c.l.b16 %v458
      %v635 = vunpack.c.h.b16 %v458
      %v636 = vunpack.c.l.b16 %v459
      %v637 = vunpack.c.h.b16 %v459
      %v638 = vunpack.c.l.b16 %v460
      %v639 = vunpack.c.h.b16 %v460
      %v640 = vunpack.c.l.b16 %v461
      %v641 = vunpack.c.h.b16 %v461
      %v642 = vunpack.c.l.b16 %v462
      %v643 = vunpack.c.h.b16 %v462
      %v644 = vunpack.c.l.b16 %v463
      %v645 = vunpack.c.h.b16 %v463
      %v646 = vunpack.c.l.b16 %v464
      %v647 = vunpack.c.h.b16 %v464
      %v648 = vunpack.c.l.b16 %v465
      %v649 = vunpack.c.h.b16 %v465
      %v650 = vunpack.c.l.b16 %v466
      %v651 = vunpack.c.h.b16 %v466
      %v652 = vunpack.c.l.b16 %v467
      %v653 = vunpack.c.h.b16 %v467
      %v654 = vunpack.c.l.b16 %v468
      %v655 = vunpack.c.h.b16 %v468
      %v656 = vunpack.c.l.b16 %v469
      %v657 = vunpack.c.h.b16 %v469
      %v658 = vunpack.c.l.b16 %v470
      %v659 = vunpack.c.h.b16 %v470
      %v660 = vunpack.c.l.b16 %v471
      %v661 = vunpack.c.h.b16 %v471
      %v662 = vunpack.c.l.b16 %v472
      %v663 = vunpack.c.h.b16 %v472
      %v664 = vunpack.c.l.b16 %v473
      %v665 = vunpack.c.h.b16 %v473
      %v666 = vpack.c.b16 %v540, %v538
      %v667 = vpack.c.b16 %v541, %v539
      %v668 = vpack.c.b16 %v544, %v542
      %v669 = vpack.c.b16 %v545, %v543
      %v670 = vpack.c.b16 %v548, %v546
      %v671 = vpack.c.b16 %v549, %v547
      %v672 = vpack.c.b16 %v552, %v550
      %v673 = vpack.c.b16 %v553, %v551
      %v674 = vpack.c.b16 %v556, %v554
      %v675 = vpack.c.b16 %v557, %v555
      %v676 = vpack.c.b16 %v560, %v558
      %v677 = vpack.c.b16 %v561, %v559
      %v678 = vpack.c.b16 %v564, %v562
      %v679 = vpack.c.b16 %v565, %v563
      %v680 = vpack.c.b16 %v568, %v566
      %v681 = vpack.c.b16 %v569, %v567
      %v682 = vpack.c.b16 %v572, %v570
      %v683 = vpack.c.b16 %v573, %v571
      %v684 = vpack.c.b16 %v576, %v574
      %v685 = vpack.c.b16 %v577, %v575
      %v686 = vpack.c.b16 %v580, %v578
      %v687 = vpack.c.b16 %v581, %v579
      %v688 = vpack.c.b16 %v584, %v582
      %v689 = vpack.c.b16 %v585, %v583
      %v690 = vpack.c.b16 %v588, %v586
      %v691 = vpack.c.b16 %v589, %v587
      %v692 = vpack.c.b16 %v592, %v590
      %v693 = vpack.c.b16 %v593, %v591
      %v694 = vpack.c.b16 %v596, %v594
      %v695 = vpack.c.b16 %v597, %v595
      %v696 = vpack.c.b16 %v600, %v598
      %v697 = vpack.c.b16 %v601, %v599
      %v698 = vpack.c.b16 %v604, %v602
      %v699 = vpack.c.b16 %v605, %v603
      %v700 = vpack.c.b16 %v608, %v606
      %v701 = vpack.c.b16 %v609, %v607
      %v702 = vpack.c.b16 %v612, %v610
      %v703 = vpack.c.b16 %v613, %v611
      %v704 = vpack.c.b16 %v616, %v614
      %v705 = vpack.c.b16 %v617, %v615
      %v706 = vpack.c.b16 %v620, %v618
      %v707 = vpack.c.b16 %v621, %v619
      %v708 = vpack.c.b16 %v624, %v622
      %v709 = vpack.c.b16 %v625, %v623
      %v710 = vpack.c.b16 %v628, %v626
      %v711 = vpack.c.b16 %v629, %v627
      %v712 = vpack.c.b16 %v632, %v630
      %v713 = vpack.c.b16 %v633, %v631
      %v714 = vpack.c.b16 %v636, %v634
      %v715 = vpack.c.b16 %v637, %v635
      %v716 = vpack.c.b16 %v640, %v638
      %v717 = vpack.c.b16 %v641, %v639
      %v718 = vpack.c.b16 %v644, %v642
      %v719 = vpack.c.b16 %v645, %v643
      %v720 = vpack.c.b16 %v648, %v646
      %v721 = vpack.c.b16 %v649, %v647
      %v722 = vpack.c.b16 %v652, %v650
      %v723 = vpack.c.b16 %v653, %v651
      %v724 = vpack.c.b16 %v656, %v654
      %v725 = vpack.c.b16 %v657, %v655
      %v726 = vpack.c.b16 %v660, %v658
      %v727 = vpack.c.b16 %v661, %v659
      %v728 = vpack.c.b16 %v664, %v662
      %v729 = vpack.c.b16 %v665, %v663
      %794 = vmatprep.subr.bf16.mxu0 %v379
      %795 = vmatpush1.bf16.msra.mxu0 %v378
      %796 = vmatprep.subr.bf16.mxu0 %v381
      %797 = vmatpush1.bf16.msra.mxu0 %v380
      %798 = vmatprep.subr.bf16.mxu0 %v383
      %799 = vmatpush1.bf16.msra.mxu0 %v382
      %800 = vmatprep.subr.bf16.mxu0 %v385
      %801 = vmatpush1.bf16.msra.mxu0 %v384
      %802 = vmatprep.subr.bf16.mxu0 %v387
      %803 = vmatpush1.bf16.msra.mxu0 %v386
      %804 = vmatprep.subr.bf16.mxu0 %v389
      %805 = vmatpush1.bf16.msra.mxu0 %v388
      %806 = vmatprep.subr.bf16.mxu0 %v391
      %807 = vmatpush1.bf16.msra.mxu0 %v390
      %808 = vmatprep.subr.bf16.mxu0 %v393
      %809 = vmatpush1.bf16.msra.mxu0 %v392
      %810 = vmatprep.subr.bf16.mxu0 %v395
      %811 = vmatpush1.bf16.msra.mxu0 %v394
      %812 = vmatprep.subr.bf16.mxu0 %v397
      %813 = vmatpush1.bf16.msra.mxu0 %v396
      %814 = vmatprep.subr.bf16.mxu0 %v399
      %815 = vmatpush1.bf16.msra.mxu0 %v398
      %816 = vmatprep.subr.bf16.mxu0 %v401
      %817 = vmatpush1.bf16.msra.mxu0 %v400
      %818 = vmatprep.subr.bf16.mxu0 %v403
      %819 = vmatpush1.bf16.msra.mxu0 %v402
      %820 = vmatprep.subr.bf16.mxu0 %v405
      %821 = vmatpush1.bf16.msra.mxu0 %v404
      %822 = vmatprep.subr.bf16.mxu0 %v407
      %823 = vmatpush1.bf16.msra.mxu0 %v406
      %824 = vmatprep.subr.bf16.mxu0 %v409
      %825 = vmatpush1.bf16.msra.mxu0 %v408
      %826 = vmatprep.mubr.bf16.mxu0 %v667
      %827 = vmatmul.mubr.bf16.gmra.mrb[0].mxu0 %v666
      %v828 = vpop.f32.mrb[0].mxu0
      %v829 = vadd.f32 0.0, %v828
      %v830 = vpop.f32.mrb[0].mxu0
      %v831 = vadd.f32 0.0, %v830
      %v832 = vpop.f32.mrb[0].mxu0
      %v833 = vadd.f32 0.0, %v832
      %v834 = vpop.f32.mrb[0].mxu0
      %v835 = vadd.f32 0.0, %v834
      %836 = vmatprep.mubr.bf16.mxu0 %v669
      %837 = vmatmul.mubr.bf16.gmra.mrb[0].mxu0 %v668
      %v838 = vpop.f32.mrb[0].mxu0
      %v839 = vadd.f32 0.0, %v838
      %v840 = vpop.f32.mrb[0].mxu0
      %v841 = vadd.f32 0.0, %v840
      %v842 = vpop.f32.mrb[0].mxu0
      %v843 = vadd.f32 0.0, %v842
      %v844 = vpop.f32.mrb[0].mxu0
      %v845 = vadd.f32 0.0, %v844
      %846 = vmatprep.mubr.bf16.mxu0 %v671
      %847 = vmatmul.mubr.bf16.gmra.mrb[0].mxu0 %v670
      %v848 = vpop.f32.mrb[0].mxu0
      %v849 = vadd.f32 0.0, %v848
      %v850 = vpop.f32.mrb[0].mxu0
      %v851 = vadd.f32 0.0, %v850
      %v852 = vpop.f32.mrb[0].mxu0
      %v853 = vadd.f32 0.0, %v852
      %v854 = vpop.f32.mrb[0].mxu0
      %v855 = vadd.f32 0.0, %v854
      %856 = vmatprep.mubr.bf16.mxu0 %v673
      %857 = vmatmul.mubr.bf16.gmra.mrb[0].mxu0 %v672
      %v858 = vpop.f32.mrb[0].mxu0
      %v859 = vadd.f32 0.0, %v858
      %v860 = vpop.f32.mrb[0].mxu0
      %v861 = vadd.f32 0.0, %v860
      %v862 = vpop.f32.mrb[0].mxu0
      %v863 = vadd.f32 0.0, %v862
      %v864 = vpop.f32.mrb[0].mxu0
      %v865 = vadd.f32 0.0, %v864
      %866 = vmatprep.mubr.bf16.mxu0 %v675
      %867 = vmatmul.mubr.bf16.gmra.mrb[0].mxu0 %v674
      %v868 = vpop.f32.mrb[0].mxu0
      %v869 = vadd.f32 0.0, %v868
      %v870 = vpop.f32.mrb[0].mxu0
      %v871 = vadd.f32 0.0, %v870
      %v872 = vpop.f32.mrb[0].mxu0
      %v873 = vadd.f32 0.0, %v872
      %v874 = vpop.f32.mrb[0].mxu0
      %v875 = vadd.f32 0.0, %v874
      %876 = vmatprep.mubr.bf16.mxu0 %v677
      %877 = vmatmul.mubr.bf16.gmra.mrb[0].mxu0 %v676
      %v878 = vpop.f32.mrb[0].mxu0
      %v879 = vadd.f32 0.0, %v878
      %v880 = vpop.f32.mrb[0].mxu0
      %v881 = vadd.f32 0.0, %v880
      %v882 = vpop.f32.mrb[0].mxu0
      %v883 = vadd.f32 0.0, %v882
      %v884 = vpop.f32.mrb[0].mxu0
      %v885 = vadd.f32 0.0, %v884
      %886 = vmatprep.mubr.bf16.mxu0 %v679
      %887 = vmatmul.mubr.bf16.gmra.mrb[0].mxu0 %v678
      %v888 = vpop.f32.mrb[0].mxu0
      %v889 = vadd.f32 0.0, %v888
      %v890 = vpop.f32.mrb[0].mxu0
      %v891 = vadd.f32 0.0, %v890
      %v892 = vpop.f32.mrb[0].mxu0
      %v893 = vadd.f32 0.0, %v892
      %v894 = vpop.f32.mrb[0].mxu0
      %v895 = vadd.f32 0.0, %v894
      %896 = vmatprep.mubr.bf16.mxu0 %v681
      %897 = vmatmul.mubr.bf16.gmra.mrb[0].mxu0 %v680
      %v898 = vpop.f32.mrb[0].mxu0
      %v899 = vadd.f32 0.0, %v898
      %v900 = vpop.f32.mrb[0].mxu0
      %v901 = vadd.f32 0.0, %v900
      %v902 = vpop.f32.mrb[0].mxu0
      %v903 = vadd.f32 0.0, %v902
      %v904 = vpop.f32.mrb[0].mxu0
      %v905 = vadd.f32 0.0, %v904
      %906 = vmatprep.mubr.bf16.mxu0 %v683
      %907 = vmatmul.mubr.bf16.gmra.mrb[0].mxu0 %v682
      %v908 = vpop.f32.mrb[0].mxu0
      %v909 = vadd.f32 0.0, %v908
      %v910 = vpop.f32.mrb[0].mxu0
      %v911 = vadd.f32 0.0, %v910
      %v912 = vpop.f32.mrb[0].mxu0
      %v913 = vadd.f32 0.0, %v912
      %v914 = vpop.f32.mrb[0].mxu0
      %v915 = vadd.f32 0.0, %v914
      %916 = vmatprep.mubr.bf16.mxu0 %v685
      %917 = vmatmul.mubr.bf16.gmra.mrb[0].mxu0 %v684
      %v918 = vpop.f32.mrb[0].mxu0
      %v919 = vadd.f32 0.0, %v918
      %v920 = vpop.f32.mrb[0].mxu0
      %v921 = vadd.f32 0.0, %v920
      %v922 = vpop.f32.mrb[0].mxu0
      %v923 = vadd.f32 0.0, %v922
      %v924 = vpop.f32.mrb[0].mxu0
      %v925 = vadd.f32 0.0, %v924
      %926 = vmatprep.mubr.bf16.mxu0 %v687
      %927 = vmatmul.mubr.bf16.gmra.mrb[0].mxu0 %v686
      %v928 = vpop.f32.mrb[0].mxu0
      %v929 = vadd.f32 0.0, %v928
      %v930 = vpop.f32.mrb[0].mxu0
      %v931 = vadd.f32 0.0, %v930
      %v932 = vpop.f32.mrb[0].mxu0
      %v933 = vadd.f32 0.0, %v932
      %v934 = vpop.f32.mrb[0].mxu0
      %v935 = vadd.f32 0.0, %v934
      %936 = vmatprep.mubr.bf16.mxu0 %v689
      %937 = vmatmul.mubr.bf16.gmra.mrb[0].mxu0 %v688
      %v938 = vpop.f32.mrb[0].mxu0
      %v939 = vadd.f32 0.0, %v938
      %v940 = vpop.f32.mrb[0].mxu0
      %v941 = vadd.f32 0.0, %v940
      %v942 = vpop.f32.mrb[0].mxu0
      %v943 = vadd.f32 0.0, %v942
      %v944 = vpop.f32.mrb[0].mxu0
      %v945 = vadd.f32 0.0, %v944
      %946 = vmatprep.mubr.bf16.mxu0 %v691
      %947 = vmatmul.mubr.bf16.gmra.mrb[0].mxu0 %v690
      %v948 = vpop.f32.mrb[0].mxu0
      %v949 = vadd.f32 0.0, %v948
      %v950 = vpop.f32.mrb[0].mxu0
      %v951 = vadd.f32 0.0, %v950
      %v952 = vpop.f32.mrb[0].mxu0
      %v953 = vadd.f32 0.0, %v952
      %v954 = vpop.f32.mrb[0].mxu0
      %v955 = vadd.f32 0.0, %v954
      %956 = vmatprep.mubr.bf16.mxu0 %v693
      %957 = vmatmul.mubr.bf16.gmra.mrb[0].mxu0 %v692
      %v958 = vpop.f32.mrb[0].mxu0
      %v959 = vadd.f32 0.0, %v958
      %v960 = vpop.f32.mrb[0].mxu0
      %v961 = vadd.f32 0.0, %v960
      %v962 = vpop.f32.mrb[0].mxu0
      %v963 = vadd.f32 0.0, %v962
      %v964 = vpop.f32.mrb[0].mxu0
      %v965 = vadd.f32 0.0, %v964
      %966 = vmatprep.mubr.bf16.mxu0 %v695
      %967 = vmatmul.mubr.bf16.gmra.mrb[0].mxu0 %v694
      %v968 = vpop.f32.mrb[0].mxu0
      %v969 = vadd.f32 0.0, %v968
      %v970 = vpop.f32.mrb[0].mxu0
      %v971 = vadd.f32 0.0, %v970
      %v972 = vpop.f32.mrb[0].mxu0
      %v973 = vadd.f32 0.0, %v972
      %v974 = vpop.f32.mrb[0].mxu0
      %v975 = vadd.f32 0.0, %v974
      %976 = vmatprep.mubr.bf16.mxu0 %v697
      %977 = vmatmul.mubr.bf16.gmra.mrb[0].mxu0 %v696
      %v978 = vpop.f32.mrb[0].mxu0
      %v979 = vadd.f32 0.0, %v978
      %v980 = vpop.f32.mrb[0].mxu0
      %v981 = vadd.f32 0.0, %v980
      %v982 = vpop.f32.mrb[0].mxu0
      %v983 = vadd.f32 0.0, %v982
      %v984 = vpop.f32.mrb[0].mxu0
      %v985 = vadd.f32 0.0, %v984
      %986 = vmatprep.mubr.bf16.mxu0 %v699
      %987 = vmatmul.mubr.bf16.gmra.mrb[0].mxu0 %v698
      %v988 = vpop.f32.mrb[0].mxu0
      %v989 = vadd.f32 0.0, %v988
      %v990 = vpop.f32.mrb[0].mxu0
      %v991 = vadd.f32 0.0, %v990
      %v992 = vpop.f32.mrb[0].mxu0
      %v993 = vadd.f32 0.0, %v992
      %v994 = vpop.f32.mrb[0].mxu0
      %v995 = vadd.f32 0.0, %v994
      %996 = vmatprep.mubr.bf16.mxu0 %v701
      %997 = vmatmul.mubr.bf16.gmra.mrb[0].mxu0 %v700
      %v998 = vpop.f32.mrb[0].mxu0
      %v999 = vadd.f32 0.0, %v998
      %v1000 = vpop.f32.mrb[0].mxu0
      %v1001 = vadd.f32 0.0, %v1000
      %v1002 = vpop.f32.mrb[0].mxu0
      %v1003 = vadd.f32 0.0, %v1002
      %v1004 = vpop.f32.mrb[0].mxu0
      %v1005 = vadd.f32 0.0, %v1004
      %1006 = vmatprep.mubr.bf16.mxu0 %v703
      %1007 = vmatmul.mubr.bf16.gmra.mrb[0].mxu0 %v702
      %v1008 = vpop.f32.mrb[0].mxu0
      %v1009 = vadd.f32 0.0, %v1008
      %v1010 = vpop.f32.mrb[0].mxu0
      %v1011 = vadd.f32 0.0, %v1010
      %v1012 = vpop.f32.mrb[0].mxu0
      %v1013 = vadd.f32 0.0, %v1012
      %v1014 = vpop.f32.mrb[0].mxu0
      %v1015 = vadd.f32 0.0, %v1014
      %1016 = vmatprep.mubr.bf16.mxu0 %v705
      %1017 = vmatmul.mubr.bf16.gmra.mrb[0].mxu0 %v704
      %v1018 = vpop.f32.mrb[0].mxu0
      %v1019 = vadd.f32 0.0, %v1018
      %v1020 = vpop.f32.mrb[0].mxu0
      %v1021 = vadd.f32 0.0, %v1020
      %v1022 = vpop.f32.mrb[0].mxu0
      %v1023 = vadd.f32 0.0, %v1022
      %v1024 = vpop.f32.mrb[0].mxu0
      %v1025 = vadd.f32 0.0, %v1024
      %1026 = vmatprep.mubr.bf16.mxu0 %v707
      %1027 = vmatmul.mubr.bf16.gmra.mrb[0].mxu0 %v706
      %v1028 = vpop.f32.mrb[0].mxu0
      %v1029 = vadd.f32 0.0, %v1028
      %v1030 = vpop.f32.mrb[0].mxu0
      %v1031 = vadd.f32 0.0, %v1030
      %v1032 = vpop.f32.mrb[0].mxu0
      %v1033 = vadd.f32 0.0, %v1032
      %v1034 = vpop.f32.mrb[0].mxu0
      %v1035 = vadd.f32 0.0, %v1034
      %1036 = vmatprep.mubr.bf16.mxu0 %v709
      %1037 = vmatmul.mubr.bf16.gmra.mrb[0].mxu0 %v708
      %v1038 = vpop.f32.mrb[0].mxu0
      %v1039 = vadd.f32 0.0, %v1038
      %v1040 = vpop.f32.mrb[0].mxu0
      %v1041 = vadd.f32 0.0, %v1040
      %v1042 = vpop.f32.mrb[0].mxu0
      %v1043 = vadd.f32 0.0, %v1042
      %v1044 = vpop.f32.mrb[0].mxu0
      %v1045 = vadd.f32 0.0, %v1044
      %1046 = vmatprep.mubr.bf16.mxu0 %v711
      %1047 = vmatmul.mubr.bf16.gmra.mrb[0].mxu0 %v710
      %v1048 = vpop.f32.mrb[0].mxu0
      %v1049 = vadd.f32 0.0, %v1048
      %v1050 = vpop.f32.mrb[0].mxu0
      %v1051 = vadd.f32 0.0, %v1050
      %v1052 = vpop.f32.mrb[0].mxu0
      %v1053 = vadd.f32 0.0, %v1052
      %v1054 = vpop.f32.mrb[0].mxu0
      %v1055 = vadd.f32 0.0, %v1054
      %1056 = vmatprep.mubr.bf16.mxu0 %v713
      %1057 = vmatmul.mubr.bf16.gmra.mrb[0].mxu0 %v712
      %v1058 = vpop.f32.mrb[0].mxu0
      %v1059 = vadd.f32 0.0, %v1058
      %v1060 = vpop.f32.mrb[0].mxu0
      %v1061 = vadd.f32 0.0, %v1060
      %v1062 = vpop.f32.mrb[0].mxu0
      %v1063 = vadd.f32 0.0, %v1062
      %v1064 = vpop.f32.mrb[0].mxu0
      %v1065 = vadd.f32 0.0, %v1064
      %1066 = vmatprep.mubr.bf16.mxu0 %v715
      %1067 = vmatmul.mubr.bf16.gmra.mrb[0].mxu0 %v714
      %v1068 = vpop.f32.mrb[0].mxu0
      %v1069 = vadd.f32 0.0, %v1068
      %v1070 = vpop.f32.mrb[0].mxu0
      %v1071 = vadd.f32 0.0, %v1070
      %v1072 = vpop.f32.mrb[0].mxu0
      %v1073 = vadd.f32 0.0, %v1072
      %v1074 = vpop.f32.mrb[0].mxu0
      %v1075 = vadd.f32 0.0, %v1074
      %1076 = vmatprep.mubr.bf16.mxu0 %v717
      %1077 = vmatmul.mubr.bf16.gmra.mrb[0].mxu0 %v716
      %v1078 = vpop.f32.mrb[0].mxu0
      %v1079 = vadd.f32 0.0, %v1078
      %v1080 = vpop.f32.mrb[0].mxu0
      %v1081 = vadd.f32 0.0, %v1080
      %v1082 = vpop.f32.mrb[0].mxu0
      %v1083 = vadd.f32 0.0, %v1082
      %v1084 = vpop.f32.mrb[0].mxu0
      %v1085 = vadd.f32 0.0, %v1084
      %1086 = vmatprep.mubr.bf16.mxu0 %v719
      %1087 = vmatmul.mubr.bf16.gmra.mrb[0].mxu0 %v718
      %v1088 = vpop.f32.mrb[0].mxu0
      %v1089 = vadd.f32 0.0, %v1088
      %v1090 = vpop.f32.mrb[0].mxu0
      %v1091 = vadd.f32 0.0, %v1090
      %v1092 = vpop.f32.mrb[0].mxu0
      %v1093 = vadd.f32 0.0, %v1092
      %v1094 = vpop.f32.mrb[0].mxu0
      %v1095 = vadd.f32 0.0, %v1094
      %1096 = vmatprep.mubr.bf16.mxu0 %v721
      %1097 = vmatmul.mubr.bf16.gmra.mrb[0].mxu0 %v720
      %v1098 = vpop.f32.mrb[0].mxu0
      %v1099 = vadd.f32 0.0, %v1098
      %v1100 = vpop.f32.mrb[0].mxu0
      %v1101 = vadd.f32 0.0, %v1100
      %v1102 = vpop.f32.mrb[0].mxu0
      %v1103 = vadd.f32 0.0, %v1102
      %v1104 = vpop.f32.mrb[0].mxu0
      %v1105 = vadd.f32 0.0, %v1104
      %1106 = vmatprep.mubr.bf16.mxu0 %v723
      %1107 = vmatmul.mubr.bf16.gmra.mrb[0].mxu0 %v722
      %v1108 = vpop.f32.mrb[0].mxu0
      %v1109 = vadd.f32 0.0, %v1108
      %v1110 = vpop.f32.mrb[0].mxu0
      %v1111 = vadd.f32 0.0, %v1110
      %v1112 = vpop.f32.mrb[0].mxu0
      %v1113 = vadd.f32 0.0, %v1112
      %v1114 = vpop.f32.mrb[0].mxu0
      %v1115 = vadd.f32 0.0, %v1114
      %1116 = vmatprep.mubr.bf16.mxu0 %v725
      %1117 = vmatmul.mubr.bf16.gmra.mrb[0].mxu0 %v724
      %v1118 = vpop.f32.mrb[0].mxu0
      %v1119 = vadd.f32 0.0, %v1118
      %v1120 = vpop.f32.mrb[0].mxu0
      %v1121 = vadd.f32 0.0, %v1120
      %v1122 = vpop.f32.mrb[0].mxu0
      %v1123 = vadd.f32 0.0, %v1122
      %v1124 = vpop.f32.mrb[0].mxu0
      %v1125 = vadd.f32 0.0, %v1124
      %1126 = vmatprep.mubr.bf16.mxu0 %v727
      %1127 = vmatmul.mubr.bf16.gmra.mrb[0].mxu0 %v726
      %v1128 = vpop.f32.mrb[0].mxu0
      %v1129 = vadd.f32 0.0, %v1128
      %v1130 = vpop.f32.mrb[0].mxu0
      %v1131 = vadd.f32 0.0, %v1130
      %v1132 = vpop.f32.mrb[0].mxu0
      %v1133 = vadd.f32 0.0, %v1132
      %v1134 = vpop.f32.mrb[0].mxu0
      %v1135 = vadd.f32 0.0, %v1134
      %1136 = vmatprep.mubr.bf16.mxu0 %v729
      %1137 = vmatmul.mubr.bf16.gmra.mrb[0].mxu0 %v728
      %v1138 = vpop.f32.mrb[0].mxu0
      %v1139 = vadd.f32 0.0, %v1138
      %v1140 = vpop.f32.mrb[0].mxu0
      %v1141 = vadd.f32 0.0, %v1140
      %v1142 = vpop.f32.mrb[0].mxu0
      %v1143 = vadd.f32 0.0, %v1142
      %v1144 = vpop.f32.mrb[0].mxu0
      %v1145 = vadd.f32 0.0, %v1144
      %1146 = vdwg.mxu0
      %vm1147 = vcmask 556032
      %v1149 = vsel %vm1147, %v831, 0
      %v1152 = vsel %vm1147, %v835, 0
      %v1155 = vsel %vm1147, %v841, 0
      %v1158 = vsel %vm1147, %v845, 0
      %v1161 = vsel %vm1147, %v851, 0
      %v1164 = vsel %vm1147, %v855, 0
      %v1167 = vsel %vm1147, %v861, 0
      %v1170 = vsel %vm1147, %v865, 0
      %v1173 = vsel %vm1147, %v871, 0
      %v1176 = vsel %vm1147, %v875, 0
      %v1179 = vsel %vm1147, %v881, 0
      %v1182 = vsel %vm1147, %v885, 0
      %v1185 = vsel %vm1147, %v891, 0
      %v1188 = vsel %vm1147, %v895, 0
      %v1191 = vsel %vm1147, %v901, 0
      %v1194 = vsel %vm1147, %v905, 0
      %v1197 = vsel %vm1147, %v911, 0
      %v1200 = vsel %vm1147, %v915, 0
      %v1203 = vsel %vm1147, %v921, 0
      %v1206 = vsel %vm1147, %v925, 0
      %v1209 = vsel %vm1147, %v931, 0
      %v1212 = vsel %vm1147, %v935, 0
      %v1215 = vsel %vm1147, %v941, 0
      %v1218 = vsel %vm1147, %v945, 0
      %v1221 = vsel %vm1147, %v951, 0
      %v1224 = vsel %vm1147, %v955, 0
      %v1227 = vsel %vm1147, %v961, 0
      %v1230 = vsel %vm1147, %v965, 0
      %v1233 = vsel %vm1147, %v971, 0
      %v1236 = vsel %vm1147, %v975, 0
      %v1239 = vsel %vm1147, %v981, 0
      %v1242 = vsel %vm1147, %v985, 0
      %v1245 = vsel %vm1147, %v991, 0
      %v1248 = vsel %vm1147, %v995, 0
      %v1251 = vsel %vm1147, %v1001, 0
      %v1254 = vsel %vm1147, %v1005, 0
      %v1257 = vsel %vm1147, %v1011, 0
      %v1260 = vsel %vm1147, %v1015, 0
      %v1263 = vsel %vm1147, %v1021, 0
      %v1266 = vsel %vm1147, %v1025, 0
      %v1269 = vsel %vm1147, %v1031, 0
      %v1272 = vsel %vm1147, %v1035, 0
      %v1275 = vsel %vm1147, %v1041, 0
      %v1278 = vsel %vm1147, %v1045, 0
      %v1281 = vsel %vm1147, %v1051, 0
      %v1284 = vsel %vm1147, %v1055, 0
      %v1287 = vsel %vm1147, %v1061, 0
      %v1290 = vsel %vm1147, %v1065, 0
      %v1293 = vsel %vm1147, %v1071, 0
      %v1296 = vsel %vm1147, %v1075, 0
      %v1299 = vsel %vm1147, %v1081, 0
      %v1302 = vsel %vm1147, %v1085, 0
      %v1305 = vsel %vm1147, %v1091, 0
      %v1308 = vsel %vm1147, %v1095, 0
      %v1311 = vsel %vm1147, %v1101, 0
      %v1314 = vsel %vm1147, %v1105, 0
      %v1317 = vsel %vm1147, %v1111, 0
      %v1320 = vsel %vm1147, %v1115, 0
      %v1323 = vsel %vm1147, %v1121, 0
      %v1326 = vsel %vm1147, %v1125, 0
      %v1329 = vsel %vm1147, %v1131, 0
      %v1332 = vsel %vm1147, %v1135, 0
      %v1335 = vsel %vm1147, %v1141, 0
      %v1338 = vsel %vm1147, %v1145, 0
      %vm1340 = vcmask 1043456
      %v1342 = vsel %vm1340, 1.0, 0
      %1344 = vmatprep.subr.mxu0 0.0
      %1345 = vmatpush1.msra.mxu0 1.0
      %1346 = vmatprep.subr.mxu0 0.0
      %1347 = vmatpush1.msra.mxu0 1.0
      %1348 = vmatprep.subr.mxu0 0.0
      %1349 = vmatpush1.msra.mxu0 1.0
      %1350 = vmatprep.subr.mxu0 0.0
      %1351 = vmatpush1.msra.mxu0 1.0
      %1352 = vmatprep.subr.mxu0 0.0
      %1353 = vmatpush1.msra.mxu0 1.0
      %1354 = vmatprep.subr.mxu0 0.0
      %1355 = vmatpush1.msra.mxu0 1.0
      %1356 = vmatprep.subr.mxu0 0.0
      %1357 = vmatpush1.msra.mxu0 1.0
      %1358 = vmatprep.subr.mxu0 0.0
      %1359 = vmatpush1.msra.mxu0 1.0
      %1360 = vmatprep.subr.mxu0 0.0
      %1361 = vmatpush1.msra.mxu0 1.0
      %1362 = vmatprep.subr.mxu0 0.0
      %1363 = vmatpush1.msra.mxu0 1.0
      %1364 = vmatprep.subr.mxu0 0.0
      %1365 = vmatpush1.msra.mxu0 1.0
      %1366 = vmatprep.subr.mxu0 0.0
      %1367 = vmatpush1.msra.mxu0 1.0
      %1368 = vmatprep.subr.mxu0 0.0
      %1369 = vmatpush1.msra.mxu0 1.0
      %1370 = vmatprep.subr.mxu0 0.0
      %1371 = vmatpush1.msra.mxu0 1.0
      %1372 = vmatprep.subr.mxu0 0.0
      %1373 = vmatpush1.msra.mxu0 1.0
      %1374 = vmatprep.subr.mxu0 0.0
      %1375 = vmatpush1.msra.mxu0 1.0
      %1376 = vmatprep.subr.mxu0 0.0
      %1377 = vmatpush1.msra.mxu0 1.0
      %1378 = vmatprep.subr.mxu0 0.0
      %1379 = vmatpush1.msra.mxu0 1.0
      %1380 = vmatprep.subr.mxu0 0.0
      %1381 = vmatpush1.msra.mxu0 1.0
      %1382 = vmatprep.subr.mxu0 0.0
      %1383 = vmatpush1.msra.mxu0 1.0
      %1384 = vmatprep.subr.mxu0 0.0
      %1385 = vmatpush1.msra.mxu0 1.0
      %1386 = vmatprep.subr.mxu0 0.0
      %1387 = vmatpush1.msra.mxu0 1.0
      %1388 = vmatprep.subr.mxu0 0.0
      %1389 = vmatpush1.msra.mxu0 1.0
      %1390 = vmatprep.subr.mxu0 0.0
      %1391 = vmatpush1.msra.mxu0 1.0
      %1392 = vmatprep.subr.mxu0 0.0
      %1393 = vmatpush1.msra.mxu0 %v1342
      %1394 = vmatprep.subr.mxu0 0.0
      %1395 = vmatpush1.msra.mxu0 0.0
      %1396 = vmatprep.subr.mxu0 0.0
      %1397 = vmatpush1.msra.mxu0 0.0
      %1398 = vmatprep.subr.mxu0 0.0
      %1399 = vmatpush1.msra.mxu0 0.0
      %1400 = vmatprep.subr.mxu0 0.0
      %1401 = vmatpush1.msra.mxu0 0.0
      %1402 = vmatprep.subr.mxu0 0.0
      %1403 = vmatpush1.msra.mxu0 0.0
      %1404 = vmatprep.subr.mxu0 0.0
      %1405 = vmatpush1.msra.mxu0 0.0
      %1406 = vmatprep.subr.mxu0 0.0
      %1407 = vmatpush1.msra.mxu0 0.0
      %1408 = vmatprep.mubr.f32.mxu0 %v1149
      %1409 = vmatmul.mubr.f32.gmra.mrb[0].mxu0 %v829
      %v1410 = vpop.f32.mrb[0].mxu0
      %v1411 = vadd.f32 0.0, %v1410
      %v1412 = vpop.f32.mrb[0].mxu0
      %1413 = vmatprep.mubr.f32.mxu0 %v1152
      %1414 = vmatmul.mubr.f32.gmra.mrb[0].mxu0 %v833
      %v1415 = vpop.f32.mrb[0].mxu0
      %v1416 = vadd.f32 0.0, %v1415
      %v1417 = vpop.f32.mrb[0].mxu0
      %1418 = vmatprep.mubr.f32.mxu0 %v1155
      %1419 = vmatmul.mubr.f32.gmra.mrb[0].mxu0 %v839
      %v1420 = vpop.f32.mrb[0].mxu0
      %v1421 = vadd.f32 0.0, %v1420
      %v1422 = vpop.f32.mrb[0].mxu0
      %1423 = vmatprep.mubr.f32.mxu0 %v1158
      %1424 = vmatmul.mubr.f32.gmra.mrb[0].mxu0 %v843
      %v1425 = vpop.f32.mrb[0].mxu0
      %v1426 = vadd.f32 0.0, %v1425
      %v1427 = vpop.f32.mrb[0].mxu0
      %1428 = vmatprep.mubr.f32.mxu0 %v1161
      %1429 = vmatmul.mubr.f32.gmra.mrb[0].mxu0 %v849
      %v1430 = vpop.f32.mrb[0].mxu0
      %v1431 = vadd.f32 0.0, %v1430
      %v1432 = vpop.f32.mrb[0].mxu0
      %1433 = vmatprep.mubr.f32.mxu0 %v1164
      %1434 = vmatmul.mubr.f32.gmra.mrb[0].mxu0 %v853
      %v1435 = vpop.f32.mrb[0].mxu0
      %v1436 = vadd.f32 0.0, %v1435
      %v1437 = vpop.f32.mrb[0].mxu0
      %1438 = vmatprep.mubr.f32.mxu0 %v1167
      %1439 = vmatmul.mubr.f32.gmra.mrb[0].mxu0 %v859
      %v1440 = vpop.f32.mrb[0].mxu0
      %v1441 = vadd.f32 0.0, %v1440
      %v1442 = vpop.f32.mrb[0].mxu0
      %1443 = vmatprep.mubr.f32.mxu0 %v1170
      %1444 = vmatmul.mubr.f32.gmra.mrb[0].mxu0 %v863
      %v1445 = vpop.f32.mrb[0].mxu0
      %v1446 = vadd.f32 0.0, %v1445
      %v1447 = vpop.f32.mrb[0].mxu0
      %1448 = vmatprep.mubr.f32.mxu0 %v1173
      %1449 = vmatmul.mubr.f32.gmra.mrb[0].mxu0 %v869
      %v1450 = vpop.f32.mrb[0].mxu0
      %v1451 = vadd.f32 0.0, %v1450
      %v1452 = vpop.f32.mrb[0].mxu0
      %1453 = vmatprep.mubr.f32.mxu0 %v1176
      %1454 = vmatmul.mubr.f32.gmra.mrb[0].mxu0 %v873
      %v1455 = vpop.f32.mrb[0].mxu0
      %v1456 = vadd.f32 0.0, %v1455
      %v1457 = vpop.f32.mrb[0].mxu0
      %1458 = vmatprep.mubr.f32.mxu0 %v1179
      %1459 = vmatmul.mubr.f32.gmra.mrb[0].mxu0 %v879
      %v1460 = vpop.f32.mrb[0].mxu0
      %v1461 = vadd.f32 0.0, %v1460
      %v1462 = vpop.f32.mrb[0].mxu0
      %1463 = vmatprep.mubr.f32.mxu0 %v1182
      %1464 = vmatmul.mubr.f32.gmra.mrb[0].mxu0 %v883
      %v1465 = vpop.f32.mrb[0].mxu0
      %v1466 = vadd.f32 0.0, %v1465
      %v1467 = vpop.f32.mrb[0].mxu0
      %1468 = vmatprep.mubr.f32.mxu0 %v1185
      %1469 = vmatmul.mubr.f32.gmra.mrb[0].mxu0 %v889
      %v1470 = vpop.f32.mrb[0].mxu0
      %v1471 = vadd.f32 0.0, %v1470
      %v1472 = vpop.f32.mrb[0].mxu0
      %1473 = vmatprep.mubr.f32.mxu0 %v1188
      %1474 = vmatmul.mubr.f32.gmra.mrb[0].mxu0 %v893
      %v1475 = vpop.f32.mrb[0].mxu0
      %v1476 = vadd.f32 0.0, %v1475
      %v1477 = vpop.f32.mrb[0].mxu0
      %1478 = vmatprep.mubr.f32.mxu0 %v1191
      %1479 = vmatmul.mubr.f32.gmra.mrb[0].mxu0 %v899
      %v1480 = vpop.f32.mrb[0].mxu0
      %v1481 = vadd.f32 0.0, %v1480
      %v1482 = vpop.f32.mrb[0].mxu0
      %1483 = vmatprep.mubr.f32.mxu0 %v1194
      %1484 = vmatmul.mubr.f32.gmra.mrb[0].mxu0 %v903
      %v1485 = vpop.f32.mrb[0].mxu0
      %v1486 = vadd.f32 0.0, %v1485
      %v1487 = vpop.f32.mrb[0].mxu0
      %1488 = vmatprep.mubr.f32.mxu0 %v1197
      %1489 = vmatmul.mubr.f32.gmra.mrb[0].mxu0 %v909
      %v1490 = vpop.f32.mrb[0].mxu0
      %v1491 = vadd.f32 0.0, %v1490
      %v1492 = vpop.f32.mrb[0].mxu0
      %1493 = vmatprep.mubr.f32.mxu0 %v1200
      %1494 = vmatmul.mubr.f32.gmra.mrb[0].mxu0 %v913
      %v1495 = vpop.f32.mrb[0].mxu0
      %v1496 = vadd.f32 0.0, %v1495
      %v1497 = vpop.f32.mrb[0].mxu0
      %1498 = vmatprep.mubr.f32.mxu0 %v1203
      %1499 = vmatmul.mubr.f32.gmra.mrb[0].mxu0 %v919
      %v1500 = vpop.f32.mrb[0].mxu0
      %v1501 = vadd.f32 0.0, %v1500
      %v1502 = vpop.f32.mrb[0].mxu0
      %1503 = vmatprep.mubr.f32.mxu0 %v1206
      %1504 = vmatmul.mubr.f32.gmra.mrb[0].mxu0 %v923
      %v1505 = vpop.f32.mrb[0].mxu0
      %v1506 = vadd.f32 0.0, %v1505
      %v1507 = vpop.f32.mrb[0].mxu0
      %1508 = vmatprep.mubr.f32.mxu0 %v1209
      %1509 = vmatmul.mubr.f32.gmra.mrb[0].mxu0 %v929
      %v1510 = vpop.f32.mrb[0].mxu0
      %v1511 = vadd.f32 0.0, %v1510
      %v1512 = vpop.f32.mrb[0].mxu0
      %1513 = vmatprep.mubr.f32.mxu0 %v1212
      %1514 = vmatmul.mubr.f32.gmra.mrb[0].mxu0 %v933
      %v1515 = vpop.f32.mrb[0].mxu0
      %v1516 = vadd.f32 0.0, %v1515
      %v1517 = vpop.f32.mrb[0].mxu0
      %1518 = vmatprep.mubr.f32.mxu0 %v1215
      %1519 = vmatmul.mubr.f32.gmra.mrb[0].mxu0 %v939
      %v1520 = vpop.f32.mrb[0].mxu0
      %v1521 = vadd.f32 0.0, %v1520
      %v1522 = vpop.f32.mrb[0].mxu0
      %1523 = vmatprep.mubr.f32.mxu0 %v1218
      %1524 = vmatmul.mubr.f32.gmra.mrb[0].mxu0 %v943
      %v1525 = vpop.f32.mrb[0].mxu0
      %v1526 = vadd.f32 0.0, %v1525
      %v1527 = vpop.f32.mrb[0].mxu0
      %1528 = vmatprep.mubr.f32.mxu0 %v1221
      %1529 = vmatmul.mubr.f32.gmra.mrb[0].mxu0 %v949
      %v1530 = vpop.f32.mrb[0].mxu0
      %v1531 = vadd.f32 0.0, %v1530
      %v1532 = vpop.f32.mrb[0].mxu0
      %1533 = vmatprep.mubr.f32.mxu0 %v1224
      %1534 = vmatmul.mubr.f32.gmra.mrb[0].mxu0 %v953
      %v1535 = vpop.f32.mrb[0].mxu0
      %v1536 = vadd.f32 0.0, %v1535
      %v1537 = vpop.f32.mrb[0].mxu0
      %1538 = vmatprep.mubr.f32.mxu0 %v1227
      %1539 = vmatmul.mubr.f32.gmra.mrb[0].mxu0 %v959
      %v1540 = vpop.f32.mrb[0].mxu0
      %v1541 = vadd.f32 0.0, %v1540
      %v1542 = vpop.f32.mrb[0].mxu0
      %1543 = vmatprep.mubr.f32.mxu0 %v1230
      %1544 = vmatmul.mubr.f32.gmra.mrb[0].mxu0 %v963
      %v1545 = vpop.f32.mrb[0].mxu0
      %v1546 = vadd.f32 0.0, %v1545
      %v1547 = vpop.f32.mrb[0].mxu0
      %1548 = vmatprep.mubr.f32.mxu0 %v1233
      %1549 = vmatmul.mubr.f32.gmra.mrb[0].mxu0 %v969
      %v1550 = vpop.f32.mrb[0].mxu0
      %v1551 = vadd.f32 0.0, %v1550
      %v1552 = vpop.f32.mrb[0].mxu0
      %1553 = vmatprep.mubr.f32.mxu0 %v1236
      %1554 = vmatmul.mubr.f32.gmra.mrb[0].mxu0 %v973
      %v1555 = vpop.f32.mrb[0].mxu0
      %v1556 = vadd.f32 0.0, %v1555
      %v1557 = vpop.f32.mrb[0].mxu0
      %1558 = vmatprep.mubr.f32.mxu0 %v1239
      %1559 = vmatmul.mubr.f32.gmra.mrb[0].mxu0 %v979
      %v1560 = vpop.f32.mrb[0].mxu0
      %v1561 = vadd.f32 0.0, %v1560
      %v1562 = vpop.f32.mrb[0].mxu0
      %1563 = vmatprep.mubr.f32.mxu0 %v1242
      %1564 = vmatmul.mubr.f32.gmra.mrb[0].mxu0 %v983
      %v1565 = vpop.f32.mrb[0].mxu0
      %v1566 = vadd.f32 0.0, %v1565
      %v1567 = vpop.f32.mrb[0].mxu0
      %1568 = vmatprep.mubr.f32.mxu0 %v1245
      %1569 = vmatmul.mubr.f32.gmra.mrb[0].mxu0 %v989
      %v1570 = vpop.f32.mrb[0].mxu0
      %v1571 = vadd.f32 0.0, %v1570
      %v1572 = vpop.f32.mrb[0].mxu0
      %1573 = vmatprep.mubr.f32.mxu0 %v1248
      %1574 = vmatmul.mubr.f32.gmra.mrb[0].mxu0 %v993
      %v1575 = vpop.f32.mrb[0].mxu0
      %v1576 = vadd.f32 0.0, %v1575
      %v1577 = vpop.f32.mrb[0].mxu0
      %1578 = vmatprep.mubr.f32.mxu0 %v1251
      %1579 = vmatmul.mubr.f32.gmra.mrb[0].mxu0 %v999
      %v1580 = vpop.f32.mrb[0].mxu0
      %v1581 = vadd.f32 0.0, %v1580
      %v1582 = vpop.f32.mrb[0].mxu0
      %1583 = vmatprep.mubr.f32.mxu0 %v1254
      %1584 = vmatmul.mubr.f32.gmra.mrb[0].mxu0 %v1003
      %v1585 = vpop.f32.mrb[0].mxu0
      %v1586 = vadd.f32 0.0, %v1585
      %v1587 = vpop.f32.mrb[0].mxu0
      %1588 = vmatprep.mubr.f32.mxu0 %v1257
      %1589 = vmatmul.mubr.f32.gmra.mrb[0].mxu0 %v1009
      %v1590 = vpop.f32.mrb[0].mxu0
      %v1591 = vadd.f32 0.0, %v1590
      %v1592 = vpop.f32.mrb[0].mxu0
      %1593 = vmatprep.mubr.f32.mxu0 %v1260
      %1594 = vmatmul.mubr.f32.gmra.mrb[0].mxu0 %v1013
      %v1595 = vpop.f32.mrb[0].mxu0
      %v1596 = vadd.f32 0.0, %v1595
      %v1597 = vpop.f32.mrb[0].mxu0
      %1598 = vmatprep.mubr.f32.mxu0 %v1263
      %1599 = vmatmul.mubr.f32.gmra.mrb[0].mxu0 %v1019
      %v1600 = vpop.f32.mrb[0].mxu0
      %v1601 = vadd.f32 0.0, %v1600
      %v1602 = vpop.f32.mrb[0].mxu0
      %1603 = vmatprep.mubr.f32.mxu0 %v1266
      %1604 = vmatmul.mubr.f32.gmra.mrb[0].mxu0 %v1023
      %v1605 = vpop.f32.mrb[0].mxu0
      %v1606 = vadd.f32 0.0, %v1605
      %v1607 = vpop.f32.mrb[0].mxu0
      %1608 = vmatprep.mubr.f32.mxu0 %v1269
      %1609 = vmatmul.mubr.f32.gmra.mrb[0].mxu0 %v1029
      %v1610 = vpop.f32.mrb[0].mxu0
      %v1611 = vadd.f32 0.0, %v1610
      %v1612 = vpop.f32.mrb[0].mxu0
      %1613 = vmatprep.mubr.f32.mxu0 %v1272
      %1614 = vmatmul.mubr.f32.gmra.mrb[0].mxu0 %v1033
      %v1615 = vpop.f32.mrb[0].mxu0
      %v1616 = vadd.f32 0.0, %v1615
      %v1617 = vpop.f32.mrb[0].mxu0
      %1618 = vmatprep.mubr.f32.mxu0 %v1275
      %1619 = vmatmul.mubr.f32.gmra.mrb[0].mxu0 %v1039
      %v1620 = vpop.f32.mrb[0].mxu0
      %v1621 = vadd.f32 0.0, %v1620
      %v1622 = vpop.f32.mrb[0].mxu0
      %1623 = vmatprep.mubr.f32.mxu0 %v1278
      %1624 = vmatmul.mubr.f32.gmra.mrb[0].mxu0 %v1043
      %v1625 = vpop.f32.mrb[0].mxu0
      %v1626 = vadd.f32 0.0, %v1625
      %v1627 = vpop.f32.mrb[0].mxu0
      %1628 = vmatprep.mubr.f32.mxu0 %v1281
      %1629 = vmatmul.mubr.f32.gmra.mrb[0].mxu0 %v1049
      %v1630 = vpop.f32.mrb[0].mxu0
      %v1631 = vadd.f32 0.0, %v1630
      %v1632 = vpop.f32.mrb[0].mxu0
      %1633 = vmatprep.mubr.f32.mxu0 %v1284
      %1634 = vmatmul.mubr.f32.gmra.mrb[0].mxu0 %v1053
      %v1635 = vpop.f32.mrb[0].mxu0
      %v1636 = vadd.f32 0.0, %v1635
      %v1637 = vpop.f32.mrb[0].mxu0
      %1638 = vmatprep.mubr.f32.mxu0 %v1287
      %1639 = vmatmul.mubr.f32.gmra.mrb[0].mxu0 %v1059
      %v1640 = vpop.f32.mrb[0].mxu0
      %v1641 = vadd.f32 0.0, %v1640
      %v1642 = vpop.f32.mrb[0].mxu0
      %1643 = vmatprep.mubr.f32.mxu0 %v1290
      %1644 = vmatmul.mubr.f32.gmra.mrb[0].mxu0 %v1063
      %v1645 = vpop.f32.mrb[0].mxu0
      %v1646 = vadd.f32 0.0, %v1645
      %v1647 = vpop.f32.mrb[0].mxu0
      %1648 = vmatprep.mubr.f32.mxu0 %v1293
      %1649 = vmatmul.mubr.f32.gmra.mrb[0].mxu0 %v1069
      %v1650 = vpop.f32.mrb[0].mxu0
      %v1651 = vadd.f32 0.0, %v1650
      %v1652 = vpop.f32.mrb[0].mxu0
      %1653 = vmatprep.mubr.f32.mxu0 %v1296
      %1654 = vmatmul.mubr.f32.gmra.mrb[0].mxu0 %v1073
      %v1655 = vpop.f32.mrb[0].mxu0
      %v1656 = vadd.f32 0.0, %v1655
      %v1657 = vpop.f32.mrb[0].mxu0
      %1658 = vmatprep.mubr.f32.mxu0 %v1299
      %1659 = vmatmul.mubr.f32.gmra.mrb[0].mxu0 %v1079
      %v1660 = vpop.f32.mrb[0].mxu0
      %v1661 = vadd.f32 0.0, %v1660
      %v1662 = vpop.f32.mrb[0].mxu0
      %1663 = vmatprep.mubr.f32.mxu0 %v1302
      %1664 = vmatmul.mubr.f32.gmra.mrb[0].mxu0 %v1083
      %v1665 = vpop.f32.mrb[0].mxu0
      %v1666 = vadd.f32 0.0, %v1665
      %v1667 = vpop.f32.mrb[0].mxu0
      %1668 = vmatprep.mubr.f32.mxu0 %v1305
      %1669 = vmatmul.mubr.f32.gmra.mrb[0].mxu0 %v1089
      %v1670 = vpop.f32.mrb[0].mxu0
      %v1671 = vadd.f32 0.0, %v1670
      %v1672 = vpop.f32.mrb[0].mxu0
      %1673 = vmatprep.mubr.f32.mxu0 %v1308
      %1674 = vmatmul.mubr.f32.gmra.mrb[0].mxu0 %v1093
      %v1675 = vpop.f32.mrb[0].mxu0
      %v1676 = vadd.f32 0.0, %v1675
      %v1677 = vpop.f32.mrb[0].mxu0
      %1678 = vmatprep.mubr.f32.mxu0 %v1311
      %1679 = vmatmul.mubr.f32.gmra.mrb[0].mxu0 %v1099
      %v1680 = vpop.f32.mrb[0].mxu0
      %v1681 = vadd.f32 0.0, %v1680
      %v1682 = vpop.f32.mrb[0].mxu0
      %1683 = vmatprep.mubr.f32.mxu0 %v1314
      %1684 = vmatmul.mubr.f32.gmra.mrb[0].mxu0 %v1103
      %v1685 = vpop.f32.mrb[0].mxu0
      %v1686 = vadd.f32 0.0, %v1685
      %v1687 = vpop.f32.mrb[0].mxu0
      %1688 = vmatprep.mubr.f32.mxu0 %v1317
      %1689 = vmatmul.mubr.f32.gmra.mrb[0].mxu0 %v1109
      %v1690 = vpop.f32.mrb[0].mxu0
      %v1691 = vadd.f32 0.0, %v1690
      %v1692 = vpop.f32.mrb[0].mxu0
      %1693 = vmatprep.mubr.f32.mxu0 %v1320
      %1694 = vmatmul.mubr.f32.gmra.mrb[0].mxu0 %v1113
      %v1695 = vpop.f32.mrb[0].mxu0
      %v1696 = vadd.f32 0.0, %v1695
      %v1697 = vpop.f32.mrb[0].mxu0
      %1698 = vmatprep.mubr.f32.mxu0 %v1323
      %1699 = vmatmul.mubr.f32.gmra.mrb[0].mxu0 %v1119
      %v1700 = vpop.f32.mrb[0].mxu0
      %v1701 = vadd.f32 0.0, %v1700
      %v1702 = vpop.f32.mrb[0].mxu0
      %1703 = vmatprep.mubr.f32.mxu0 %v1326
      %1704 = vmatmul.mubr.f32.gmra.mrb[0].mxu0 %v1123
      %v1705 = vpop.f32.mrb[0].mxu0
      %v1706 = vadd.f32 0.0, %v1705
      %v1707 = vpop.f32.mrb[0].mxu0
      %1708 = vmatprep.mubr.f32.mxu0 %v1329
      %1709 = vmatmul.mubr.f32.gmra.mrb[0].mxu0 %v1129
      %v1710 = vpop.f32.mrb[0].mxu0
      %v1711 = vadd.f32 0.0, %v1710
      %v1712 = vpop.f32.mrb[0].mxu0
      %1713 = vmatprep.mubr.f32.mxu0 %v1332
      %1714 = vmatmul.mubr.f32.gmra.mrb[0].mxu0 %v1133
      %v1715 = vpop.f32.mrb[0].mxu0
      %v1716 = vadd.f32 0.0, %v1715
      %v1717 = vpop.f32.mrb[0].mxu0
      %1718 = vmatprep.mubr.f32.mxu0 %v1335
      %1719 = vmatmul.mubr.f32.gmra.mrb[0].mxu0 %v1139
      %v1720 = vpop.f32.mrb[0].mxu0
      %v1721 = vadd.f32 0.0, %v1720
      %v1722 = vpop.f32.mrb[0].mxu0
      %1723 = vmatprep.mubr.f32.mxu0 %v1338
      %1724 = vmatmul.mubr.f32.gmra.mrb[0].mxu0 %v1143
      %v1725 = vpop.f32.mrb[0].mxu0
      %v1726 = vadd.f32 0.0, %v1725
      %v1727 = vpop.f32.mrb[0].mxu0
      %1728 = vdwg.mxu0
      %v1729 = vmul.f32 %v1411, 0.0051020407
      %v1730 = vmul.f32 %v1416, 0.0051020407
      %v1731 = vmul.f32 %v1421, 0.0051020407
      %v1732 = vmul.f32 %v1426, 0.0051020407
      %v1733 = vmul.f32 %v1431, 0.0051020407
      %v1734 = vmul.f32 %v1436, 0.0051020407
      %v1735 = vmul.f32 %v1441, 0.0051020407
      %v1736 = vmul.f32 %v1446, 0.0051020407
      %v1737 = vmul.f32 %v1451, 0.0051020407
      %v1738 = vmul.f32 %v1456, 0.0051020407
      %v1739 = vmul.f32 %v1461, 0.0051020407
      %v1740 = vmul.f32 %v1466, 0.0051020407
      %v1741 = vmul.f32 %v1471, 0.0051020407
      %v1742 = vmul.f32 %v1476, 0.0051020407
      %v1743 = vmul.f32 %v1481, 0.0051020407
      %v1744 = vmul.f32 %v1486, 0.0051020407
      %v1745 = vmul.f32 %v1491, 0.0051020407
      %v1746 = vmul.f32 %v1496, 0.0051020407
      %v1747 = vmul.f32 %v1501, 0.0051020407
      %v1748 = vmul.f32 %v1506, 0.0051020407
      %v1749 = vmul.f32 %v1511, 0.0051020407
      %v1750 = vmul.f32 %v1516, 0.0051020407
      %v1751 = vmul.f32 %v1521, 0.0051020407
      %v1752 = vmul.f32 %v1526, 0.0051020407
      %v1753 = vmul.f32 %v1531, 0.0051020407
      %v1754 = vmul.f32 %v1536, 0.0051020407
      %v1755 = vmul.f32 %v1541, 0.0051020407
      %v1756 = vmul.f32 %v1546, 0.0051020407
      %v1757 = vmul.f32 %v1551, 0.0051020407
      %v1758 = vmul.f32 %v1556, 0.0051020407
      %v1759 = vmul.f32 %v1561, 0.0051020407
      %v1760 = vmul.f32 %v1566, 0.0051020407
      %v1761 = vmul.f32 %v1571, 0.0051020407
      %v1762 = vmul.f32 %v1576, 0.0051020407
      %v1763 = vmul.f32 %v1581, 0.0051020407
      %v1764 = vmul.f32 %v1586, 0.0051020407
      %v1765 = vmul.f32 %v1591, 0.0051020407
      %v1766 = vmul.f32 %v1596, 0.0051020407
      %v1767 = vmul.f32 %v1601, 0.0051020407
      %v1768 = vmul.f32 %v1606, 0.0051020407
      %v1769 = vmul.f32 %v1611, 0.0051020407
      %v1770 = vmul.f32 %v1616, 0.0051020407
      %v1771 = vmul.f32 %v1621, 0.0051020407
      %v1772 = vmul.f32 %v1626, 0.0051020407
      %v1773 = vmul.f32 %v1631, 0.0051020407
      %v1774 = vmul.f32 %v1636, 0.0051020407
      %v1775 = vmul.f32 %v1641, 0.0051020407
      %v1776 = vmul.f32 %v1646, 0.0051020407
      %v1777 = vmul.f32 %v1651, 0.0051020407
      %v1778 = vmul.f32 %v1656, 0.0051020407
      %v1779 = vmul.f32 %v1661, 0.0051020407
      %v1780 = vmul.f32 %v1666, 0.0051020407
      %v1781 = vmul.f32 %v1671, 0.0051020407
      %v1782 = vmul.f32 %v1676, 0.0051020407
      %v1783 = vmul.f32 %v1681, 0.0051020407
      %v1784 = vmul.f32 %v1686, 0.0051020407
      %v1785 = vmul.f32 %v1691, 0.0051020407
      %v1786 = vmul.f32 %v1696, 0.0051020407
      %v1787 = vmul.f32 %v1701, 0.0051020407
      %v1788 = vmul.f32 %v1706, 0.0051020407
      %v1789 = vmul.f32 %v1711, 0.0051020407
      %v1790 = vmul.f32 %v1716, 0.0051020407
      %v1791 = vmul.f32 %v1721, 0.0051020407
      %v1792 = vmul.f32 %v1726, 0.0051020407
      %1794 = vset.pattern.permute.xlu0 0
      %1795 = vperm.xlu0 %1794, %v1729
      %v1796 = vpop.permute.xlu0 %1795
      %1799 = vset.pattern.permute.xlu0 0
      %1800 = vperm.xlu0 %1799, %v1730
      %v1801 = vpop.permute.xlu0 %1800
      %1804 = vset.pattern.permute.xlu0 0
      %1805 = vperm.xlu0 %1804, %v1731
      %v1806 = vpop.permute.xlu0 %1805
      %1809 = vset.pattern.permute.xlu0 0
      %1810 = vperm.xlu0 %1809, %v1732
      %v1811 = vpop.permute.xlu0 %1810
      %1814 = vset.pattern.permute.xlu0 0
      %1815 = vperm.xlu0 %1814, %v1733
      %v1816 = vpop.permute.xlu0 %1815
      %1819 = vset.pattern.permute.xlu0 0
      %1820 = vperm.xlu0 %1819, %v1734
      %v1821 = vpop.permute.xlu0 %1820
      %1824 = vset.pattern.permute.xlu0 0
      %1825 = vperm.xlu0 %1824, %v1735
      %v1826 = vpop.permute.xlu0 %1825
      %1829 = vset.pattern.permute.xlu0 0
      %1830 = vperm.xlu0 %1829, %v1736
      %v1831 = vpop.permute.xlu0 %1830
      %1834 = vset.pattern.permute.xlu0 0
      %1835 = vperm.xlu0 %1834, %v1737
      %v1836 = vpop.permute.xlu0 %1835
      %1839 = vset.pattern.permute.xlu0 0
      %1840 = vperm.xlu0 %1839, %v1738
      %v1841 = vpop.permute.xlu0 %1840
      %1844 = vset.pattern.permute.xlu0 0
      %1845 = vperm.xlu0 %1844, %v1739
      %v1846 = vpop.permute.xlu0 %1845
      %1849 = vset.pattern.permute.xlu0 0
      %1850 = vperm.xlu0 %1849, %v1740
      %v1851 = vpop.permute.xlu0 %1850
      %1854 = vset.pattern.permute.xlu0 0
      %1855 = vperm.xlu0 %1854, %v1741
      %v1856 = vpop.permute.xlu0 %1855
      %1859 = vset.pattern.permute.xlu0 0
      %1860 = vperm.xlu0 %1859, %v1742
      %v1861 = vpop.permute.xlu0 %1860
      %1864 = vset.pattern.permute.xlu0 0
      %1865 = vperm.xlu0 %1864, %v1743
      %v1866 = vpop.permute.xlu0 %1865
      %1869 = vset.pattern.permute.xlu0 0
      %1870 = vperm.xlu0 %1869, %v1744
      %v1871 = vpop.permute.xlu0 %1870
      %1874 = vset.pattern.permute.xlu0 0
      %1875 = vperm.xlu0 %1874, %v1745
      %v1876 = vpop.permute.xlu0 %1875
      %1879 = vset.pattern.permute.xlu0 0
      %1880 = vperm.xlu0 %1879, %v1746
      %v1881 = vpop.permute.xlu0 %1880
      %1884 = vset.pattern.permute.xlu0 0
      %1885 = vperm.xlu0 %1884, %v1747
      %v1886 = vpop.permute.xlu0 %1885
      %1889 = vset.pattern.permute.xlu0 0
      %1890 = vperm.xlu0 %1889, %v1748
      %v1891 = vpop.permute.xlu0 %1890
      %1894 = vset.pattern.permute.xlu0 0
      %1895 = vperm.xlu0 %1894, %v1749
      %v1896 = vpop.permute.xlu0 %1895
      %1899 = vset.pattern.permute.xlu0 0
      %1900 = vperm.xlu0 %1899, %v1750
      %v1901 = vpop.permute.xlu0 %1900
      %1904 = vset.pattern.permute.xlu0 0
      %1905 = vperm.xlu0 %1904, %v1751
      %v1906 = vpop.permute.xlu0 %1905
      %1909 = vset.pattern.permute.xlu0 0
      %1910 = vperm.xlu0 %1909, %v1752
      %v1911 = vpop.permute.xlu0 %1910
      %1914 = vset.pattern.permute.xlu0 0
      %1915 = vperm.xlu0 %1914, %v1753
      %v1916 = vpop.permute.xlu0 %1915
      %1919 = vset.pattern.permute.xlu0 0
      %1920 = vperm.xlu0 %1919, %v1754
      %v1921 = vpop.permute.xlu0 %1920
      %1924 = vset.pattern.permute.xlu0 0
      %1925 = vperm.xlu0 %1924, %v1755
      %v1926 = vpop.permute.xlu0 %1925
      %1929 = vset.pattern.permute.xlu0 0
      %1930 = vperm.xlu0 %1929, %v1756
      %v1931 = vpop.permute.xlu0 %1930
      %1934 = vset.pattern.permute.xlu0 0
      %1935 = vperm.xlu0 %1934, %v1757
      %v1936 = vpop.permute.xlu0 %1935
      %1939 = vset.pattern.permute.xlu0 0
      %1940 = vperm.xlu0 %1939, %v1758
      %v1941 = vpop.permute.xlu0 %1940
      %1944 = vset.pattern.permute.xlu0 0
      %1945 = vperm.xlu0 %1944, %v1759
      %v1946 = vpop.permute.xlu0 %1945
      %1949 = vset.pattern.permute.xlu0 0
      %1950 = vperm.xlu0 %1949, %v1760
      %v1951 = vpop.permute.xlu0 %1950
      %1954 = vset.pattern.permute.xlu0 0
      %1955 = vperm.xlu0 %1954, %v1761
      %v1956 = vpop.permute.xlu0 %1955
      %1959 = vset.pattern.permute.xlu0 0
      %1960 = vperm.xlu0 %1959, %v1762
      %v1961 = vpop.permute.xlu0 %1960
      %1964 = vset.pattern.permute.xlu0 0
      %1965 = vperm.xlu0 %1964, %v1763
      %v1966 = vpop.permute.xlu0 %1965
      %1969 = vset.pattern.permute.xlu0 0
      %1970 = vperm.xlu0 %1969, %v1764
      %v1971 = vpop.permute.xlu0 %1970
      %1974 = vset.pattern.permute.xlu0 0
      %1975 = vperm.xlu0 %1974, %v1765
      %v1976 = vpop.permute.xlu0 %1975
      %1979 = vset.pattern.permute.xlu0 0
      %1980 = vperm.xlu0 %1979, %v1766
      %v1981 = vpop.permute.xlu0 %1980
      %1984 = vset.pattern.permute.xlu0 0
      %1985 = vperm.xlu0 %1984, %v1767
      %v1986 = vpop.permute.xlu0 %1985
      %1989 = vset.pattern.permute.xlu0 0
      %1990 = vperm.xlu0 %1989, %v1768
      %v1991 = vpop.permute.xlu0 %1990
      %1994 = vset.pattern.permute.xlu0 0
      %1995 = vperm.xlu0 %1994, %v1769
      %v1996 = vpop.permute.xlu0 %1995
      %1999 = vset.pattern.permute.xlu0 0
      %2000 = vperm.xlu0 %1999, %v1770
      %v2001 = vpop.permute.xlu0 %2000
      %2004 = vset.pattern.permute.xlu0 0
      %2005 = vperm.xlu0 %2004, %v1771
      %v2006 = vpop.permute.xlu0 %2005
      %2009 = vset.pattern.permute.xlu0 0
      %2010 = vperm.xlu0 %2009, %v1772
      %v2011 = vpop.permute.xlu0 %2010
      %2014 = vset.pattern.permute.xlu0 0
      %2015 = vperm.xlu0 %2014, %v1773
      %v2016 = vpop.permute.xlu0 %2015
      %2019 = vset.pattern.permute.xlu0 0
      %2020 = vperm.xlu0 %2019, %v1774
      %v2021 = vpop.permute.xlu0 %2020
      %2024 = vset.pattern.permute.xlu0 0
      %2025 = vperm.xlu0 %2024, %v1775
      %v2026 = vpop.permute.xlu0 %2025
      %2029 = vset.pattern.permute.xlu0 0
      %2030 = vperm.xlu0 %2029, %v1776
      %v2031 = vpop.permute.xlu0 %2030
      %2034 = vset.pattern.permute.xlu0 0
      %2035 = vperm.xlu0 %2034, %v1777
      %v2036 = vpop.permute.xlu0 %2035
      %2039 = vset.pattern.permute.xlu0 0
      %2040 = vperm.xlu0 %2039, %v1778
      %v2041 = vpop.permute.xlu0 %2040
      %2044 = vset.pattern.permute.xlu0 0
      %2045 = vperm.xlu0 %2044, %v1779
      %v2046 = vpop.permute.xlu0 %2045
      %2049 = vset.pattern.permute.xlu0 0
      %2050 = vperm.xlu0 %2049, %v1780
      %v2051 = vpop.permute.xlu0 %2050
      %2054 = vset.pattern.permute.xlu0 0
      %2055 = vperm.xlu0 %2054, %v1781
      %v2056 = vpop.permute.xlu0 %2055
      %2059 = vset.pattern.permute.xlu0 0
      %2060 = vperm.xlu0 %2059, %v1782
      %v2061 = vpop.permute.xlu0 %2060
      %2064 = vset.pattern.permute.xlu0 0
      %2065 = vperm.xlu0 %2064, %v1783
      %v2066 = vpop.permute.xlu0 %2065
      %2069 = vset.pattern.permute.xlu0 0
      %2070 = vperm.xlu0 %2069, %v1784
      %v2071 = vpop.permute.xlu0 %2070
      %2074 = vset.pattern.permute.xlu0 0
      %2075 = vperm.xlu0 %2074, %v1785
      %v2076 = vpop.permute.xlu0 %2075
      %2079 = vset.pattern.permute.xlu0 0
      %2080 = vperm.xlu0 %2079, %v1786
      %v2081 = vpop.permute.xlu0 %2080
      %2084 = vset.pattern.permute.xlu0 0
      %2085 = vperm.xlu0 %2084, %v1787
      %v2086 = vpop.permute.xlu0 %2085
      %2089 = vset.pattern.permute.xlu0 0
      %2090 = vperm.xlu0 %2089, %v1788
      %v2091 = vpop.permute.xlu0 %2090
      %2094 = vset.pattern.permute.xlu0 0
      %2095 = vperm.xlu0 %2094, %v1789
      %v2096 = vpop.permute.xlu0 %2095
      %2099 = vset.pattern.permute.xlu0 0
      %2100 = vperm.xlu0 %2099, %v1790
      %v2101 = vpop.permute.xlu0 %2100
      %2104 = vset.pattern.permute.xlu0 0
      %2105 = vperm.xlu0 %2104, %v1791
      %v2106 = vpop.permute.xlu0 %2105
      %2109 = vset.pattern.permute.xlu0 0
      %2110 = vperm.xlu0 %2109, %v1792
      %v2111 = vpop.permute.xlu0 %2110
      %v2113 = vsub.f32 %v829, %v1796
      %v2114 = vsub.f32 %v831, %v1796
      %v2115 = vsub.f32 %v833, %v1801
      %v2116 = vsub.f32 %v835, %v1801
      %v2117 = vsub.f32 %v839, %v1806
      %v2118 = vsub.f32 %v841, %v1806
      %v2119 = vsub.f32 %v843, %v1811
      %v2120 = vsub.f32 %v845, %v1811
      %v2121 = vsub.f32 %v849, %v1816
      %v2122 = vsub.f32 %v851, %v1816
      %v2123 = vsub.f32 %v853, %v1821
      %v2124 = vsub.f32 %v855, %v1821
      %v2125 = vsub.f32 %v859, %v1826
      %v2126 = vsub.f32 %v861, %v1826
      %v2127 = vsub.f32 %v863, %v1831
      %v2128 = vsub.f32 %v865, %v1831
      %v2129 = vsub.f32 %v869, %v1836
      %v2130 = vsub.f32 %v871, %v1836
      %v2131 = vsub.f32 %v873, %v1841
      %v2132 = vsub.f32 %v875, %v1841
      %v2133 = vsub.f32 %v879, %v1846
      %v2134 = vsub.f32 %v881, %v1846
      %v2135 = vsub.f32 %v883, %v1851
      %v2136 = vsub.f32 %v885, %v1851
      %v2137 = vsub.f32 %v889, %v1856
      %v2138 = vsub.f32 %v891, %v1856
      %v2139 = vsub.f32 %v893, %v1861
      %v2140 = vsub.f32 %v895, %v1861
      %v2141 = vsub.f32 %v899, %v1866
      %v2142 = vsub.f32 %v901, %v1866
      %v2143 = vsub.f32 %v903, %v1871
      %v2144 = vsub.f32 %v905, %v1871
      %v2145 = vsub.f32 %v909, %v1876
      %v2146 = vsub.f32 %v911, %v1876
      %v2147 = vsub.f32 %v913, %v1881
      %v2148 = vsub.f32 %v915, %v1881
      %v2149 = vsub.f32 %v919, %v1886
      %v2150 = vsub.f32 %v921, %v1886
      %v2151 = vsub.f32 %v923, %v1891
      %v2152 = vsub.f32 %v925, %v1891
      %v2153 = vsub.f32 %v929, %v1896
      %v2154 = vsub.f32 %v931, %v1896
      %v2155 = vsub.f32 %v933, %v1901
      %v2156 = vsub.f32 %v935, %v1901
      %v2157 = vsub.f32 %v939, %v1906
      %v2158 = vsub.f32 %v941, %v1906
      %v2159 = vsub.f32 %v943, %v1911
      %v2160 = vsub.f32 %v945, %v1911
      %v2161 = vsub.f32 %v949, %v1916
      %v2162 = vsub.f32 %v951, %v1916
      %v2163 = vsub.f32 %v953, %v1921
      %v2164 = vsub.f32 %v955, %v1921
      %v2165 = vsub.f32 %v959, %v1926
      %v2166 = vsub.f32 %v961, %v1926
      %v2167 = vsub.f32 %v963, %v1931
      %v2168 = vsub.f32 %v965, %v1931
      %v2169 = vsub.f32 %v969, %v1936
      %v2170 = vsub.f32 %v971, %v1936
      %v2171 = vsub.f32 %v973, %v1941
      %v2172 = vsub.f32 %v975, %v1941
      %v2173 = vsub.f32 %v979, %v1946
      %v2174 = vsub.f32 %v981, %v1946
      %v2175 = vsub.f32 %v983, %v1951
      %v2176 = vsub.f32 %v985, %v1951
      %v2177 = vsub.f32 %v989, %v1956
      %v2178 = vsub.f32 %v991, %v1956
      %v2179 = vsub.f32 %v993, %v1961
      %v2180 = vsub.f32 %v995, %v1961
      %v2181 = vsub.f32 %v999, %v1966
      %v2182 = vsub.f32 %v1001, %v1966
      %v2183 = vsub.f32 %v1003, %v1971
      %v2184 = vsub.f32 %v1005, %v1971
      %v2185 = vsub.f32 %v1009, %v1976
      %v2186 = vsub.f32 %v1011, %v1976
      %v2187 = vsub.f32 %v1013, %v1981
      %v2188 = vsub.f32 %v1015, %v1981
      %v2189 = vsub.f32 %v1019, %v1986
      %v2190 = vsub.f32 %v1021, %v1986
      %v2191 = vsub.f32 %v1023, %v1991
      %v2192 = vsub.f32 %v1025, %v1991
      %v2193 = vsub.f32 %v1029, %v1996
      %v2194 = vsub.f32 %v1031, %v1996
      %v2195 = vsub.f32 %v1033, %v2001
      %v2196 = vsub.f32 %v1035, %v2001
      %v2197 = vsub.f32 %v1039, %v2006
      %v2198 = vsub.f32 %v1041, %v2006
      %v2199 = vsub.f32 %v1043, %v2011
      %v2200 = vsub.f32 %v1045, %v2011
      %v2201 = vsub.f32 %v1049, %v2016
      %v2202 = vsub.f32 %v1051, %v2016
      %v2203 = vsub.f32 %v1053, %v2021
      %v2204 = vsub.f32 %v1055, %v2021
      %v2205 = vsub.f32 %v1059, %v2026
      %v2206 = vsub.f32 %v1061, %v2026
      %v2207 = vsub.f32 %v1063, %v2031
      %v2208 = vsub.f32 %v1065, %v2031
      %v2209 = vsub.f32 %v1069, %v2036
      %v2210 = vsub.f32 %v1071, %v2036
      %v2211 = vsub.f32 %v1073, %v2041
      %v2212 = vsub.f32 %v1075, %v2041
      %v2213 = vsub.f32 %v1079, %v2046
      %v2214 = vsub.f32 %v1081, %v2046
      %v2215 = vsub.f32 %v1083, %v2051
      %v2216 = vsub.f32 %v1085, %v2051
      %v2217 = vsub.f32 %v1089, %v2056
      %v2218 = vsub.f32 %v1091, %v2056
      %v2219 = vsub.f32 %v1093, %v2061
      %v2220 = vsub.f32 %v1095, %v2061
      %v2221 = vsub.f32 %v1099, %v2066
      %v2222 = vsub.f32 %v1101, %v2066
      %v2223 = vsub.f32 %v1103, %v2071
      %v2224 = vsub.f32 %v1105, %v2071
      %v2225 = vsub.f32 %v1109, %v2076
      %v2226 = vsub.f32 %v1111, %v2076
      %v2227 = vsub.f32 %v1113, %v2081
      %v2228 = vsub.f32 %v1115, %v2081
      %v2229 = vsub.f32 %v1119, %v2086
      %v2230 = vsub.f32 %v1121, %v2086
      %v2231 = vsub.f32 %v1123, %v2091
      %v2232 = vsub.f32 %v1125, %v2091
      %v2233 = vsub.f32 %v1129, %v2096
      %v2234 = vsub.f32 %v1131, %v2096
      %v2235 = vsub.f32 %v1133, %v2101
      %v2236 = vsub.f32 %v1135, %v2101
      %v2237 = vsub.f32 %v1139, %v2106
      %v2238 = vsub.f32 %v1141, %v2106
      %v2239 = vsub.f32 %v1143, %v2111
      %v2240 = vsub.f32 %v1145, %v2111
      %v2241 = vmul.f32 %v2113, %v2113
      %v2242 = vmul.f32 %v2114, %v2114
      %v2243 = vmul.f32 %v2115, %v2115
      %v2244 = vmul.f32 %v2116, %v2116
      %v2245 = vmul.f32 %v2117, %v2117
      %v2246 = vmul.f32 %v2118, %v2118
      %v2247 = vmul.f32 %v2119, %v2119
      %v2248 = vmul.f32 %v2120, %v2120
      %v2249 = vmul.f32 %v2121, %v2121
      %v2250 = vmul.f32 %v2122, %v2122
      %v2251 = vmul.f32 %v2123, %v2123
      %v2252 = vmul.f32 %v2124, %v2124
      %v2253 = vmul.f32 %v2125, %v2125
      %v2254 = vmul.f32 %v2126, %v2126
      %v2255 = vmul.f32 %v2127, %v2127
      %v2256 = vmul.f32 %v2128, %v2128
      %v2257 = vmul.f32 %v2129, %v2129
      %v2258 = vmul.f32 %v2130, %v2130
      %v2259 = vmul.f32 %v2131, %v2131
      %v2260 = vmul.f32 %v2132, %v2132
      %v2261 = vmul.f32 %v2133, %v2133
      %v2262 = vmul.f32 %v2134, %v2134
      %v2263 = vmul.f32 %v2135, %v2135
      %v2264 = vmul.f32 %v2136, %v2136
      %v2265 = vmul.f32 %v2137, %v2137
      %v2266 = vmul.f32 %v2138, %v2138
      %v2267 = vmul.f32 %v2139, %v2139
      %v2268 = vmul.f32 %v2140, %v2140
      %v2269 = vmul.f32 %v2141, %v2141
      %v2270 = vmul.f32 %v2142, %v2142
      %v2271 = vmul.f32 %v2143, %v2143
      %v2272 = vmul.f32 %v2144, %v2144
      %v2273 = vmul.f32 %v2145, %v2145
      %v2274 = vmul.f32 %v2146, %v2146
      %v2275 = vmul.f32 %v2147, %v2147
      %v2276 = vmul.f32 %v2148, %v2148
      %v2277 = vmul.f32 %v2149, %v2149
      %v2278 = vmul.f32 %v2150, %v2150
      %v2279 = vmul.f32 %v2151, %v2151
      %v2280 = vmul.f32 %v2152, %v2152
      %v2281 = vmul.f32 %v2153, %v2153
      %v2282 = vmul.f32 %v2154, %v2154
      %v2283 = vmul.f32 %v2155, %v2155
      %v2284 = vmul.f32 %v2156, %v2156
      %v2285 = vmul.f32 %v2157, %v2157
      %v2286 = vmul.f32 %v2158, %v2158
      %v2287 = vmul.f32 %v2159, %v2159
      %v2288 = vmul.f32 %v2160, %v2160
      %v2289 = vmul.f32 %v2161, %v2161
      %v2290 = vmul.f32 %v2162, %v2162
      %v2291 = vmul.f32 %v2163, %v2163
      %v2292 = vmul.f32 %v2164, %v2164
      %v2293 = vmul.f32 %v2165, %v2165
      %v2294 = vmul.f32 %v2166, %v2166
      %v2295 = vmul.f32 %v2167, %v2167
      %v2296 = vmul.f32 %v2168, %v2168
      %v2297 = vmul.f32 %v2169, %v2169
      %v2298 = vmul.f32 %v2170, %v2170
      %v2299 = vmul.f32 %v2171, %v2171
      %v2300 = vmul.f32 %v2172, %v2172
      %v2301 = vmul.f32 %v2173, %v2173
      %v2302 = vmul.f32 %v2174, %v2174
      %v2303 = vmul.f32 %v2175, %v2175
      %v2304 = vmul.f32 %v2176, %v2176
      %v2305 = vmul.f32 %v2177, %v2177
      %v2306 = vmul.f32 %v2178, %v2178
      %v2307 = vmul.f32 %v2179, %v2179
      %v2308 = vmul.f32 %v2180, %v2180
      %v2309 = vmul.f32 %v2181, %v2181
      %v2310 = vmul.f32 %v2182, %v2182
      %v2311 = vmul.f32 %v2183, %v2183
      %v2312 = vmul.f32 %v2184, %v2184
      %v2313 = vmul.f32 %v2185, %v2185
      %v2314 = vmul.f32 %v2186, %v2186
      %v2315 = vmul.f32 %v2187, %v2187
      %v2316 = vmul.f32 %v2188, %v2188
      %v2317 = vmul.f32 %v2189, %v2189
      %v2318 = vmul.f32 %v2190, %v2190
      %v2319 = vmul.f32 %v2191, %v2191
      %v2320 = vmul.f32 %v2192, %v2192
      %v2321 = vmul.f32 %v2193, %v2193
      %v2322 = vmul.f32 %v2194, %v2194
      %v2323 = vmul.f32 %v2195, %v2195
      %v2324 = vmul.f32 %v2196, %v2196
      %v2325 = vmul.f32 %v2197, %v2197
      %v2326 = vmul.f32 %v2198, %v2198
      %v2327 = vmul.f32 %v2199, %v2199
      %v2328 = vmul.f32 %v2200, %v2200
      %v2329 = vmul.f32 %v2201, %v2201
      %v2330 = vmul.f32 %v2202, %v2202
      %v2331 = vmul.f32 %v2203, %v2203
      %v2332 = vmul.f32 %v2204, %v2204
      %v2333 = vmul.f32 %v2205, %v2205
      %v2334 = vmul.f32 %v2206, %v2206
      %v2335 = vmul.f32 %v2207, %v2207
      %v2336 = vmul.f32 %v2208, %v2208
      %v2337 = vmul.f32 %v2209, %v2209
      %v2338 = vmul.f32 %v2210, %v2210
      %v2339 = vmul.f32 %v2211, %v2211
      %v2340 = vmul.f32 %v2212, %v2212
      %v2341 = vmul.f32 %v2213, %v2213
      %v2342 = vmul.f32 %v2214, %v2214
      %v2343 = vmul.f32 %v2215, %v2215
      %v2344 = vmul.f32 %v2216, %v2216
      %v2345 = vmul.f32 %v2217, %v2217
      %v2346 = vmul.f32 %v2218, %v2218
      %v2347 = vmul.f32 %v2219, %v2219
      %v2348 = vmul.f32 %v2220, %v2220
      %v2349 = vmul.f32 %v2221, %v2221
      %v2350 = vmul.f32 %v2222, %v2222
      %v2351 = vmul.f32 %v2223, %v2223
      %v2352 = vmul.f32 %v2224, %v2224
      %v2353 = vmul.f32 %v2225, %v2225
      %v2354 = vmul.f32 %v2226, %v2226
      %v2355 = vmul.f32 %v2227, %v2227
      %v2356 = vmul.f32 %v2228, %v2228
      %v2357 = vmul.f32 %v2229, %v2229
      %v2358 = vmul.f32 %v2230, %v2230
      %v2359 = vmul.f32 %v2231, %v2231
      %v2360 = vmul.f32 %v2232, %v2232
      %v2361 = vmul.f32 %v2233, %v2233
      %v2362 = vmul.f32 %v2234, %v2234
      %v2363 = vmul.f32 %v2235, %v2235
      %v2364 = vmul.f32 %v2236, %v2236
      %v2365 = vmul.f32 %v2237, %v2237
      %v2366 = vmul.f32 %v2238, %v2238
      %v2367 = vmul.f32 %v2239, %v2239
      %v2368 = vmul.f32 %v2240, %v2240
      %v2370 = vsel %vm1147, %v2242, 0
      %v2373 = vsel %vm1147, %v2244, 0
      %v2376 = vsel %vm1147, %v2246, 0
      %v2379 = vsel %vm1147, %v2248, 0
      %v2382 = vsel %vm1147, %v2250, 0
      %v2385 = vsel %vm1147, %v2252, 0
      %v2388 = vsel %vm1147, %v2254, 0
      %v2391 = vsel %vm1147, %v2256, 0
      %v2394 = vsel %vm1147, %v2258, 0
      %v2397 = vsel %vm1147, %v2260, 0
      %v2400 = vsel %vm1147, %v2262, 0
      %v2403 = vsel %vm1147, %v2264, 0
      %v2406 = vsel %vm1147, %v2266, 0
      %v2409 = vsel %vm1147, %v2268, 0
      %v2412 = vsel %vm1147, %v2270, 0
      %v2415 = vsel %vm1147, %v2272, 0
      %v2418 = vsel %vm1147, %v2274, 0
      %v2421 = vsel %vm1147, %v2276, 0
      %v2424 = vsel %vm1147, %v2278, 0
      %v2427 = vsel %vm1147, %v2280, 0
      %v2430 = vsel %vm1147, %v2282, 0
      %v2433 = vsel %vm1147, %v2284, 0
      %v2436 = vsel %vm1147, %v2286, 0
      %v2439 = vsel %vm1147, %v2288, 0
      %v2442 = vsel %vm1147, %v2290, 0
      %v2445 = vsel %vm1147, %v2292, 0
      %v2448 = vsel %vm1147, %v2294, 0
      %v2451 = vsel %vm1147, %v2296, 0
      %v2454 = vsel %vm1147, %v2298, 0
      %v2457 = vsel %vm1147, %v2300, 0
      %v2460 = vsel %vm1147, %v2302, 0
      %v2463 = vsel %vm1147, %v2304, 0
      %v2466 = vsel %vm1147, %v2306, 0
      %v2469 = vsel %vm1147, %v2308, 0
      %v2472 = vsel %vm1147, %v2310, 0
      %v2475 = vsel %vm1147, %v2312, 0
      %v2478 = vsel %vm1147, %v2314, 0
      %v2481 = vsel %vm1147, %v2316, 0
      %v2484 = vsel %vm1147, %v2318, 0
      %v2487 = vsel %vm1147, %v2320, 0
      %v2490 = vsel %vm1147, %v2322, 0
      %v2493 = vsel %vm1147, %v2324, 0
      %v2496 = vsel %vm1147, %v2326, 0
      %v2499 = vsel %vm1147, %v2328, 0
      %v2502 = vsel %vm1147, %v2330, 0
      %v2505 = vsel %vm1147, %v2332, 0
      %v2508 = vsel %vm1147, %v2334, 0
      %v2511 = vsel %vm1147, %v2336, 0
      %v2514 = vsel %vm1147, %v2338, 0
      %v2517 = vsel %vm1147, %v2340, 0
      %v2520 = vsel %vm1147, %v2342, 0
      %v2523 = vsel %vm1147, %v2344, 0
      %v2526 = vsel %vm1147, %v2346, 0
      %v2529 = vsel %vm1147, %v2348, 0
      %v2532 = vsel %vm1147, %v2350, 0
      %v2535 = vsel %vm1147, %v2352, 0
      %v2538 = vsel %vm1147, %v2354, 0
      %v2541 = vsel %vm1147, %v2356, 0
      %v2544 = vsel %vm1147, %v2358, 0
      %v2547 = vsel %vm1147, %v2360, 0
      %v2550 = vsel %vm1147, %v2362, 0
      %v2553 = vsel %vm1147, %v2364, 0
      %v2556 = vsel %vm1147, %v2366, 0
      %v2559 = vsel %vm1147, %v2368, 0
      %2561 = vmatprep.subr.mxu0 0.0
      %2562 = vmatpush1.msra.mxu0 1.0
      %2563 = vmatprep.subr.mxu0 0.0
      %2564 = vmatpush1.msra.mxu0 1.0
      %2565 = vmatprep.subr.mxu0 0.0
      %2566 = vmatpush1.msra.mxu0 1.0
      %2567 = vmatprep.subr.mxu0 0.0
      %2568 = vmatpush1.msra.mxu0 1.0
      %2569 = vmatprep.subr.mxu0 0.0
      %2570 = vmatpush1.msra.mxu0 1.0
      %2571 = vmatprep.subr.mxu0 0.0
      %2572 = vmatpush1.msra.mxu0 1.0
      %2573 = vmatprep.subr.mxu0 0.0
      %2574 = vmatpush1.msra.mxu0 1.0
      %2575 = vmatprep.subr.mxu0 0.0
      %2576 = vmatpush1.msra.mxu0 1.0
      %2577 = vmatprep.subr.mxu0 0.0
      %2578 = vmatpush1.msra.mxu0 1.0
      %2579 = vmatprep.subr.mxu0 0.0
      %2580 = vmatpush1.msra.mxu0 1.0
      %2581 = vmatprep.subr.mxu0 0.0
      %2582 = vmatpush1.msra.mxu0 1.0
      %2583 = vmatprep.subr.mxu0 0.0
      %2584 = vmatpush1.msra.mxu0 1.0
      %2585 = vmatprep.subr.mxu0 0.0
      %2586 = vmatpush1.msra.mxu0 1.0
      %2587 = vmatprep.subr.mxu0 0.0
      %2588 = vmatpush1.msra.mxu0 1.0
      %2589 = vmatprep.subr.mxu0 0.0
      %2590 = vmatpush1.msra.mxu0 1.0
      %2591 = vmatprep.subr.mxu0 0.0
      %2592 = vmatpush1.msra.mxu0 1.0
      %2593 = vmatprep.subr.mxu0 0.0
      %2594 = vmatpush1.msra.mxu0 1.0
      %2595 = vmatprep.subr.mxu0 0.0
      %2596 = vmatpush1.msra.mxu0 1.0
      %2597 = vmatprep.subr.mxu0 0.0
      %2598 = vmatpush1.msra.mxu0 1.0
      %2599 = vmatprep.subr.mxu0 0.0
      %2600 = vmatpush1.msra.mxu0 1.0
      %2601 = vmatprep.subr.mxu0 0.0
      %2602 = vmatpush1.msra.mxu0 1.0
      %2603 = vmatprep.subr.mxu0 0.0
      %2604 = vmatpush1.msra.mxu0 1.0
      %2605 = vmatprep.subr.mxu0 0.0
      %2606 = vmatpush1.msra.mxu0 1.0
      %2607 = vmatprep.subr.mxu0 0.0
      %2608 = vmatpush1.msra.mxu0 1.0
      %2609 = vmatprep.subr.mxu0 0.0
      %2610 = vmatpush1.msra.mxu0 %v1342
      %2611 = vmatprep.subr.mxu0 0.0
      %2612 = vmatpush1.msra.mxu0 0.0
      %2613 = vmatprep.subr.mxu0 0.0
      %2614 = vmatpush1.msra.mxu0 0.0
      %2615 = vmatprep.subr.mxu0 0.0
      %2616 = vmatpush1.msra.mxu0 0.0
      %2617 = vmatprep.subr.mxu0 0.0
      %2618 = vmatpush1.msra.mxu0 0.0
      %2619 = vmatprep.subr.mxu0 0.0
      %2620 = vmatpush1.msra.mxu0 0.0
      %2621 = vmatprep.subr.mxu0 0.0
      %2622 = vmatpush1.msra.mxu0 0.0
      %2623 = vmatprep.subr.mxu0 0.0
      %2624 = vmatpush1.msra.mxu0 0.0
      %2625 = vmatprep.mubr.f32.mxu0 %v2370
      %2626 = vmatmul.mubr.f32.gmra.mrb[0].mxu0 %v2241
      %v2627 = vpop.f32.mrb[0].mxu0
      %v2628 = vadd.f32 0.0, %v2627
      %v2629 = vpop.f32.mrb[0].mxu0
      %2630 = vmatprep.mubr.f32.mxu0 %v2373
      %2631 = vmatmul.mubr.f32.gmra.mrb[0].mxu0 %v2243
      %v2632 = vpop.f32.mrb[0].mxu0
      %v2633 = vadd.f32 0.0, %v2632
      %v2634 = vpop.f32.mrb[0].mxu0
      %2635 = vmatprep.mubr.f32.mxu0 %v2376
      %2636 = vmatmul.mubr.f32.gmra.mrb[0].mxu0 %v2245
      %v2637 = vpop.f32.mrb[0].mxu0
      %v2638 = vadd.f32 0.0, %v2637
      %v2639 = vpop.f32.mrb[0].mxu0
      %2640 = vmatprep.mubr.f32.mxu0 %v2379
      %2641 = vmatmul.mubr.f32.gmra.mrb[0].mxu0 %v2247
      %v2642 = vpop.f32.mrb[0].mxu0
      %v2643 = vadd.f32 0.0, %v2642
      %v2644 = vpop.f32.mrb[0].mxu0
      %2645 = vmatprep.mubr.f32.mxu0 %v2382
      %2646 = vmatmul.mubr.f32.gmra.mrb[0].mxu0 %v2249
      %v2647 = vpop.f32.mrb[0].mxu0
      %v2648 = vadd.f32 0.0, %v2647
      %v2649 = vpop.f32.mrb[0].mxu0
      %2650 = vmatprep.mubr.f32.mxu0 %v2385
      %2651 = vmatmul.mubr.f32.gmra.mrb[0].mxu0 %v2251
      %v2652 = vpop.f32.mrb[0].mxu0
      %v2653 = vadd.f32 0.0, %v2652
      %v2654 = vpop.f32.mrb[0].mxu0
      %2655 = vmatprep.mubr.f32.mxu0 %v2388
      %2656 = vmatmul.mubr.f32.gmra.mrb[0].mxu0 %v2253
      %v2657 = vpop.f32.mrb[0].mxu0
      %v2658 = vadd.f32 0.0, %v2657
      %v2659 = vpop.f32.mrb[0].mxu0
      %2660 = vmatprep.mubr.f32.mxu0 %v2391
      %2661 = vmatmul.mubr.f32.gmra.mrb[0].mxu0 %v2255
      %v2662 = vpop.f32.mrb[0].mxu0
      %v2663 = vadd.f32 0.0, %v2662
      %v2664 = vpop.f32.mrb[0].mxu0
      %2665 = vmatprep.mubr.f32.mxu0 %v2394
      %2666 = vmatmul.mubr.f32.gmra.mrb[0].mxu0 %v2257
      %v2667 = vpop.f32.mrb[0].mxu0
      %v2668 = vadd.f32 0.0, %v2667
      %v2669 = vpop.f32.mrb[0].mxu0
      %2670 = vmatprep.mubr.f32.mxu0 %v2397
      %2671 = vmatmul.mubr.f32.gmra.mrb[0].mxu0 %v2259
      %v2672 = vpop.f32.mrb[0].mxu0
      %v2673 = vadd.f32 0.0, %v2672
      %v2674 = vpop.f32.mrb[0].mxu0
      %2675 = vmatprep.mubr.f32.mxu0 %v2400
      %2676 = vmatmul.mubr.f32.gmra.mrb[0].mxu0 %v2261
      %v2677 = vpop.f32.mrb[0].mxu0
      %v2678 = vadd.f32 0.0, %v2677
      %v2679 = vpop.f32.mrb[0].mxu0
      %2680 = vmatprep.mubr.f32.mxu0 %v2403
      %2681 = vmatmul.mubr.f32.gmra.mrb[0].mxu0 %v2263
      %v2682 = vpop.f32.mrb[0].mxu0
      %v2683 = vadd.f32 0.0, %v2682
      %v2684 = vpop.f32.mrb[0].mxu0
      %2685 = vmatprep.mubr.f32.mxu0 %v2406
      %2686 = vmatmul.mubr.f32.gmra.mrb[0].mxu0 %v2265
      %v2687 = vpop.f32.mrb[0].mxu0
      %v2688 = vadd.f32 0.0, %v2687
      %v2689 = vpop.f32.mrb[0].mxu0
      %2690 = vmatprep.mubr.f32.mxu0 %v2409
      %2691 = vmatmul.mubr.f32.gmra.mrb[0].mxu0 %v2267
      %v2692 = vpop.f32.mrb[0].mxu0
      %v2693 = vadd.f32 0.0, %v2692
      %v2694 = vpop.f32.mrb[0].mxu0
      %2695 = vmatprep.mubr.f32.mxu0 %v2412
      %2696 = vmatmul.mubr.f32.gmra.mrb[0].mxu0 %v2269
      %v2697 = vpop.f32.mrb[0].mxu0
      %v2698 = vadd.f32 0.0, %v2697
      %v2699 = vpop.f32.mrb[0].mxu0
      %2700 = vmatprep.mubr.f32.mxu0 %v2415
      %2701 = vmatmul.mubr.f32.gmra.mrb[0].mxu0 %v2271
      %v2702 = vpop.f32.mrb[0].mxu0
      %v2703 = vadd.f32 0.0, %v2702
      %v2704 = vpop.f32.mrb[0].mxu0
      %2705 = vmatprep.mubr.f32.mxu0 %v2418
      %2706 = vmatmul.mubr.f32.gmra.mrb[0].mxu0 %v2273
      %v2707 = vpop.f32.mrb[0].mxu0
      %v2708 = vadd.f32 0.0, %v2707
      %v2709 = vpop.f32.mrb[0].mxu0
      %2710 = vmatprep.mubr.f32.mxu0 %v2421
      %2711 = vmatmul.mubr.f32.gmra.mrb[0].mxu0 %v2275
      %v2712 = vpop.f32.mrb[0].mxu0
      %v2713 = vadd.f32 0.0, %v2712
      %v2714 = vpop.f32.mrb[0].mxu0
      %2715 = vmatprep.mubr.f32.mxu0 %v2424
      %2716 = vmatmul.mubr.f32.gmra.mrb[0].mxu0 %v2277
      %v2717 = vpop.f32.mrb[0].mxu0
      %v2718 = vadd.f32 0.0, %v2717
      %v2719 = vpop.f32.mrb[0].mxu0
      %2720 = vmatprep.mubr.f32.mxu0 %v2427
      %2721 = vmatmul.mubr.f32.gmra.mrb[0].mxu0 %v2279
      %v2722 = vpop.f32.mrb[0].mxu0
      %v2723 = vadd.f32 0.0, %v2722
      %v2724 = vpop.f32.mrb[0].mxu0
      %2725 = vmatprep.mubr.f32.mxu0 %v2430
      %2726 = vmatmul.mubr.f32.gmra.mrb[0].mxu0 %v2281
      %v2727 = vpop.f32.mrb[0].mxu0
      %v2728 = vadd.f32 0.0, %v2727
      %v2729 = vpop.f32.mrb[0].mxu0
      %2730 = vmatprep.mubr.f32.mxu0 %v2433
      %2731 = vmatmul.mubr.f32.gmra.mrb[0].mxu0 %v2283
      %v2732 = vpop.f32.mrb[0].mxu0
      %v2733 = vadd.f32 0.0, %v2732
      %v2734 = vpop.f32.mrb[0].mxu0
      %2735 = vmatprep.mubr.f32.mxu0 %v2436
      %2736 = vmatmul.mubr.f32.gmra.mrb[0].mxu0 %v2285
      %v2737 = vpop.f32.mrb[0].mxu0
      %v2738 = vadd.f32 0.0, %v2737
      %v2739 = vpop.f32.mrb[0].mxu0
      %2740 = vmatprep.mubr.f32.mxu0 %v2439
      %2741 = vmatmul.mubr.f32.gmra.mrb[0].mxu0 %v2287
      %v2742 = vpop.f32.mrb[0].mxu0
      %v2743 = vadd.f32 0.0, %v2742
      %v2744 = vpop.f32.mrb[0].mxu0
      %2745 = vmatprep.mubr.f32.mxu0 %v2442
      %2746 = vmatmul.mubr.f32.gmra.mrb[0].mxu0 %v2289
      %v2747 = vpop.f32.mrb[0].mxu0
      %v2748 = vadd.f32 0.0, %v2747
      %v2749 = vpop.f32.mrb[0].mxu0
      %2750 = vmatprep.mubr.f32.mxu0 %v2445
      %2751 = vmatmul.mubr.f32.gmra.mrb[0].mxu0 %v2291
      %v2752 = vpop.f32.mrb[0].mxu0
      %v2753 = vadd.f32 0.0, %v2752
      %v2754 = vpop.f32.mrb[0].mxu0
      %2755 = vmatprep.mubr.f32.mxu0 %v2448
      %2756 = vmatmul.mubr.f32.gmra.mrb[0].mxu0 %v2293
      %v2757 = vpop.f32.mrb[0].mxu0
      %v2758 = vadd.f32 0.0, %v2757
      %v2759 = vpop.f32.mrb[0].mxu0
      %2760 = vmatprep.mubr.f32.mxu0 %v2451
      %2761 = vmatmul.mubr.f32.gmra.mrb[0].mxu0 %v2295
      %v2762 = vpop.f32.mrb[0].mxu0
      %v2763 = vadd.f32 0.0, %v2762
      %v2764 = vpop.f32.mrb[0].mxu0
      %2765 = vmatprep.mubr.f32.mxu0 %v2454
      %2766 = vmatmul.mubr.f32.gmra.mrb[0].mxu0 %v2297
      %v2767 = vpop.f32.mrb[0].mxu0
      %v2768 = vadd.f32 0.0, %v2767
      %v2769 = vpop.f32.mrb[0].mxu0
      %2770 = vmatprep.mubr.f32.mxu0 %v2457
      %2771 = vmatmul.mubr.f32.gmra.mrb[0].mxu0 %v2299
      %v2772 = vpop.f32.mrb[0].mxu0
      %v2773 = vadd.f32 0.0, %v2772
      %v2774 = vpop.f32.mrb[0].mxu0
      %2775 = vmatprep.mubr.f32.mxu0 %v2460
      %2776 = vmatmul.mubr.f32.gmra.mrb[0].mxu0 %v2301
      %v2777 = vpop.f32.mrb[0].mxu0
      %v2778 = vadd.f32 0.0, %v2777
      %v2779 = vpop.f32.mrb[0].mxu0
      %2780 = vmatprep.mubr.f32.mxu0 %v2463
      %2781 = vmatmul.mubr.f32.gmra.mrb[0].mxu0 %v2303
      %v2782 = vpop.f32.mrb[0].mxu0
      %v2783 = vadd.f32 0.0, %v2782
      %v2784 = vpop.f32.mrb[0].mxu0
      %2785 = vmatprep.mubr.f32.mxu0 %v2466
      %2786 = vmatmul.mubr.f32.gmra.mrb[0].mxu0 %v2305
      %v2787 = vpop.f32.mrb[0].mxu0
      %v2788 = vadd.f32 0.0, %v2787
      %v2789 = vpop.f32.mrb[0].mxu0
      %2790 = vmatprep.mubr.f32.mxu0 %v2469
      %2791 = vmatmul.mubr.f32.gmra.mrb[0].mxu0 %v2307
      %v2792 = vpop.f32.mrb[0].mxu0
      %v2793 = vadd.f32 0.0, %v2792
      %v2794 = vpop.f32.mrb[0].mxu0
      %2795 = vmatprep.mubr.f32.mxu0 %v2472
      %2796 = vmatmul.mubr.f32.gmra.mrb[0].mxu0 %v2309
      %v2797 = vpop.f32.mrb[0].mxu0
      %v2798 = vadd.f32 0.0, %v2797
      %v2799 = vpop.f32.mrb[0].mxu0
      %2800 = vmatprep.mubr.f32.mxu0 %v2475
      %2801 = vmatmul.mubr.f32.gmra.mrb[0].mxu0 %v2311
      %v2802 = vpop.f32.mrb[0].mxu0
      %v2803 = vadd.f32 0.0, %v2802
      %v2804 = vpop.f32.mrb[0].mxu0
      %2805 = vmatprep.mubr.f32.mxu0 %v2478
      %2806 = vmatmul.mubr.f32.gmra.mrb[0].mxu0 %v2313
      %v2807 = vpop.f32.mrb[0].mxu0
      %v2808 = vadd.f32 0.0, %v2807
      %v2809 = vpop.f32.mrb[0].mxu0
      %2810 = vmatprep.mubr.f32.mxu0 %v2481
      %2811 = vmatmul.mubr.f32.gmra.mrb[0].mxu0 %v2315
      %v2812 = vpop.f32.mrb[0].mxu0
      %v2813 = vadd.f32 0.0, %v2812
      %v2814 = vpop.f32.mrb[0].mxu0
      %2815 = vmatprep.mubr.f32.mxu0 %v2484
      %2816 = vmatmul.mubr.f32.gmra.mrb[0].mxu0 %v2317
      %v2817 = vpop.f32.mrb[0].mxu0
      %v2818 = vadd.f32 0.0, %v2817
      %v2819 = vpop.f32.mrb[0].mxu0
      %2820 = vmatprep.mubr.f32.mxu0 %v2487
      %2821 = vmatmul.mubr.f32.gmra.mrb[0].mxu0 %v2319
      %v2822 = vpop.f32.mrb[0].mxu0
      %v2823 = vadd.f32 0.0, %v2822
      %v2824 = vpop.f32.mrb[0].mxu0
      %2825 = vmatprep.mubr.f32.mxu0 %v2490
      %2826 = vmatmul.mubr.f32.gmra.mrb[0].mxu0 %v2321
      %v2827 = vpop.f32.mrb[0].mxu0
      %v2828 = vadd.f32 0.0, %v2827
      %v2829 = vpop.f32.mrb[0].mxu0
      %2830 = vmatprep.mubr.f32.mxu0 %v2493
      %2831 = vmatmul.mubr.f32.gmra.mrb[0].mxu0 %v2323
      %v2832 = vpop.f32.mrb[0].mxu0
      %v2833 = vadd.f32 0.0, %v2832
      %v2834 = vpop.f32.mrb[0].mxu0
      %2835 = vmatprep.mubr.f32.mxu0 %v2496
      %2836 = vmatmul.mubr.f32.gmra.mrb[0].mxu0 %v2325
      %v2837 = vpop.f32.mrb[0].mxu0
      %v2838 = vadd.f32 0.0, %v2837
      %v2839 = vpop.f32.mrb[0].mxu0
      %2840 = vmatprep.mubr.f32.mxu0 %v2499
      %2841 = vmatmul.mubr.f32.gmra.mrb[0].mxu0 %v2327
      %v2842 = vpop.f32.mrb[0].mxu0
      %v2843 = vadd.f32 0.0, %v2842
      %v2844 = vpop.f32.mrb[0].mxu0
      %2845 = vmatprep.mubr.f32.mxu0 %v2502
      %2846 = vmatmul.mubr.f32.gmra.mrb[0].mxu0 %v2329
      %v2847 = vpop.f32.mrb[0].mxu0
      %v2848 = vadd.f32 0.0, %v2847
      %v2849 = vpop.f32.mrb[0].mxu0
      %2850 = vmatprep.mubr.f32.mxu0 %v2505
      %2851 = vmatmul.mubr.f32.gmra.mrb[0].mxu0 %v2331
      %v2852 = vpop.f32.mrb[0].mxu0
      %v2853 = vadd.f32 0.0, %v2852
      %v2854 = vpop.f32.mrb[0].mxu0
      %2855 = vmatprep.mubr.f32.mxu0 %v2508
      %2856 = vmatmul.mubr.f32.gmra.mrb[0].mxu0 %v2333
      %v2857 = vpop.f32.mrb[0].mxu0
      %v2858 = vadd.f32 0.0, %v2857
      %v2859 = vpop.f32.mrb[0].mxu0
      %2860 = vmatprep.mubr.f32.mxu0 %v2511
      %2861 = vmatmul.mubr.f32.gmra.mrb[0].mxu0 %v2335
      %v2862 = vpop.f32.mrb[0].mxu0
      %v2863 = vadd.f32 0.0, %v2862
      %v2864 = vpop.f32.mrb[0].mxu0
      %2865 = vmatprep.mubr.f32.mxu0 %v2514
      %2866 = vmatmul.mubr.f32.gmra.mrb[0].mxu0 %v2337
      %v2867 = vpop.f32.mrb[0].mxu0
      %v2868 = vadd.f32 0.0, %v2867
      %v2869 = vpop.f32.mrb[0].mxu0
      %2870 = vmatprep.mubr.f32.mxu0 %v2517
      %2871 = vmatmul.mubr.f32.gmra.mrb[0].mxu0 %v2339
      %v2872 = vpop.f32.mrb[0].mxu0
      %v2873 = vadd.f32 0.0, %v2872
      %v2874 = vpop.f32.mrb[0].mxu0
      %2875 = vmatprep.mubr.f32.mxu0 %v2520
      %2876 = vmatmul.mubr.f32.gmra.mrb[0].mxu0 %v2341
      %v2877 = vpop.f32.mrb[0].mxu0
      %v2878 = vadd.f32 0.0, %v2877
      %v2879 = vpop.f32.mrb[0].mxu0
      %2880 = vmatprep.mubr.f32.mxu0 %v2523
      %2881 = vmatmul.mubr.f32.gmra.mrb[0].mxu0 %v2343
      %v2882 = vpop.f32.mrb[0].mxu0
      %v2883 = vadd.f32 0.0, %v2882
      %v2884 = vpop.f32.mrb[0].mxu0
      %2885 = vmatprep.mubr.f32.mxu0 %v2526
      %2886 = vmatmul.mubr.f32.gmra.mrb[0].mxu0 %v2345
      %v2887 = vpop.f32.mrb[0].mxu0
      %v2888 = vadd.f32 0.0, %v2887
      %v2889 = vpop.f32.mrb[0].mxu0
      %2890 = vmatprep.mubr.f32.mxu0 %v2529
      %2891 = vmatmul.mubr.f32.gmra.mrb[0].mxu0 %v2347
      %v2892 = vpop.f32.mrb[0].mxu0
      %v2893 = vadd.f32 0.0, %v2892
      %v2894 = vpop.f32.mrb[0].mxu0
      %2895 = vmatprep.mubr.f32.mxu0 %v2532
      %2896 = vmatmul.mubr.f32.gmra.mrb[0].mxu0 %v2349
      %v2897 = vpop.f32.mrb[0].mxu0
      %v2898 = vadd.f32 0.0, %v2897
      %v2899 = vpop.f32.mrb[0].mxu0
      %2900 = vmatprep.mubr.f32.mxu0 %v2535
      %2901 = vmatmul.mubr.f32.gmra.mrb[0].mxu0 %v2351
      %v2902 = vpop.f32.mrb[0].mxu0
      %v2903 = vadd.f32 0.0, %v2902
      %v2904 = vpop.f32.mrb[0].mxu0
      %2905 = vmatprep.mubr.f32.mxu0 %v2538
      %2906 = vmatmul.mubr.f32.gmra.mrb[0].mxu0 %v2353
      %v2907 = vpop.f32.mrb[0].mxu0
      %v2908 = vadd.f32 0.0, %v2907
      %v2909 = vpop.f32.mrb[0].mxu0
      %2910 = vmatprep.mubr.f32.mxu0 %v2541
      %2911 = vmatmul.mubr.f32.gmra.mrb[0].mxu0 %v2355
      %v2912 = vpop.f32.mrb[0].mxu0
      %v2913 = vadd.f32 0.0, %v2912
      %v2914 = vpop.f32.mrb[0].mxu0
      %2915 = vmatprep.mubr.f32.mxu0 %v2544
      %2916 = vmatmul.mubr.f32.gmra.mrb[0].mxu0 %v2357
      %v2917 = vpop.f32.mrb[0].mxu0
      %v2918 = vadd.f32 0.0, %v2917
      %v2919 = vpop.f32.mrb[0].mxu0
      %2920 = vmatprep.mubr.f32.mxu0 %v2547
      %2921 = vmatmul.mubr.f32.gmra.mrb[0].mxu0 %v2359
      %v2922 = vpop.f32.mrb[0].mxu0
      %v2923 = vadd.f32 0.0, %v2922
      %v2924 = vpop.f32.mrb[0].mxu0
      %2925 = vmatprep.mubr.f32.mxu0 %v2550
      %2926 = vmatmul.mubr.f32.gmra.mrb[0].mxu0 %v2361
      %v2927 = vpop.f32.mrb[0].mxu0
      %v2928 = vadd.f32 0.0, %v2927
      %v2929 = vpop.f32.mrb[0].mxu0
      %2930 = vmatprep.mubr.f32.mxu0 %v2553
      %2931 = vmatmul.mubr.f32.gmra.mrb[0].mxu0 %v2363
      %v2932 = vpop.f32.mrb[0].mxu0
      %v2933 = vadd.f32 0.0, %v2932
      %v2934 = vpop.f32.mrb[0].mxu0
      %2935 = vmatprep.mubr.f32.mxu0 %v2556
      %2936 = vmatmul.mubr.f32.gmra.mrb[0].mxu0 %v2365
      %v2937 = vpop.f32.mrb[0].mxu0
      %v2938 = vadd.f32 0.0, %v2937
      %v2939 = vpop.f32.mrb[0].mxu0
      %2940 = vmatprep.mubr.f32.mxu0 %v2559
      %2941 = vmatmul.mubr.f32.gmra.mrb[0].mxu0 %v2367
      %v2942 = vpop.f32.mrb[0].mxu0
      %v2943 = vadd.f32 0.0, %v2942
      %v2944 = vpop.f32.mrb[0].mxu0
      %2945 = vdwg.mxu0
      %v2946 = vmul.f32 %v2628, 0.0051020407
      %v2947 = vmul.f32 %v2633, 0.0051020407
      %v2948 = vmul.f32 %v2638, 0.0051020407
      %v2949 = vmul.f32 %v2643, 0.0051020407
      %v2950 = vmul.f32 %v2648, 0.0051020407
      %v2951 = vmul.f32 %v2653, 0.0051020407
      %v2952 = vmul.f32 %v2658, 0.0051020407
      %v2953 = vmul.f32 %v2663, 0.0051020407
      %v2954 = vmul.f32 %v2668, 0.0051020407
      %v2955 = vmul.f32 %v2673, 0.0051020407
      %v2956 = vmul.f32 %v2678, 0.0051020407
      %v2957 = vmul.f32 %v2683, 0.0051020407
      %v2958 = vmul.f32 %v2688, 0.0051020407
      %v2959 = vmul.f32 %v2693, 0.0051020407
      %v2960 = vmul.f32 %v2698, 0.0051020407
      %v2961 = vmul.f32 %v2703, 0.0051020407
      %v2962 = vmul.f32 %v2708, 0.0051020407
      %v2963 = vmul.f32 %v2713, 0.0051020407
      %v2964 = vmul.f32 %v2718, 0.0051020407
      %v2965 = vmul.f32 %v2723, 0.0051020407
      %v2966 = vmul.f32 %v2728, 0.0051020407
      %v2967 = vmul.f32 %v2733, 0.0051020407
      %v2968 = vmul.f32 %v2738, 0.0051020407
      %v2969 = vmul.f32 %v2743, 0.0051020407
      %v2970 = vmul.f32 %v2748, 0.0051020407
      %v2971 = vmul.f32 %v2753, 0.0051020407
      %v2972 = vmul.f32 %v2758, 0.0051020407
      %v2973 = vmul.f32 %v2763, 0.0051020407
      %v2974 = vmul.f32 %v2768, 0.0051020407
      %v2975 = vmul.f32 %v2773, 0.0051020407
      %v2976 = vmul.f32 %v2778, 0.0051020407
      %v2977 = vmul.f32 %v2783, 0.0051020407
      %v2978 = vmul.f32 %v2788, 0.0051020407
      %v2979 = vmul.f32 %v2793, 0.0051020407
      %v2980 = vmul.f32 %v2798, 0.0051020407
      %v2981 = vmul.f32 %v2803, 0.0051020407
      %v2982 = vmul.f32 %v2808, 0.0051020407
      %v2983 = vmul.f32 %v2813, 0.0051020407
      %v2984 = vmul.f32 %v2818, 0.0051020407
      %v2985 = vmul.f32 %v2823, 0.0051020407
      %v2986 = vmul.f32 %v2828, 0.0051020407
      %v2987 = vmul.f32 %v2833, 0.0051020407
      %v2988 = vmul.f32 %v2838, 0.0051020407
      %v2989 = vmul.f32 %v2843, 0.0051020407
      %v2990 = vmul.f32 %v2848, 0.0051020407
      %v2991 = vmul.f32 %v2853, 0.0051020407
      %v2992 = vmul.f32 %v2858, 0.0051020407
      %v2993 = vmul.f32 %v2863, 0.0051020407
      %v2994 = vmul.f32 %v2868, 0.0051020407
      %v2995 = vmul.f32 %v2873, 0.0051020407
      %v2996 = vmul.f32 %v2878, 0.0051020407
      %v2997 = vmul.f32 %v2883, 0.0051020407
      %v2998 = vmul.f32 %v2888, 0.0051020407
      %v2999 = vmul.f32 %v2893, 0.0051020407
      %v3000 = vmul.f32 %v2898, 0.0051020407
      %v3001 = vmul.f32 %v2903, 0.0051020407
      %v3002 = vmul.f32 %v2908, 0.0051020407
      %v3003 = vmul.f32 %v2913, 0.0051020407
      %v3004 = vmul.f32 %v2918, 0.0051020407
      %v3005 = vmul.f32 %v2923, 0.0051020407
      %v3006 = vmul.f32 %v2928, 0.0051020407
      %v3007 = vmul.f32 %v2933, 0.0051020407
      %v3008 = vmul.f32 %v2938, 0.0051020407
      %v3009 = vmul.f32 %v2943, 0.0051020407
      %v3010 = vld [vmem:[%s235] sm:$0xff]
      %v3011 = vld [vmem:[%s235 + $0x8] sm:$0xff]
      %v3012 = vld [vmem:[%s235 + $0x10] sm:$0xff]
      %v3013 = vld [vmem:[%s235 + $0x18] sm:$0xff]
      %v3014 = vld [vmem:[%s235 + $0x20] sm:$0xff]
      %v3015 = vld [vmem:[%s235 + $0x28] sm:$0xff]
      %v3016 = vld [vmem:[%s235 + $0x30] sm:$0xff]
      %v3017 = vld [vmem:[%s235 + $0x38] sm:$0xff]
      %v3018 = vld [vmem:[%s235 + $0x40] sm:$0xff]
      %v3019 = vld [vmem:[%s235 + $0x48] sm:$0xff]
      %v3020 = vld [vmem:[%s235 + $0x50] sm:$0xff]
      %v3021 = vld [vmem:[%s235 + $0x58] sm:$0xff]
      %v3022 = vld [vmem:[%s235 + $0x60] sm:$0xff]
      %v3023 = vld [vmem:[%s235 + $0x68] sm:$0xff]
      %v3024 = vld [vmem:[%s235 + $0x70] sm:$0xff]
      %v3025 = vld [vmem:[%s235 + $0x78] sm:$0xff]
      %v3026 = vld [vmem:[%s235 + $0x80] sm:$0xff]
      %v3027 = vld [vmem:[%s235 + $0x88] sm:$0xff]
      %v3028 = vld [vmem:[%s235 + $0x90] sm:$0xff]
      %v3029 = vld [vmem:[%s235 + $0x98] sm:$0xff]
      %v3030 = vld [vmem:[%s235 + $0xa0] sm:$0xff]
      %v3031 = vld [vmem:[%s235 + $0xa8] sm:$0xff]
      %v3032 = vld [vmem:[%s235 + $0xb0] sm:$0xff]
      %v3033 = vld [vmem:[%s235 + $0xb8] sm:$0xff]
      %v3034 = vld [vmem:[%s235 + $0xc0] sm:$0xff]
      %v3035 = vld [vmem:[%s235 + $0xc8] sm:$0xff]
      %v3036 = vld [vmem:[%s235 + $0xd0] sm:$0xff]
      %v3037 = vld [vmem:[%s235 + $0xd8] sm:$0xff]
      %v3038 = vld [vmem:[%s235 + $0xe0] sm:$0xff]
      %v3039 = vld [vmem:[%s235 + $0xe8] sm:$0xff]
      %v3040 = vld [vmem:[%s235 + $0xf0] sm:$0xff]
      %v3041 = vld [vmem:[%s235 + $0xf8] sm:$0xff]
      %v3042 = vld [vmem:[%s235 + $0x100] sm:$0xff]
      %v3043 = vld [vmem:[%s235 + $0x108] sm:$0xff]
      %v3044 = vld [vmem:[%s235 + $0x110] sm:$0xff]
      %v3045 = vld [vmem:[%s235 + $0x118] sm:$0xff]
      %v3046 = vld [vmem:[%s235 + $0x120] sm:$0xff]
      %v3047 = vld [vmem:[%s235 + $0x128] sm:$0xff]
      %v3048 = vld [vmem:[%s235 + $0x130] sm:$0xff]
      %v3049 = vld [vmem:[%s235 + $0x138] sm:$0xff]
      %v3050 = vld [vmem:[%s235 + $0x140] sm:$0xff]
      %v3051 = vld [vmem:[%s235 + $0x148] sm:$0xff]
      %v3052 = vld [vmem:[%s235 + $0x150] sm:$0xff]
      %v3053 = vld [vmem:[%s235 + $0x158] sm:$0xff]
      %v3054 = vld [vmem:[%s235 + $0x160] sm:$0xff]
      %v3055 = vld [vmem:[%s235 + $0x168] sm:$0xff]
      %v3056 = vld [vmem:[%s235 + $0x170] sm:$0xff]
      %v3057 = vld [vmem:[%s235 + $0x178] sm:$0xff]
      %v3058 = vld [vmem:[%s235 + $0x180] sm:$0xff]
      %v3059 = vld [vmem:[%s235 + $0x188] sm:$0xff]
      %v3060 = vld [vmem:[%s235 + $0x190] sm:$0xff]
      %v3061 = vld [vmem:[%s235 + $0x198] sm:$0xff]
      %v3062 = vld [vmem:[%s235 + $0x1a0] sm:$0xff]
      %v3063 = vld [vmem:[%s235 + $0x1a8] sm:$0xff]
      %v3064 = vld [vmem:[%s235 + $0x1b0] sm:$0xff]
      %v3065 = vld [vmem:[%s235 + $0x1b8] sm:$0xff]
      %v3066 = vld [vmem:[%s235 + $0x1c0] sm:$0xff]
      %v3067 = vld [vmem:[%s235 + $0x1c8] sm:$0xff]
      %v3068 = vld [vmem:[%s235 + $0x1d0] sm:$0xff]
      %v3069 = vld [vmem:[%s235 + $0x1d8] sm:$0xff]
      %v3070 = vld [vmem:[%s235 + $0x1e0] sm:$0xff]
      %v3071 = vld [vmem:[%s235 + $0x1e8] sm:$0xff]
      %v3072 = vld [vmem:[%s235 + $0x1f0] sm:$0xff]
      %v3073 = vld [vmem:[%s235 + $0x1f8] sm:$0xff]
      %v3074 = vadd.f32 %v2946, 1e-05
      %v3075 = vadd.f32 %v2947, 1e-05
      %v3076 = vadd.f32 %v2948, 1e-05
      %v3077 = vadd.f32 %v2949, 1e-05
      %v3078 = vadd.f32 %v2950, 1e-05
      %v3079 = vadd.f32 %v2951, 1e-05
      %v3080 = vadd.f32 %v2952, 1e-05
      %v3081 = vadd.f32 %v2953, 1e-05
      %v3082 = vadd.f32 %v2954, 1e-05
      %v3083 = vadd.f32 %v2955, 1e-05
      %v3084 = vadd.f32 %v2956, 1e-05
      %v3085 = vadd.f32 %v2957, 1e-05
      %v3086 = vadd.f32 %v2958, 1e-05
      %v3087 = vadd.f32 %v2959, 1e-05
      %v3088 = vadd.f32 %v2960, 1e-05
      %v3089 = vadd.f32 %v2961, 1e-05
      %v3090 = vadd.f32 %v2962, 1e-05
      %v3091 = vadd.f32 %v2963, 1e-05
      %v3092 = vadd.f32 %v2964, 1e-05
      %v3093 = vadd.f32 %v2965, 1e-05
      %v3094 = vadd.f32 %v2966, 1e-05
      %v3095 = vadd.f32 %v2967, 1e-05
      %v3096 = vadd.f32 %v2968, 1e-05
      %v3097 = vadd.f32 %v2969, 1e-05
      %v3098 = vadd.f32 %v2970, 1e-05
      %v3099 = vadd.f32 %v2971, 1e-05
      %v3100 = vadd.f32 %v2972, 1e-05
      %v3101 = vadd.f32 %v2973, 1e-05
      %v3102 = vadd.f32 %v2974, 1e-05
      %v3103 = vadd.f32 %v2975, 1e-05
      %v3104 = vadd.f32 %v2976, 1e-05
      %v3105 = vadd.f32 %v2977, 1e-05
      %v3106 = vadd.f32 %v2978, 1e-05
      %v3107 = vadd.f32 %v2979, 1e-05
      %v3108 = vadd.f32 %v2980, 1e-05
      %v3109 = vadd.f32 %v2981, 1e-05
      %v3110 = vadd.f32 %v2982, 1e-05
      %v3111 = vadd.f32 %v2983, 1e-05
      %v3112 = vadd.f32 %v2984, 1e-05
      %v3113 = vadd.f32 %v2985, 1e-05
      %v3114 = vadd.f32 %v2986, 1e-05
      %v3115 = vadd.f32 %v2987, 1e-05
      %v3116 = vadd.f32 %v2988, 1e-05
      %v3117 = vadd.f32 %v2989, 1e-05
      %v3118 = vadd.f32 %v2990, 1e-05
      %v3119 = vadd.f32 %v2991, 1e-05
      %v3120 = vadd.f32 %v2992, 1e-05
      %v3121 = vadd.f32 %v2993, 1e-05
      %v3122 = vadd.f32 %v2994, 1e-05
      %v3123 = vadd.f32 %v2995, 1e-05
      %v3124 = vadd.f32 %v2996, 1e-05
      %v3125 = vadd.f32 %v2997, 1e-05
      %v3126 = vadd.f32 %v2998, 1e-05
      %v3127 = vadd.f32 %v2999, 1e-05
      %v3128 = vadd.f32 %v3000, 1e-05
      %v3129 = vadd.f32 %v3001, 1e-05
      %v3130 = vadd.f32 %v3002, 1e-05
      %v3131 = vadd.f32 %v3003, 1e-05
      %v3132 = vadd.f32 %v3004, 1e-05
      %v3133 = vadd.f32 %v3005, 1e-05
      %v3134 = vadd.f32 %v3006, 1e-05
      %v3135 = vadd.f32 %v3007, 1e-05
      %v3136 = vadd.f32 %v3008, 1e-05
      %v3137 = vadd.f32 %v3009, 1e-05
      %v3138 = vrsqrt.pop %v3074
      %v3139 = vrsqrt.pop %v3075
      %v3140 = vrsqrt.pop %v3076
      %v3141 = vrsqrt.pop %v3077
      %v3142 = vrsqrt.pop %v3078
      %v3143 = vrsqrt.pop %v3079
      %v3144 = vrsqrt.pop %v3080
      %v3145 = vrsqrt.pop %v3081
      %v3146 = vrsqrt.pop %v3082
      %v3147 = vrsqrt.pop %v3083
      %v3148 = vrsqrt.pop %v3084
      %v3149 = vrsqrt.pop %v3085
      %v3150 = vrsqrt.pop %v3086
      %v3151 = vrsqrt.pop %v3087
      %v3152 = vrsqrt.pop %v3088
      %v3153 = vrsqrt.pop %v3089
      %v3154 = vrsqrt.pop %v3090
      %v3155 = vrsqrt.pop %v3091
      %v3156 = vrsqrt.pop %v3092
      %v3157 = vrsqrt.pop %v3093
      %v3158 = vrsqrt.pop %v3094
      %v3159 = vrsqrt.pop %v3095
      %v3160 = vrsqrt.pop %v3096
      %v3161 = vrsqrt.pop %v3097
      %v3162 = vrsqrt.pop %v3098
      %v3163 = vrsqrt.pop %v3099
      %v3164 = vrsqrt.pop %v3100
      %v3165 = vrsqrt.pop %v3101
      %v3166 = vrsqrt.pop %v3102
      %v3167 = vrsqrt.pop %v3103
      %v3168 = vrsqrt.pop %v3104
      %v3169 = vrsqrt.pop %v3105
      %v3170 = vrsqrt.pop %v3106
      %v3171 = vrsqrt.pop %v3107
      %v3172 = vrsqrt.pop %v3108
      %v3173 = vrsqrt.pop %v3109
      %v3174 = vrsqrt.pop %v3110
      %v3175 = vrsqrt.pop %v3111
      %v3176 = vrsqrt.pop %v3112
      %v3177 = vrsqrt.pop %v3113
      %v3178 = vrsqrt.pop %v3114
      %v3179 = vrsqrt.pop %v3115
      %v3180 = vrsqrt.pop %v3116
      %v3181 = vrsqrt.pop %v3117
      %v3182 = vrsqrt.pop %v3118
      %v3183 = vrsqrt.pop %v3119
      %v3184 = vrsqrt.pop %v3120
      %v3185 = vrsqrt.pop %v3121
      %v3186 = vrsqrt.pop %v3122
      %v3187 = vrsqrt.pop %v3123
      %v3188 = vrsqrt.pop %v3124
      %v3189 = vrsqrt.pop %v3125
      %v3190 = vrsqrt.pop %v3126
      %v3191 = vrsqrt.pop %v3127
      %v3192 = vrsqrt.pop %v3128
      %v3193 = vrsqrt.pop %v3129
      %v3194 = vrsqrt.pop %v3130
      %v3195 = vrsqrt.pop %v3131
      %v3196 = vrsqrt.pop %v3132
      %v3197 = vrsqrt.pop %v3133
      %v3198 = vrsqrt.pop %v3134
      %v3199 = vrsqrt.pop %v3135
      %v3200 = vrsqrt.pop %v3136
      %v3201 = vrsqrt.pop %v3137
      %v3202 = vmul.f32 %v3010, %v3138
      %v3203 = vmul.f32 %v3011, %v3139
      %v3204 = vmul.f32 %v3012, %v3140
      %v3205 = vmul.f32 %v3013, %v3141
      %v3206 = vmul.f32 %v3014, %v3142
      %v3207 = vmul.f32 %v3015, %v3143
      %v3208 = vmul.f32 %v3016, %v3144
      %v3209 = vmul.f32 %v3017, %v3145
      %v3210 = vmul.f32 %v3018, %v3146
      %v3211 = vmul.f32 %v3019, %v3147
      %v3212 = vmul.f32 %v3020, %v3148
      %v3213 = vmul.f32 %v3021, %v3149
      %v3214 = vmul.f32 %v3022, %v3150
      %v3215 = vmul.f32 %v3023, %v3151
      %v3216 = vmul.f32 %v3024, %v3152
      %v3217 = vmul.f32 %v3025, %v3153
      %v3218 = vmul.f32 %v3026, %v3154
      %v3219 = vmul.f32 %v3027, %v3155
      %v3220 = vmul.f32 %v3028, %v3156
      %v3221 = vmul.f32 %v3029, %v3157
      %v3222 = vmul.f32 %v3030, %v3158
      %v3223 = vmul.f32 %v3031, %v3159
      %v3224 = vmul.f32 %v3032, %v3160
      %v3225 = vmul.f32 %v3033, %v3161
      %v3226 = vmul.f32 %v3034, %v3162
      %v3227 = vmul.f32 %v3035, %v3163
      %v3228 = vmul.f32 %v3036, %v3164
      %v3229 = vmul.f32 %v3037, %v3165
      %v3230 = vmul.f32 %v3038, %v3166
      %v3231 = vmul.f32 %v3039, %v3167
      %v3232 = vmul.f32 %v3040, %v3168
      %v3233 = vmul.f32 %v3041, %v3169
      %v3234 = vmul.f32 %v3042, %v3170
      %v3235 = vmul.f32 %v3043, %v3171
      %v3236 = vmul.f32 %v3044, %v3172
      %v3237 = vmul.f32 %v3045, %v3173
      %v3238 = vmul.f32 %v3046, %v3174
      %v3239 = vmul.f32 %v3047, %v3175
      %v3240 = vmul.f32 %v3048, %v3176
      %v3241 = vmul.f32 %v3049, %v3177
      %v3242 = vmul.f32 %v3050, %v3178
      %v3243 = vmul.f32 %v3051, %v3179
      %v3244 = vmul.f32 %v3052, %v3180
      %v3245 = vmul.f32 %v3053, %v3181
      %v3246 = vmul.f32 %v3054, %v3182
      %v3247 = vmul.f32 %v3055, %v3183
      %v3248 = vmul.f32 %v3056, %v3184
      %v3249 = vmul.f32 %v3057, %v3185
      %v3250 = vmul.f32 %v3058, %v3186
      %v3251 = vmul.f32 %v3059, %v3187
      %v3252 = vmul.f32 %v3060, %v3188
      %v3253 = vmul.f32 %v3061, %v3189
      %v3254 = vmul.f32 %v3062, %v3190
      %v3255 = vmul.f32 %v3063, %v3191
      %v3256 = vmul.f32 %v3064, %v3192
      %v3257 = vmul.f32 %v3065, %v3193
      %v3258 = vmul.f32 %v3066, %v3194
      %v3259 = vmul.f32 %v3067, %v3195
      %v3260 = vmul.f32 %v3068, %v3196
      %v3261 = vmul.f32 %v3069, %v3197
      %v3262 = vmul.f32 %v3070, %v3198
      %v3263 = vmul.f32 %v3071, %v3199
      %v3264 = vmul.f32 %v3072, %v3200
      %v3265 = vmul.f32 %v3073, %v3201
      %3267 = vset.pattern.permute.xlu0 0
      %3268 = vperm.xlu0 %3267, %v3202
      %v3269 = vpop.permute.xlu0 %3268
      %3272 = vset.pattern.permute.xlu0 0
      %3273 = vperm.xlu0 %3272, %v3203
      %v3274 = vpop.permute.xlu0 %3273
      %3277 = vset.pattern.permute.xlu0 0
      %3278 = vperm.xlu0 %3277, %v3204
      %v3279 = vpop.permute.xlu0 %3278
      %3282 = vset.pattern.permute.xlu0 0
      %3283 = vperm.xlu0 %3282, %v3205
      %v3284 = vpop.permute.xlu0 %3283
      %3287 = vset.pattern.permute.xlu0 0
      %3288 = vperm.xlu0 %3287, %v3206
      %v3289 = vpop.permute.xlu0 %3288
      %3292 = vset.pattern.permute.xlu0 0
      %3293 = vperm.xlu0 %3292, %v3207
      %v3294 = vpop.permute.xlu0 %3293
      %3297 = vset.pattern.permute.xlu0 0
      %3298 = vperm.xlu0 %3297, %v3208
      %v3299 = vpop.permute.xlu0 %3298
      %3302 = vset.pattern.permute.xlu0 0
      %3303 = vperm.xlu0 %3302, %v3209
      %v3304 = vpop.permute.xlu0 %3303
      %3307 = vset.pattern.permute.xlu0 0
      %3308 = vperm.xlu0 %3307, %v3210
      %v3309 = vpop.permute.xlu0 %3308
      %3312 = vset.pattern.permute.xlu0 0
      %3313 = vperm.xlu0 %3312, %v3211
      %v3314 = vpop.permute.xlu0 %3313
      %3317 = vset.pattern.permute.xlu0 0
      %3318 = vperm.xlu0 %3317, %v3212
      %v3319 = vpop.permute.xlu0 %3318
      %3322 = vset.pattern.permute.xlu0 0
      %3323 = vperm.xlu0 %3322, %v3213
      %v3324 = vpop.permute.xlu0 %3323
      %3327 = vset.pattern.permute.xlu0 0
      %3328 = vperm.xlu0 %3327, %v3214
      %v3329 = vpop.permute.xlu0 %3328
      %3332 = vset.pattern.permute.xlu0 0
      %3333 = vperm.xlu0 %3332, %v3215
      %v3334 = vpop.permute.xlu0 %3333
      %3337 = vset.pattern.permute.xlu0 0
      %3338 = vperm.xlu0 %3337, %v3216
      %v3339 = vpop.permute.xlu0 %3338
      %3342 = vset.pattern.permute.xlu0 0
      %3343 = vperm.xlu0 %3342, %v3217
      %v3344 = vpop.permute.xlu0 %3343
      %3347 = vset.pattern.permute.xlu0 0
      %3348 = vperm.xlu0 %3347, %v3218
      %v3349 = vpop.permute.xlu0 %3348
      %3352 = vset.pattern.permute.xlu0 0
      %3353 = vperm.xlu0 %3352, %v3219
      %v3354 = vpop.permute.xlu0 %3353
      %3357 = vset.pattern.permute.xlu0 0
      %3358 = vperm.xlu0 %3357, %v3220
      %v3359 = vpop.permute.xlu0 %3358
      %3362 = vset.pattern.permute.xlu0 0
      %3363 = vperm.xlu0 %3362, %v3221
      %v3364 = vpop.permute.xlu0 %3363
      %3367 = vset.pattern.permute.xlu0 0
      %3368 = vperm.xlu0 %3367, %v3222
      %v3369 = vpop.permute.xlu0 %3368
      %3372 = vset.pattern.permute.xlu0 0
      %3373 = vperm.xlu0 %3372, %v3223
      %v3374 = vpop.permute.xlu0 %3373
      %3377 = vset.pattern.permute.xlu0 0
      %3378 = vperm.xlu0 %3377, %v3224
      %v3379 = vpop.permute.xlu0 %3378
      %3382 = vset.pattern.permute.xlu0 0
      %3383 = vperm.xlu0 %3382, %v3225
      %v3384 = vpop.permute.xlu0 %3383
      %3387 = vset.pattern.permute.xlu0 0
      %3388 = vperm.xlu0 %3387, %v3226
      %v3389 = vpop.permute.xlu0 %3388
      %3392 = vset.pattern.permute.xlu0 0
      %3393 = vperm.xlu0 %3392, %v3227
      %v3394 = vpop.permute.xlu0 %3393
      %3397 = vset.pattern.permute.xlu0 0
      %3398 = vperm.xlu0 %3397, %v3228
      %v3399 = vpop.permute.xlu0 %3398
      %3402 = vset.pattern.permute.xlu0 0
      %3403 = vperm.xlu0 %3402, %v3229
      %v3404 = vpop.permute.xlu0 %3403
      %3407 = vset.pattern.permute.xlu0 0
      %3408 = vperm.xlu0 %3407, %v3230
      %v3409 = vpop.permute.xlu0 %3408
      %3412 = vset.pattern.permute.xlu0 0
      %3413 = vperm.xlu0 %3412, %v3231
      %v3414 = vpop.permute.xlu0 %3413
      %3417 = vset.pattern.permute.xlu0 0
      %3418 = vperm.xlu0 %3417, %v3232
      %v3419 = vpop.permute.xlu0 %3418
      %3422 = vset.pattern.permute.xlu0 0
      %3423 = vperm.xlu0 %3422, %v3233
      %v3424 = vpop.permute.xlu0 %3423
      %3427 = vset.pattern.permute.xlu0 0
      %3428 = vperm.xlu0 %3427, %v3234
      %v3429 = vpop.permute.xlu0 %3428
      %3432 = vset.pattern.permute.xlu0 0
      %3433 = vperm.xlu0 %3432, %v3235
      %v3434 = vpop.permute.xlu0 %3433
      %3437 = vset.pattern.permute.xlu0 0
      %3438 = vperm.xlu0 %3437, %v3236
      %v3439 = vpop.permute.xlu0 %3438
      %3442 = vset.pattern.permute.xlu0 0
      %3443 = vperm.xlu0 %3442, %v3237
      %v3444 = vpop.permute.xlu0 %3443
      %3447 = vset.pattern.permute.xlu0 0
      %3448 = vperm.xlu0 %3447, %v3238
      %v3449 = vpop.permute.xlu0 %3448
      %3452 = vset.pattern.permute.xlu0 0
      %3453 = vperm.xlu0 %3452, %v3239
      %v3454 = vpop.permute.xlu0 %3453
      %3457 = vset.pattern.permute.xlu0 0
      %3458 = vperm.xlu0 %3457, %v3240
      %v3459 = vpop.permute.xlu0 %3458
      %3462 = vset.pattern.permute.xlu0 0
      %3463 = vperm.xlu0 %3462, %v3241
      %v3464 = vpop.permute.xlu0 %3463
      %3467 = vset.pattern.permute.xlu0 0
      %3468 = vperm.xlu0 %3467, %v3242
      %v3469 = vpop.permute.xlu0 %3468
      %3472 = vset.pattern.permute.xlu0 0
      %3473 = vperm.xlu0 %3472, %v3243
      %v3474 = vpop.permute.xlu0 %3473
      %3477 = vset.pattern.permute.xlu0 0
      %3478 = vperm.xlu0 %3477, %v3244
      %v3479 = vpop.permute.xlu0 %3478
      %3482 = vset.pattern.permute.xlu0 0
      %3483 = vperm.xlu0 %3482, %v3245
      %v3484 = vpop.permute.xlu0 %3483
      %3487 = vset.pattern.permute.xlu0 0
      %3488 = vperm.xlu0 %3487, %v3246
      %v3489 = vpop.permute.xlu0 %3488
      %3492 = vset.pattern.permute.xlu0 0
      %3493 = vperm.xlu0 %3492, %v3247
      %v3494 = vpop.permute.xlu0 %3493
      %3497 = vset.pattern.permute.xlu0 0
      %3498 = vperm.xlu0 %3497, %v3248
      %v3499 = vpop.permute.xlu0 %3498
      %3502 = vset.pattern.permute.xlu0 0
      %3503 = vperm.xlu0 %3502, %v3249
      %v3504 = vpop.permute.xlu0 %3503
      %3507 = vset.pattern.permute.xlu0 0
      %3508 = vperm.xlu0 %3507, %v3250
      %v3509 = vpop.permute.xlu0 %3508
      %3512 = vset.pattern.permute.xlu0 0
      %3513 = vperm.xlu0 %3512, %v3251
      %v3514 = vpop.permute.xlu0 %3513
      %3517 = vset.pattern.permute.xlu0 0
      %3518 = vperm.xlu0 %3517, %v3252
      %v3519 = vpop.permute.xlu0 %3518
      %3522 = vset.pattern.permute.xlu0 0
      %3523 = vperm.xlu0 %3522, %v3253
      %v3524 = vpop.permute.xlu0 %3523
      %3527 = vset.pattern.permute.xlu0 0
      %3528 = vperm.xlu0 %3527, %v3254
      %v3529 = vpop.permute.xlu0 %3528
      %3532 = vset.pattern.permute.xlu0 0
      %3533 = vperm.xlu0 %3532, %v3255
      %v3534 = vpop.permute.xlu0 %3533
      %3537 = vset.pattern.permute.xlu0 0
      %3538 = vperm.xlu0 %3537, %v3256
      %v3539 = vpop.permute.xlu0 %3538
      %3542 = vset.pattern.permute.xlu0 0
      %3543 = vperm.xlu0 %3542, %v3257
      %v3544 = vpop.permute.xlu0 %3543
      %3547 = vset.pattern.permute.xlu0 0
      %3548 = vperm.xlu0 %3547, %v3258
      %v3549 = vpop.permute.xlu0 %3548
      %3552 = vset.pattern.permute.xlu0 0
      %3553 = vperm.xlu0 %3552, %v3259
      %v3554 = vpop.permute.xlu0 %3553
      %3557 = vset.pattern.permute.xlu0 0
      %3558 = vperm.xlu0 %3557, %v3260
      %v3559 = vpop.permute.xlu0 %3558
      %3562 = vset.pattern.permute.xlu0 0
      %3563 = vperm.xlu0 %3562, %v3261
      %v3564 = vpop.permute.xlu0 %3563
      %3567 = vset.pattern.permute.xlu0 0
      %3568 = vperm.xlu0 %3567, %v3262
      %v3569 = vpop.permute.xlu0 %3568
      %3572 = vset.pattern.permute.xlu0 0
      %3573 = vperm.xlu0 %3572, %v3263
      %v3574 = vpop.permute.xlu0 %3573
      %3577 = vset.pattern.permute.xlu0 0
      %3578 = vperm.xlu0 %3577, %v3264
      %v3579 = vpop.permute.xlu0 %3578
      %3582 = vset.pattern.permute.xlu0 0
      %3583 = vperm.xlu0 %3582, %v3265
      %v3584 = vpop.permute.xlu0 %3583
      %v3586 = vmul.f32 %v2113, %v3269
      %v3587 = vmul.f32 %v2114, %v3269
      %v3588 = vmul.f32 %v2115, %v3274
      %v3589 = vmul.f32 %v2116, %v3274
      %v3590 = vmul.f32 %v2117, %v3279
      %v3591 = vmul.f32 %v2118, %v3279
      %v3592 = vmul.f32 %v2119, %v3284
      %v3593 = vmul.f32 %v2120, %v3284
      %v3594 = vmul.f32 %v2121, %v3289
      %v3595 = vmul.f32 %v2122, %v3289
      %v3596 = vmul.f32 %v2123, %v3294
      %v3597 = vmul.f32 %v2124, %v3294
      %v3598 = vmul.f32 %v2125, %v3299
      %v3599 = vmul.f32 %v2126, %v3299
      %v3600 = vmul.f32 %v2127, %v3304
      %v3601 = vmul.f32 %v2128, %v3304
      %v3602 = vmul.f32 %v2129, %v3309
      %v3603 = vmul.f32 %v2130, %v3309
      %v3604 = vmul.f32 %v2131, %v3314
      %v3605 = vmul.f32 %v2132, %v3314
      %v3606 = vmul.f32 %v2133, %v3319
      %v3607 = vmul.f32 %v2134, %v3319
      %v3608 = vmul.f32 %v2135, %v3324
      %v3609 = vmul.f32 %v2136, %v3324
      %v3610 = vmul.f32 %v2137, %v3329
      %v3611 = vmul.f32 %v2138, %v3329
      %v3612 = vmul.f32 %v2139, %v3334
      %v3613 = vmul.f32 %v2140, %v3334
      %v3614 = vmul.f32 %v2141, %v3339
      %v3615 = vmul.f32 %v2142, %v3339
      %v3616 = vmul.f32 %v2143, %v3344
      %v3617 = vmul.f32 %v2144, %v3344
      %v3618 = vmul.f32 %v2145, %v3349
      %v3619 = vmul.f32 %v2146, %v3349
      %v3620 = vmul.f32 %v2147, %v3354
      %v3621 = vmul.f32 %v2148, %v3354
      %v3622 = vmul.f32 %v2149, %v3359
      %v3623 = vmul.f32 %v2150, %v3359
      %v3624 = vmul.f32 %v2151, %v3364
      %v3625 = vmul.f32 %v2152, %v3364
      %v3626 = vmul.f32 %v2153, %v3369
      %v3627 = vmul.f32 %v2154, %v3369
      %v3628 = vmul.f32 %v2155, %v3374
      %v3629 = vmul.f32 %v2156, %v3374
      %v3630 = vmul.f32 %v2157, %v3379
      %v3631 = vmul.f32 %v2158, %v3379
      %v3632 = vmul.f32 %v2159, %v3384
      %v3633 = vmul.f32 %v2160, %v3384
      %v3634 = vmul.f32 %v2161, %v3389
      %v3635 = vmul.f32 %v2162, %v3389
      %v3636 = vmul.f32 %v2163, %v3394
      %v3637 = vmul.f32 %v2164, %v3394
      %v3638 = vmul.f32 %v2165, %v3399
      %v3639 = vmul.f32 %v2166, %v3399
      %v3640 = vmul.f32 %v2167, %v3404
      %v3641 = vmul.f32 %v2168, %v3404
      %v3642 = vmul.f32 %v2169, %v3409
      %v3643 = vmul.f32 %v2170, %v3409
      %v3644 = vmul.f32 %v2171, %v3414
      %v3645 = vmul.f32 %v2172, %v3414
      %v3646 = vmul.f32 %v2173, %v3419
      %v3647 = vmul.f32 %v2174, %v3419
      %v3648 = vmul.f32 %v2175, %v3424
      %v3649 = vmul.f32 %v2176, %v3424
      %v3650 = vmul.f32 %v2177, %v3429
      %v3651 = vmul.f32 %v2178, %v3429
      %v3652 = vmul.f32 %v2179, %v3434
      %v3653 = vmul.f32 %v2180, %v3434
      %v3654 = vmul.f32 %v2181, %v3439
      %v3655 = vmul.f32 %v2182, %v3439
      %v3656 = vmul.f32 %v2183, %v3444
      %v3657 = vmul.f32 %v2184, %v3444
      %v3658 = vmul.f32 %v2185, %v3449
      %v3659 = vmul.f32 %v2186, %v3449
      %v3660 = vmul.f32 %v2187, %v3454
      %v3661 = vmul.f32 %v2188, %v3454
      %v3662 = vmul.f32 %v2189, %v3459
      %v3663 = vmul.f32 %v2190, %v3459
      %v3664 = vmul.f32 %v2191, %v3464
      %v3665 = vmul.f32 %v2192, %v3464
      %v3666 = vmul.f32 %v2193, %v3469
      %v3667 = vmul.f32 %v2194, %v3469
      %v3668 = vmul.f32 %v2195, %v3474
      %v3669 = vmul.f32 %v2196, %v3474
      %v3670 = vmul.f32 %v2197, %v3479
      %v3671 = vmul.f32 %v2198, %v3479
      %v3672 = vmul.f32 %v2199, %v3484
      %v3673 = vmul.f32 %v2200, %v3484
      %v3674 = vmul.f32 %v2201, %v3489
      %v3675 = vmul.f32 %v2202, %v3489
      %v3676 = vmul.f32 %v2203, %v3494
      %v3677 = vmul.f32 %v2204, %v3494
      %v3678 = vmul.f32 %v2205, %v3499
      %v3679 = vmul.f32 %v2206, %v3499
      %v3680 = vmul.f32 %v2207, %v3504
      %v3681 = vmul.f32 %v2208, %v3504
      %v3682 = vmul.f32 %v2209, %v3509
      %v3683 = vmul.f32 %v2210, %v3509
      %v3684 = vmul.f32 %v2211, %v3514
      %v3685 = vmul.f32 %v2212, %v3514
      %v3686 = vmul.f32 %v2213, %v3519
      %v3687 = vmul.f32 %v2214, %v3519
      %v3688 = vmul.f32 %v2215, %v3524
      %v3689 = vmul.f32 %v2216, %v3524
      %v3690 = vmul.f32 %v2217, %v3529
      %v3691 = vmul.f32 %v2218, %v3529
      %v3692 = vmul.f32 %v2219, %v3534
      %v3693 = vmul.f32 %v2220, %v3534
      %v3694 = vmul.f32 %v2221, %v3539
      %v3695 = vmul.f32 %v2222, %v3539
      %v3696 = vmul.f32 %v2223, %v3544
      %v3697 = vmul.f32 %v2224, %v3544
      %v3698 = vmul.f32 %v2225, %v3549
      %v3699 = vmul.f32 %v2226, %v3549
      %v3700 = vmul.f32 %v2227, %v3554
      %v3701 = vmul.f32 %v2228, %v3554
      %v3702 = vmul.f32 %v2229, %v3559
      %v3703 = vmul.f32 %v2230, %v3559
      %v3704 = vmul.f32 %v2231, %v3564
      %v3705 = vmul.f32 %v2232, %v3564
      %v3706 = vmul.f32 %v2233, %v3569
      %v3707 = vmul.f32 %v2234, %v3569
      %v3708 = vmul.f32 %v2235, %v3574
      %v3709 = vmul.f32 %v2236, %v3574
      %v3710 = vmul.f32 %v2237, %v3579
      %v3711 = vmul.f32 %v2238, %v3579
      %v3712 = vmul.f32 %v2239, %v3584
      %v3713 = vmul.f32 %v2240, %v3584
      %v3714 = vld [vmem:[%s241] sm:$0xff]
      %v3715 = vld [vmem:[%s241 + $0x8] sm:$0xff]
      %v3716 = vld [vmem:[%s241 + $0x10] sm:$0xff]
      %v3717 = vld [vmem:[%s241 + $0x18] sm:$0xff]
      %v3718 = vld [vmem:[%s241 + $0x20] sm:$0xff]
      %v3719 = vld [vmem:[%s241 + $0x28] sm:$0xff]
      %v3720 = vld [vmem:[%s241 + $0x30] sm:$0xff]
      %v3721 = vld [vmem:[%s241 + $0x38] sm:$0xff]
      %v3722 = vld [vmem:[%s241 + $0x40] sm:$0xff]
      %v3723 = vld [vmem:[%s241 + $0x48] sm:$0xff]
      %v3724 = vld [vmem:[%s241 + $0x50] sm:$0xff]
      %v3725 = vld [vmem:[%s241 + $0x58] sm:$0xff]
      %v3726 = vld [vmem:[%s241 + $0x60] sm:$0xff]
      %v3727 = vld [vmem:[%s241 + $0x68] sm:$0xff]
      %v3728 = vld [vmem:[%s241 + $0x70] sm:$0xff]
      %v3729 = vld [vmem:[%s241 + $0x78] sm:$0xff]
      %v3730 = vld [vmem:[%s241 + $0x80] sm:$0xff]
      %v3731 = vld [vmem:[%s241 + $0x88] sm:$0xff]
      %v3732 = vld [vmem:[%s241 + $0x90] sm:$0xff]
      %v3733 = vld [vmem:[%s241 + $0x98] sm:$0xff]
      %v3734 = vld [vmem:[%s241 + $0xa0] sm:$0xff]
      %v3735 = vld [vmem:[%s241 + $0xa8] sm:$0xff]
      %v3736 = vld [vmem:[%s241 + $0xb0] sm:$0xff]
      %v3737 = vld [vmem:[%s241 + $0xb8] sm:$0xff]
      %v3738 = vld [vmem:[%s241 + $0xc0] sm:$0xff]
      %v3739 = vld [vmem:[%s241 + $0xc8] sm:$0xff]
      %v3740 = vld [vmem:[%s241 + $0xd0] sm:$0xff]
      %v3741 = vld [vmem:[%s241 + $0xd8] sm:$0xff]
      %v3742 = vld [vmem:[%s241 + $0xe0] sm:$0xff]
      %v3743 = vld [vmem:[%s241 + $0xe8] sm:$0xff]
      %v3744 = vld [vmem:[%s241 + $0xf0] sm:$0xff]
      %v3745 = vld [vmem:[%s241 + $0xf8] sm:$0xff]
      %v3746 = vld [vmem:[%s241 + $0x100] sm:$0xff]
      %v3747 = vld [vmem:[%s241 + $0x108] sm:$0xff]
      %v3748 = vld [vmem:[%s241 + $0x110] sm:$0xff]
      %v3749 = vld [vmem:[%s241 + $0x118] sm:$0xff]
      %v3750 = vld [vmem:[%s241 + $0x120] sm:$0xff]
      %v3751 = vld [vmem:[%s241 + $0x128] sm:$0xff]
      %v3752 = vld [vmem:[%s241 + $0x130] sm:$0xff]
      %v3753 = vld [vmem:[%s241 + $0x138] sm:$0xff]
      %v3754 = vld [vmem:[%s241 + $0x140] sm:$0xff]
      %v3755 = vld [vmem:[%s241 + $0x148] sm:$0xff]
      %v3756 = vld [vmem:[%s241 + $0x150] sm:$0xff]
      %v3757 = vld [vmem:[%s241 + $0x158] sm:$0xff]
      %v3758 = vld [vmem:[%s241 + $0x160] sm:$0xff]
      %v3759 = vld [vmem:[%s241 + $0x168] sm:$0xff]
      %v3760 = vld [vmem:[%s241 + $0x170] sm:$0xff]
      %v3761 = vld [vmem:[%s241 + $0x178] sm:$0xff]
      %v3762 = vld [vmem:[%s241 + $0x180] sm:$0xff]
      %v3763 = vld [vmem:[%s241 + $0x188] sm:$0xff]
      %v3764 = vld [vmem:[%s241 + $0x190] sm:$0xff]
      %v3765 = vld [vmem:[%s241 + $0x198] sm:$0xff]
      %v3766 = vld [vmem:[%s241 + $0x1a0] sm:$0xff]
      %v3767 = vld [vmem:[%s241 + $0x1a8] sm:$0xff]
      %v3768 = vld [vmem:[%s241 + $0x1b0] sm:$0xff]
      %v3769 = vld [vmem:[%s241 + $0x1b8] sm:$0xff]
      %v3770 = vld [vmem:[%s241 + $0x1c0] sm:$0xff]
      %v3771 = vld [vmem:[%s241 + $0x1c8] sm:$0xff]
      %v3772 = vld [vmem:[%s241 + $0x1d0] sm:$0xff]
      %v3773 = vld [vmem:[%s241 + $0x1d8] sm:$0xff]
      %v3774 = vld [vmem:[%s241 + $0x1e0] sm:$0xff]
      %v3775 = vld [vmem:[%s241 + $0x1e8] sm:$0xff]
      %v3776 = vld [vmem:[%s241 + $0x1f0] sm:$0xff]
      %v3777 = vld [vmem:[%s241 + $0x1f8] sm:$0xff]
      %3779 = vset.pattern.permute.xlu0 0
      %3780 = vperm.xlu0 %3779, %v3714
      %v3781 = vpop.permute.xlu0 %3780
      %3784 = vset.pattern.permute.xlu0 0
      %3785 = vperm.xlu0 %3784, %v3715
      %v3786 = vpop.permute.xlu0 %3785
      %3789 = vset.pattern.permute.xlu0 0
      %3790 = vperm.xlu0 %3789, %v3716
      %v3791 = vpop.permute.xlu0 %3790
      %3794 = vset.pattern.permute.xlu0 0
      %3795 = vperm.xlu0 %3794, %v3717
      %v3796 = vpop.permute.xlu0 %3795
      %3799 = vset.pattern.permute.xlu0 0
      %3800 = vperm.xlu0 %3799, %v3718
      %v3801 = vpop.permute.xlu0 %3800
      %3804 = vset.pattern.permute.xlu0 0
      %3805 = vperm.xlu0 %3804, %v3719
      %v3806 = vpop.permute.xlu0 %3805
      %3809 = vset.pattern.permute.xlu0 0
      %3810 = vperm.xlu0 %3809, %v3720
      %v3811 = vpop.permute.xlu0 %3810
      %3814 = vset.pattern.permute.xlu0 0
      %3815 = vperm.xlu0 %3814, %v3721
      %v3816 = vpop.permute.xlu0 %3815
      %3819 = vset.pattern.permute.xlu0 0
      %3820 = vperm.xlu0 %3819, %v3722
      %v3821 = vpop.permute.xlu0 %3820
      %3824 = vset.pattern.permute.xlu0 0
      %3825 = vperm.xlu0 %3824, %v3723
      %v3826 = vpop.permute.xlu0 %3825
      %3829 = vset.pattern.permute.xlu0 0
      %3830 = vperm.xlu0 %3829, %v3724
      %v3831 = vpop.permute.xlu0 %3830
      %3834 = vset.pattern.permute.xlu0 0
      %3835 = vperm.xlu0 %3834, %v3725
      %v3836 = vpop.permute.xlu0 %3835
      %3839 = vset.pattern.permute.xlu0 0
      %3840 = vperm.xlu0 %3839, %v3726
      %v3841 = vpop.permute.xlu0 %3840
      %3844 = vset.pattern.permute.xlu0 0
      %3845 = vperm.xlu0 %3844, %v3727
      %v3846 = vpop.permute.xlu0 %3845
      %3849 = vset.pattern.permute.xlu0 0
      %3850 = vperm.xlu0 %3849, %v3728
      %v3851 = vpop.permute.xlu0 %3850
      %3854 = vset.pattern.permute.xlu0 0
      %3855 = vperm.xlu0 %3854, %v3729
      %v3856 = vpop.permute.xlu0 %3855
      %3859 = vset.pattern.permute.xlu0 0
      %3860 = vperm.xlu0 %3859, %v3730
      %v3861 = vpop.permute.xlu0 %3860
      %3864 = vset.pattern.permute.xlu0 0
      %3865 = vperm.xlu0 %3864, %v3731
      %v3866 = vpop.permute.xlu0 %3865
      %3869 = vset.pattern.permute.xlu0 0
      %3870 = vperm.xlu0 %3869, %v3732
      %v3871 = vpop.permute.xlu0 %3870
      %3874 = vset.pattern.permute.xlu0 0
      %3875 = vperm.xlu0 %3874, %v3733
      %v3876 = vpop.permute.xlu0 %3875
      %3879 = vset.pattern.permute.xlu0 0
      %3880 = vperm.xlu0 %3879, %v3734
      %v3881 = vpop.permute.xlu0 %3880
      %3884 = vset.pattern.permute.xlu0 0
      %3885 = vperm.xlu0 %3884, %v3735
      %v3886 = vpop.permute.xlu0 %3885
      %3889 = vset.pattern.permute.xlu0 0
      %3890 = vperm.xlu0 %3889, %v3736
      %v3891 = vpop.permute.xlu0 %3890
      %3894 = vset.pattern.permute.xlu0 0
      %3895 = vperm.xlu0 %3894, %v3737
      %v3896 = vpop.permute.xlu0 %3895
      %3899 = vset.pattern.permute.xlu0 0
      %3900 = vperm.xlu0 %3899, %v3738
      %v3901 = vpop.permute.xlu0 %3900
      %3904 = vset.pattern.permute.xlu0 0
      %3905 = vperm.xlu0 %3904, %v3739
      %v3906 = vpop.permute.xlu0 %3905
      %3909 = vset.pattern.permute.xlu0 0
      %3910 = vperm.xlu0 %3909, %v3740
      %v3911 = vpop.permute.xlu0 %3910
      %3914 = vset.pattern.permute.xlu0 0
      %3915 = vperm.xlu0 %3914, %v3741
      %v3916 = vpop.permute.xlu0 %3915
      %3919 = vset.pattern.permute.xlu0 0
      %3920 = vperm.xlu0 %3919, %v3742
      %v3921 = vpop.permute.xlu0 %3920
      %3924 = vset.pattern.permute.xlu0 0
      %3925 = vperm.xlu0 %3924, %v3743
      %v3926 = vpop.permute.xlu0 %3925
      %3929 = vset.pattern.permute.xlu0 0
      %3930 = vperm.xlu0 %3929, %v3744
      %v3931 = vpop.permute.xlu0 %3930
      %3934 = vset.pattern.permute.xlu0 0
      %3935 = vperm.xlu0 %3934, %v3745
      %v3936 = vpop.permute.xlu0 %3935
      %3939 = vset.pattern.permute.xlu0 0
      %3940 = vperm.xlu0 %3939, %v3746
      %v3941 = vpop.permute.xlu0 %3940
      %3944 = vset.pattern.permute.xlu0 0
      %3945 = vperm.xlu0 %3944, %v3747
      %v3946 = vpop.permute.xlu0 %3945
      %3949 = vset.pattern.permute.xlu0 0
      %3950 = vperm.xlu0 %3949, %v3748
      %v3951 = vpop.permute.xlu0 %3950
      %3954 = vset.pattern.permute.xlu0 0
      %3955 = vperm.xlu0 %3954, %v3749
      %v3956 = vpop.permute.xlu0 %3955
      %3959 = vset.pattern.permute.xlu0 0
      %3960 = vperm.xlu0 %3959, %v3750
      %v3961 = vpop.permute.xlu0 %3960
      %3964 = vset.pattern.permute.xlu0 0
      %3965 = vperm.xlu0 %3964, %v3751
      %v3966 = vpop.permute.xlu0 %3965
      %3969 = vset.pattern.permute.xlu0 0
      %3970 = vperm.xlu0 %3969, %v3752
      %v3971 = vpop.permute.xlu0 %3970
      %3974 = vset.pattern.permute.xlu0 0
      %3975 = vperm.xlu0 %3974, %v3753
      %v3976 = vpop.permute.xlu0 %3975
      %3979 = vset.pattern.permute.xlu0 0
      %3980 = vperm.xlu0 %3979, %v3754
      %v3981 = vpop.permute.xlu0 %3980
      %3984 = vset.pattern.permute.xlu0 0
      %3985 = vperm.xlu0 %3984, %v3755
      %v3986 = vpop.permute.xlu0 %3985
      %3989 = vset.pattern.permute.xlu0 0
      %3990 = vperm.xlu0 %3989, %v3756
      %v3991 = vpop.permute.xlu0 %3990
      %3994 = vset.pattern.permute.xlu0 0
      %3995 = vperm.xlu0 %3994, %v3757
      %v3996 = vpop.permute.xlu0 %3995
      %3999 = vset.pattern.permute.xlu0 0
      %4000 = vperm.xlu0 %3999, %v3758
      %v4001 = vpop.permute.xlu0 %4000
      %4004 = vset.pattern.permute.xlu0 0
      %4005 = vperm.xlu0 %4004, %v3759
      %v4006 = vpop.permute.xlu0 %4005
      %4009 = vset.pattern.permute.xlu0 0
      %4010 = vperm.xlu0 %4009, %v3760
      %v4011 = vpop.permute.xlu0 %4010
      %4014 = vset.pattern.permute.xlu0 0
      %4015 = vperm.xlu0 %4014, %v3761
      %v4016 = vpop.permute.xlu0 %4015
      %4019 = vset.pattern.permute.xlu0 0
      %4020 = vperm.xlu0 %4019, %v3762
      %v4021 = vpop.permute.xlu0 %4020
      %4024 = vset.pattern.permute.xlu0 0
      %4025 = vperm.xlu0 %4024, %v3763
      %v4026 = vpop.permute.xlu0 %4025
      %4029 = vset.pattern.permute.xlu0 0
      %4030 = vperm.xlu0 %4029, %v3764
      %v4031 = vpop.permute.xlu0 %4030
      %4034 = vset.pattern.permute.xlu0 0
      %4035 = vperm.xlu0 %4034, %v3765
      %v4036 = vpop.permute.xlu0 %4035
      %4039 = vset.pattern.permute.xlu0 0
      %4040 = vperm.xlu0 %4039, %v3766
      %v4041 = vpop.permute.xlu0 %4040
      %4044 = vset.pattern.permute.xlu0 0
      %4045 = vperm.xlu0 %4044, %v3767
      %v4046 = vpop.permute.xlu0 %4045
      %4049 = vset.pattern.permute.xlu0 0
      %4050 = vperm.xlu0 %4049, %v3768
      %v4051 = vpop.permute.xlu0 %4050
      %4054 = vset.pattern.permute.xlu0 0
      %4055 = vperm.xlu0 %4054, %v3769
      %v4056 = vpop.permute.xlu0 %4055
      %4059 = vset.pattern.permute.xlu0 0
      %4060 = vperm.xlu0 %4059, %v3770
      %v4061 = vpop.permute.xlu0 %4060
      %4064 = vset.pattern.permute.xlu0 0
      %4065 = vperm.xlu0 %4064, %v3771
      %v4066 = vpop.permute.xlu0 %4065
      %4069 = vset.pattern.permute.xlu0 0
      %4070 = vperm.xlu0 %4069, %v3772
      %v4071 = vpop.permute.xlu0 %4070
      %4074 = vset.pattern.permute.xlu0 0
      %4075 = vperm.xlu0 %4074, %v3773
      %v4076 = vpop.permute.xlu0 %4075
      %4079 = vset.pattern.permute.xlu0 0
      %4080 = vperm.xlu0 %4079, %v3774
      %v4081 = vpop.permute.xlu0 %4080
      %4084 = vset.pattern.permute.xlu0 0
      %4085 = vperm.xlu0 %4084, %v3775
      %v4086 = vpop.permute.xlu0 %4085
      %4089 = vset.pattern.permute.xlu0 0
      %4090 = vperm.xlu0 %4089, %v3776
      %v4091 = vpop.permute.xlu0 %4090
      %4094 = vset.pattern.permute.xlu0 0
      %4095 = vperm.xlu0 %4094, %v3777
      %v4096 = vpop.permute.xlu0 %4095
      %v4098 = vadd.f32 %v3586, %v3781
      %v4099 = vadd.f32 %v3587, %v3781
      %v4100 = vadd.f32 %v3588, %v3786
      %v4101 = vadd.f32 %v3589, %v3786
      %v4102 = vadd.f32 %v3590, %v3791
      %v4103 = vadd.f32 %v3591, %v3791
      %v4104 = vadd.f32 %v3592, %v3796
      %v4105 = vadd.f32 %v3593, %v3796
      %v4106 = vadd.f32 %v3594, %v3801
      %v4107 = vadd.f32 %v3595, %v3801
      %v4108 = vadd.f32 %v3596, %v3806
      %v4109 = vadd.f32 %v3597, %v3806
      %v4110 = vadd.f32 %v3598, %v3811
      %v4111 = vadd.f32 %v3599, %v3811
      %v4112 = vadd.f32 %v3600, %v3816
      %v4113 = vadd.f32 %v3601, %v3816
      %v4114 = vadd.f32 %v3602, %v3821
      %v4115 = vadd.f32 %v3603, %v3821
      %v4116 = vadd.f32 %v3604, %v3826
      %v4117 = vadd.f32 %v3605, %v3826
      %v4118 = vadd.f32 %v3606, %v3831
      %v4119 = vadd.f32 %v3607, %v3831
      %v4120 = vadd.f32 %v3608, %v3836
      %v4121 = vadd.f32 %v3609, %v3836
      %v4122 = vadd.f32 %v3610, %v3841
      %v4123 = vadd.f32 %v3611, %v3841
      %v4124 = vadd.f32 %v3612, %v3846
      %v4125 = vadd.f32 %v3613, %v3846
      %v4126 = vadd.f32 %v3614, %v3851
      %v4127 = vadd.f32 %v3615, %v3851
      %v4128 = vadd.f32 %v3616, %v3856
      %v4129 = vadd.f32 %v3617, %v3856
      %v4130 = vadd.f32 %v3618, %v3861
      %v4131 = vadd.f32 %v3619, %v3861
      %v4132 = vadd.f32 %v3620, %v3866
      %v4133 = vadd.f32 %v3621, %v3866
      %v4134 = vadd.f32 %v3622, %v3871
      %v4135 = vadd.f32 %v3623, %v3871
      %v4136 = vadd.f32 %v3624, %v3876
      %v4137 = vadd.f32 %v3625, %v3876
      %v4138 = vadd.f32 %v3626, %v3881
      %v4139 = vadd.f32 %v3627, %v3881
      %v4140 = vadd.f32 %v3628, %v3886
      %v4141 = vadd.f32 %v3629, %v3886
      %v4142 = vadd.f32 %v3630, %v3891
      %v4143 = vadd.f32 %v3631, %v3891
      %v4144 = vadd.f32 %v3632, %v3896
      %v4145 = vadd.f32 %v3633, %v3896
      %v4146 = vadd.f32 %v3634, %v3901
      %v4147 = vadd.f32 %v3635, %v3901
      %v4148 = vadd.f32 %v3636, %v3906
      %v4149 = vadd.f32 %v3637, %v3906
      %v4150 = vadd.f32 %v3638, %v3911
      %v4151 = vadd.f32 %v3639, %v3911
      %v4152 = vadd.f32 %v3640, %v3916
      %v4153 = vadd.f32 %v3641, %v3916
      %v4154 = vadd.f32 %v3642, %v3921
      %v4155 = vadd.f32 %v3643, %v3921
      %v4156 = vadd.f32 %v3644, %v3926
      %v4157 = vadd.f32 %v3645, %v3926
      %v4158 = vadd.f32 %v3646, %v3931
      %v4159 = vadd.f32 %v3647, %v3931
      %v4160 = vadd.f32 %v3648, %v3936
      %v4161 = vadd.f32 %v3649, %v3936
      %v4162 = vadd.f32 %v3650, %v3941
      %v4163 = vadd.f32 %v3651, %v3941
      %v4164 = vadd.f32 %v3652, %v3946
      %v4165 = vadd.f32 %v3653, %v3946
      %v4166 = vadd.f32 %v3654, %v3951
      %v4167 = vadd.f32 %v3655, %v3951
      %v4168 = vadd.f32 %v3656, %v3956
      %v4169 = vadd.f32 %v3657, %v3956
      %v4170 = vadd.f32 %v3658, %v3961
      %v4171 = vadd.f32 %v3659, %v3961
      %v4172 = vadd.f32 %v3660, %v3966
      %v4173 = vadd.f32 %v3661, %v3966
      %v4174 = vadd.f32 %v3662, %v3971
      %v4175 = vadd.f32 %v3663, %v3971
      %v4176 = vadd.f32 %v3664, %v3976
      %v4177 = vadd.f32 %v3665, %v3976
      %v4178 = vadd.f32 %v3666, %v3981
      %v4179 = vadd.f32 %v3667, %v3981
      %v4180 = vadd.f32 %v3668, %v3986
      %v4181 = vadd.f32 %v3669, %v3986
      %v4182 = vadd.f32 %v3670, %v3991
      %v4183 = vadd.f32 %v3671, %v3991
      %v4184 = vadd.f32 %v3672, %v3996
      %v4185 = vadd.f32 %v3673, %v3996
      %v4186 = vadd.f32 %v3674, %v4001
      %v4187 = vadd.f32 %v3675, %v4001
      %v4188 = vadd.f32 %v3676, %v4006
      %v4189 = vadd.f32 %v3677, %v4006
      %v4190 = vadd.f32 %v3678, %v4011
      %v4191 = vadd.f32 %v3679, %v4011
      %v4192 = vadd.f32 %v3680, %v4016
      %v4193 = vadd.f32 %v3681, %v4016
      %v4194 = vadd.f32 %v3682, %v4021
      %v4195 = vadd.f32 %v3683, %v4021
      %v4196 = vadd.f32 %v3684, %v4026
      %v4197 = vadd.f32 %v3685, %v4026
      %v4198 = vadd.f32 %v3686, %v4031
      %v4199 = vadd.f32 %v3687, %v4031
      %v4200 = vadd.f32 %v3688, %v4036
      %v4201 = vadd.f32 %v3689, %v4036
      %v4202 = vadd.f32 %v3690, %v4041
      %v4203 = vadd.f32 %v3691, %v4041
      %v4204 = vadd.f32 %v3692, %v4046
      %v4205 = vadd.f32 %v3693, %v4046
      %v4206 = vadd.f32 %v3694, %v4051
      %v4207 = vadd.f32 %v3695, %v4051
      %v4208 = vadd.f32 %v3696, %v4056
      %v4209 = vadd.f32 %v3697, %v4056
      %v4210 = vadd.f32 %v3698, %v4061
      %v4211 = vadd.f32 %v3699, %v4061
      %v4212 = vadd.f32 %v3700, %v4066
      %v4213 = vadd.f32 %v3701, %v4066
      %v4214 = vadd.f32 %v3702, %v4071
      %v4215 = vadd.f32 %v3703, %v4071
      %v4216 = vadd.f32 %v3704, %v4076
      %v4217 = vadd.f32 %v3705, %v4076
      %v4218 = vadd.f32 %v3706, %v4081
      %v4219 = vadd.f32 %v3707, %v4081
      %v4220 = vadd.f32 %v3708, %v4086
      %v4221 = vadd.f32 %v3709, %v4086
      %v4222 = vadd.f32 %v3710, %v4091
      %v4223 = vadd.f32 %v3711, %v4091
      %v4224 = vadd.f32 %v3712, %v4096
      %v4225 = vadd.f32 %v3713, %v4096
      %4226 = vst [vmem:[%s248] sm:$0xff] %v4098
      %4227 = vst.msk [vmem:[%s248 + $0x8] sm:$0xff] %vm1147, %v4099
      %4228 = vst [vmem:[%s248 + $0x10] sm:$0xff] %v4100
      %4229 = vst.msk [vmem:[%s248 + $0x18] sm:$0xff] %vm1147, %v4101
      %4230 = vst [vmem:[%s248 + $0x20] sm:$0xff] %v4102
      %4231 = vst.msk [vmem:[%s248 + $0x28] sm:$0xff] %vm1147, %v4103
      %4232 = vst [vmem:[%s248 + $0x30] sm:$0xff] %v4104
      %4233 = vst.msk [vmem:[%s248 + $0x38] sm:$0xff] %vm1147, %v4105
      %4234 = vst [vmem:[%s248 + $0x40] sm:$0xff] %v4106
      %4235 = vst.msk [vmem:[%s248 + $0x48] sm:$0xff] %vm1147, %v4107
      %4236 = vst [vmem:[%s248 + $0x50] sm:$0xff] %v4108
      %4237 = vst.msk [vmem:[%s248 + $0x58] sm:$0xff] %vm1147, %v4109
      %4238 = vst [vmem:[%s248 + $0x60] sm:$0xff] %v4110
      %4239 = vst.msk [vmem:[%s248 + $0x68] sm:$0xff] %vm1147, %v4111
      %4240 = vst [vmem:[%s248 + $0x70] sm:$0xff] %v4112
      %4241 = vst.msk [vmem:[%s248 + $0x78] sm:$0xff] %vm1147, %v4113
      %4242 = vst [vmem:[%s248 + $0x80] sm:$0xff] %v4114
      %4243 = vst.msk [vmem:[%s248 + $0x88] sm:$0xff] %vm1147, %v4115
      %4244 = vst [vmem:[%s248 + $0x90] sm:$0xff] %v4116
      %4245 = vst.msk [vmem:[%s248 + $0x98] sm:$0xff] %vm1147, %v4117
      %4246 = vst [vmem:[%s248 + $0xa0] sm:$0xff] %v4118
      %4247 = vst.msk [vmem:[%s248 + $0xa8] sm:$0xff] %vm1147, %v4119
      %4248 = vst [vmem:[%s248 + $0xb0] sm:$0xff] %v4120
      %4249 = vst.msk [vmem:[%s248 + $0xb8] sm:$0xff] %vm1147, %v4121
      %4250 = vst [vmem:[%s248 + $0xc0] sm:$0xff] %v4122
      %4251 = vst.msk [vmem:[%s248 + $0xc8] sm:$0xff] %vm1147, %v4123
      %4252 = vst [vmem:[%s248 + $0xd0] sm:$0xff] %v4124
      %4253 = vst.msk [vmem:[%s248 + $0xd8] sm:$0xff] %vm1147, %v4125
      %4254 = vst [vmem:[%s248 + $0xe0] sm:$0xff] %v4126
      %4255 = vst.msk [vmem:[%s248 + $0xe8] sm:$0xff] %vm1147, %v4127
      %4256 = vst [vmem:[%s248 + $0xf0] sm:$0xff] %v4128
      %4257 = vst.msk [vmem:[%s248 + $0xf8] sm:$0xff] %vm1147, %v4129
      %4258 = vst [vmem:[%s248 + $0x100] sm:$0xff] %v4130
      %4259 = vst.msk [vmem:[%s248 + $0x108] sm:$0xff] %vm1147, %v4131
      %4260 = vst [vmem:[%s248 + $0x110] sm:$0xff] %v4132
      %4261 = vst.msk [vmem:[%s248 + $0x118] sm:$0xff] %vm1147, %v4133
      %4262 = vst [vmem:[%s248 + $0x120] sm:$0xff] %v4134
      %4263 = vst.msk [vmem:[%s248 + $0x128] sm:$0xff] %vm1147, %v4135
      %4264 = vst [vmem:[%s248 + $0x130] sm:$0xff] %v4136
      %4265 = vst.msk [vmem:[%s248 + $0x138] sm:$0xff] %vm1147, %v4137
      %4266 = vst [vmem:[%s248 + $0x140] sm:$0xff] %v4138
      %4267 = vst.msk [vmem:[%s248 + $0x148] sm:$0xff] %vm1147, %v4139
      %4268 = vst [vmem:[%s248 + $0x150] sm:$0xff] %v4140
      %4269 = vst.msk [vmem:[%s248 + $0x158] sm:$0xff] %vm1147, %v4141
      %4270 = vst [vmem:[%s248 + $0x160] sm:$0xff] %v4142
      %4271 = vst.msk [vmem:[%s248 + $0x168] sm:$0xff] %vm1147, %v4143
      %4272 = vst [vmem:[%s248 + $0x170] sm:$0xff] %v4144
      %4273 = vst.msk [vmem:[%s248 + $0x178] sm:$0xff] %vm1147, %v4145
      %4274 = vst [vmem:[%s248 + $0x180] sm:$0xff] %v4146
      %4275 = vst.msk [vmem:[%s248 + $0x188] sm:$0xff] %vm1147, %v4147
      %4276 = vst [vmem:[%s248 + $0x190] sm:$0xff] %v4148
      %4277 = vst.msk [vmem:[%s248 + $0x198] sm:$0xff] %vm1147, %v4149
      %4278 = vst [vmem:[%s248 + $0x1a0] sm:$0xff] %v4150
      %4279 = vst.msk [vmem:[%s248 + $0x1a8] sm:$0xff] %vm1147, %v4151
      %4280 = vst [vmem:[%s248 + $0x1b0] sm:$0xff] %v4152
      %4281 = vst.msk [vmem:[%s248 + $0x1b8] sm:$0xff] %vm1147, %v4153
      %4282 = vst [vmem:[%s248 + $0x1c0] sm:$0xff] %v4154
      %4283 = vst.msk [vmem:[%s248 + $0x1c8] sm:$0xff] %vm1147, %v4155
      %4284 = vst [vmem:[%s248 + $0x1d0] sm:$0xff] %v4156
      %4285 = vst.msk [vmem:[%s248 + $0x1d8] sm:$0xff] %vm1147, %v4157
      %4286 = vst [vmem:[%s248 + $0x1e0] sm:$0xff] %v4158
      %4287 = vst.msk [vmem:[%s248 + $0x1e8] sm:$0xff] %vm1147, %v4159
      %4288 = vst [vmem:[%s248 + $0x1f0] sm:$0xff] %v4160
      %4289 = vst.msk [vmem:[%s248 + $0x1f8] sm:$0xff] %vm1147, %v4161
      %4290 = vst [vmem:[%s248 + $0x200] sm:$0xff] %v4162
      %4291 = vst.msk [vmem:[%s248 + $0x208] sm:$0xff] %vm1147, %v4163
      %4292 = vst [vmem:[%s248 + $0x210] sm:$0xff] %v4164
      %4293 = vst.msk [vmem:[%s248 + $0x218] sm:$0xff] %vm1147, %v4165
      %4294 = vst [vmem:[%s248 + $0x220] sm:$0xff] %v4166
      %4295 = vst.msk [vmem:[%s248 + $0x228] sm:$0xff] %vm1147, %v4167
      %4296 = vst [vmem:[%s248 + $0x230] sm:$0xff] %v4168
      %4297 = vst.msk [vmem:[%s248 + $0x238] sm:$0xff] %vm1147, %v4169
      %4298 = vst [vmem:[%s248 + $0x240] sm:$0xff] %v4170
      %4299 = vst.msk [vmem:[%s248 + $0x248] sm:$0xff] %vm1147, %v4171
      %4300 = vst [vmem:[%s248 + $0x250] sm:$0xff] %v4172
      %4301 = vst.msk [vmem:[%s248 + $0x258] sm:$0xff] %vm1147, %v4173
      %4302 = vst [vmem:[%s248 + $0x260] sm:$0xff] %v4174
      %4303 = vst.msk [vmem:[%s248 + $0x268] sm:$0xff] %vm1147, %v4175
      %4304 = vst [vmem:[%s248 + $0x270] sm:$0xff] %v4176
      %4305 = vst.msk [vmem:[%s248 + $0x278] sm:$0xff] %vm1147, %v4177
      %4306 = vst [vmem:[%s248 + $0x280] sm:$0xff] %v4178
      %4307 = vst.msk [vmem:[%s248 + $0x288] sm:$0xff] %vm1147, %v4179
      %4308 = vst [vmem:[%s248 + $0x290] sm:$0xff] %v4180
      %4309 = vst.msk [vmem:[%s248 + $0x298] sm:$0xff] %vm1147, %v4181
      %4310 = vst [vmem:[%s248 + $0x2a0] sm:$0xff] %v4182
      %4311 = vst.msk [vmem:[%s248 + $0x2a8] sm:$0xff] %vm1147, %v4183
      %4312 = vst [vmem:[%s248 + $0x2b0] sm:$0xff] %v4184
      %4313 = vst.msk [vmem:[%s248 + $0x2b8] sm:$0xff] %vm1147, %v4185
      %4314 = vst [vmem:[%s248 + $0x2c0] sm:$0xff] %v4186
      %4315 = vst.msk [vmem:[%s248 + $0x2c8] sm:$0xff] %vm1147, %v4187
      %4316 = vst [vmem:[%s248 + $0x2d0] sm:$0xff] %v4188
      %4317 = vst.msk [vmem:[%s248 + $0x2d8] sm:$0xff] %vm1147, %v4189
      %4318 = vst [vmem:[%s248 + $0x2e0] sm:$0xff] %v4190
      %4319 = vst.msk [vmem:[%s248 + $0x2e8] sm:$0xff] %vm1147, %v4191
      %4320 = vst [vmem:[%s248 + $0x2f0] sm:$0xff] %v4192
      %4321 = vst.msk [vmem:[%s248 + $0x2f8] sm:$0xff] %vm1147, %v4193
      %4322 = vst [vmem:[%s248 + $0x300] sm:$0xff] %v4194
      %4323 = vst.msk [vmem:[%s248 + $0x308] sm:$0xff] %vm1147, %v4195
      %4324 = vst [vmem:[%s248 + $0x310] sm:$0xff] %v4196
      %4325 = vst.msk [vmem:[%s248 + $0x318] sm:$0xff] %vm1147, %v4197
      %4326 = vst [vmem:[%s248 + $0x320] sm:$0xff] %v4198
      %4327 = vst.msk [vmem:[%s248 + $0x328] sm:$0xff] %vm1147, %v4199
      %4328 = vst [vmem:[%s248 + $0x330] sm:$0xff] %v4200
      %4329 = vst.msk [vmem:[%s248 + $0x338] sm:$0xff] %vm1147, %v4201
      %4330 = vst [vmem:[%s248 + $0x340] sm:$0xff] %v4202
      %4331 = vst.msk [vmem:[%s248 + $0x348] sm:$0xff] %vm1147, %v4203
      %4332 = vst [vmem:[%s248 + $0x350] sm:$0xff] %v4204
      %4333 = vst.msk [vmem:[%s248 + $0x358] sm:$0xff] %vm1147, %v4205
      %4334 = vst [vmem:[%s248 + $0x360] sm:$0xff] %v4206
      %4335 = vst.msk [vmem:[%s248 + $0x368] sm:$0xff] %vm1147, %v4207
      %4336 = vst [vmem:[%s248 + $0x370] sm:$0xff] %v4208
      %4337 = vst.msk [vmem:[%s248 + $0x378] sm:$0xff] %vm1147, %v4209
      %4338 = vst [vmem:[%s248 + $0x380] sm:$0xff] %v4210
      %4339 = vst.msk [vmem:[%s248 + $0x388] sm:$0xff] %vm1147, %v4211
      %4340 = vst [vmem:[%s248 + $0x390] sm:$0xff] %v4212
      %4341 = vst.msk [vmem:[%s248 + $0x398] sm:$0xff] %vm1147, %v4213
      %4342 = vst [vmem:[%s248 + $0x3a0] sm:$0xff] %v4214
      %4343 = vst.msk [vmem:[%s248 + $0x3a8] sm:$0xff] %vm1147, %v4215
      %4344 = vst [vmem:[%s248 + $0x3b0] sm:$0xff] %v4216
      %4345 = vst.msk [vmem:[%s248 + $0x3b8] sm:$0xff] %vm1147, %v4217
      %4346 = vst [vmem:[%s248 + $0x3c0] sm:$0xff] %v4218
      %4347 = vst.msk [vmem:[%s248 + $0x3c8] sm:$0xff] %vm1147, %v4219
      %4348 = vst [vmem:[%s248 + $0x3d0] sm:$0xff] %v4220
      %4349 = vst.msk [vmem:[%s248 + $0x3d8] sm:$0xff] %vm1147, %v4221
      %4350 = vst [vmem:[%s248 + $0x3e0] sm:$0xff] %v4222
      %4351 = vst.msk [vmem:[%s248 + $0x3e8] sm:$0xff] %vm1147, %v4223
      %4352 = vst [vmem:[%s248 + $0x3f0] sm:$0xff] %v4224
      %4353 = vst.msk [vmem:[%s248 + $0x3f8] sm:$0xff] %vm1147, %v4225
      %s4354 = smul.u32 64, %s15
      %p4355 = scmp.lt.s32.totalorder %s4354, 127
      %s4356 = scalar_select %p4355, %s4354, 127
      %s4357 = smul.addr %s4356, 2
      %s4358 = smul.addr %s4357, 8
      %s4359 = scalar_lea.vmem %s4, %s4358
      // Predicated region
      $region37: #{tpu_custom_call.1} parent=35 // pred_check
        %p4360 = pneg %p132
      $region38: #{tpu_custom_call.1} parent=35 // pred_check_branch
        %4362 = sbr.rel (%p4360) target = $region40
      $region39: #{tpu_custom_call.1} parent=35 // pred_region
        %s4363 = smul.u32 64, %s15
      $region40: #{tpu_custom_call.1} parent=35 // pred_fallthru
        _
    $region36: #{tpu_custom_call.1} parent=5 // pred_fallthru
      _
    %p4364 = scmp.le.s32.totalorder 2, %s10
    // Predicated region
    $region41: #{tpu_custom_call.1} parent=5 // pred_check
      %p4365 = pneg %p4364
    $region42: #{tpu_custom_call.1} parent=5 // pred_check_branch
      %4367 = sbr.rel (%p4365) target = $region44
    $region43: #{tpu_custom_call.1} parent=5 // pred_region
      %s4368 = ssub.s32 %s10, 2
      // Predicated region
      $region45: #{tpu_custom_call.1} parent=43 // pred_check
        %p4369 = pneg %p138
      $region46: #{tpu_custom_call.1} parent=43 // pred_check_branch
        %4371 = sbr.rel (%p4369) target = $region48
      $region47: #{tpu_custom_call.1} parent=43 // pred_region
        %s4372 = smul.u32 64, %s16
        %p4373 = scmp.lt.s32.totalorder %s4372, 127
        %s4374 = scalar_select %p4373, %s4372, 127
        %s4375 = smul.addr %s4374, 2
        %s4376 = smul.addr %s4375, 8
        %s4377 = scalar_lea.vmem %s4, %s4376
      $region48: #{tpu_custom_call.1} parent=43 // pred_fallthru
        _
    $region44: #{tpu_custom_call.1} parent=5 // pred_fallthru
      _
  $region6: #{tpu_custom_call.1} parent=0 // loop_footer
    %s14 = sadd.s32 1, %s10
  $region7: #{tpu_custom_call.1} parent=0 // loop_footer_branch
    %9 = sbr.rel target = $region3
  $region8: #{tpu_custom_call.1} parent=0 // loop_exit
    _

</llo_original>
